<compile_context>
chip_gen: v7x
topology: tpu7x:2x2x1
jax: 0.10.0
libtpu: 0.0.40
codegen_flags: <defaults>
</compile_context>

<pallas_src>
import functools

import jax
import jax.numpy as jnp
from jax import lax
from jax.experimental import pallas as pl
from jax.experimental.pallas import tpu as pltpu


# ----------------------------------------------------------------------------
# Pallas kernel: tiled matmul with K reduction + fused bias (+ ReLU / dual out)
#   out[M, N] = A[M, K] @ B[K, N] + bias[N]
# ----------------------------------------------------------------------------
def _mm_kernel(a_ref, b_ref, bias_ref, *refs, apply_relu, dual):
    acc_ref = refs[-1]          # VMEM f32 accumulator scratch
    out_refs = refs[:-1]
    k = pl.program_id(2)

    @pl.when(k == 0)
    def _():
        acc_ref[...] = jnp.zeros_like(acc_ref)

    acc_ref[...] += jnp.dot(a_ref[...], b_ref[...],
                            preferred_element_type=jnp.float32)

    @pl.when(k == pl.num_programs(2) - 1)
    def _():
        pre = acc_ref[...] + bias_ref[...]
        if dual:
            # pre-activation (returned by the module) and ReLU'd activation
            # (consumed by the next conv) written from the same kernel.
            out_refs[0][...] = pre.astype(out_refs[0].dtype)
            out_refs[1][...] = jnp.maximum(pre, 0.0).astype(out_refs[1].dtype)
        elif apply_relu:
            out_refs[0][...] = jnp.maximum(pre, 0.0).astype(out_refs[0].dtype)
        else:
            out_refs[0][...] = pre.astype(out_refs[0].dtype)


def _round_up(x, m):
    return ((x + m - 1) // m) * m


def _pick_m_tile(m):
    """Row tile: multiple of 8, capped at 256, >=2 blocks when possible."""
    if m >= 512:
        return 256
    m8 = _round_up(m, 8)
    if m8 >= 16 and (m8 // 2) % 8 == 0:
        return m8 // 2           # 2 parallel M blocks -> both v7x TCs busy
    return m8


def _pick_n_tile(n):
    """Lane tile: 256 when possible (fills v6e/v7x MXU), 128 otherwise.
    N < 128 is padded up to one lane-dense 128 block (unmasked stores)."""
    if n <= 128:
        return 128
    if n % 256 == 0:
        return 256
    return 128


def _pick_k_tile(k):
    """Reduction tile. Small K -> single full-dim step; large K -> pick a
    128-multiple that divides K exactly when possible (no zero padding)."""
    if k <= 2048:
        return k
    for tk in (1152, 1024, 896, 768, 640, 512, 384, 256):
        if k % tk == 0:          # all candidates are multiples of 128
            return tk
    return 512                   # fallback: pad K up to a multiple of 512


def matmul_bias(a, b, bias, *, relu=False, dual=False):
    """a: (M, K) f32, b: (K, N) f32, bias: (1, N) f32.

    Returns (M, N) f32, or a (pre, relu) pair when dual=True.
    """
    M, K = a.shape
    Kb, N = b.shape
    assert K == Kb

    tm = _pick_m_tile(M)
    tn = _pick_n_tile(N)
    tk = _pick_k_tile(K)
    Mp = _round_up(M, tm)
    Np = _round_up(N, tn)
    Kp = _round_up(K, tk)

    # Zero-pad to tile multiples (zeros contribute nothing to the reduction).
    if Mp != M or Kp != K:
        a = jnp.pad(a, ((0, Mp - M), (0, Kp - K)))
    if Kp != K or Np != N:
        b = jnp.pad(b, ((0, Kp - K), (0, Np - N)))
    if Np != N:
        bias = jnp.pad(bias, ((0, 0), (0, Np - N)))

    grid = (Mp // tm, Np // tn, Kp // tk)
    n_out = 2 if dual else 1

    out_block = pl.BlockSpec((tm, tn), lambda i, j, k: (i, j))
    if dual:
        out_shape = (jax.ShapeDtypeStruct((Mp, Np), jnp.float32),
                     jax.ShapeDtypeStruct((Mp, Np), jnp.float32))
        out_specs = (out_block, out_block)
    else:
        out_shape = jax.ShapeDtypeStruct((Mp, Np), jnp.float32)
        out_specs = out_block

    cost = pl.CostEstimate(
        flops=2 * Mp * Kp * Np,
        transcendentals=0,
        bytes_accessed=4 * (Mp * Kp + Kp * Np + Np + n_out * Mp * Np),
    )

    kernel = functools.partial(_mm_kernel, apply_relu=relu, dual=dual)

    result = pl.pallas_call(
        kernel,
        out_shape=out_shape,
        grid_spec=pltpu.PrefetchScalarGridSpec(
            num_scalar_prefetch=0,
            grid=grid,
            in_specs=[
                pl.BlockSpec((tm, tk), lambda i, j, k: (i, k)),
                pl.BlockSpec((tk, tn), lambda i, j, k: (k, j)),
                pl.BlockSpec((1, tn), lambda i, j, k: (0, j)),
            ],
            out_specs=out_specs,
            scratch_shapes=[pltpu.VMEM((tm, tn), jnp.float32)],
        ),
        compiler_params=pltpu.CompilerParams(
            dimension_semantics=("parallel", "parallel", "arbitrary"),
        ),
        cost_estimate=cost,
    )(a, b, bias)

    if dual:
        pre, post = result
        if Mp != M or Np != N:
            pre = pre[:M, :N]
            post = post[:M, :N]
        return pre, post
    out = result
    if Mp != M or Np != N:
        out = out[:M, :N]
    return out


# ----------------------------------------------------------------------------
# Conv2d = im2col (JAX glue) + fused Pallas matmul
# ----------------------------------------------------------------------------
def _im2col(x_nhwc, k, stride, pad):
    """Extract k x k patches. Returns (N*Ho*Wo, k*k*C) ordered (kh, kw, C)."""
    x = jnp.pad(x_nhwc, ((0, 0), (pad, pad), (pad, pad), (0, 0)))
    n, hp, wp, c = x.shape
    ho = (hp - k) // stride + 1
    wo = (wp - k) // stride + 1
    cols = []
    for i in range(k):
        for j in range(k):
            cols.append(x[:, i:i + stride * ho:stride, j:j + stride * wo:stride, :])
    patches = jnp.concatenate(cols, axis=-1)          # (N, Ho, Wo, k*k*C)
    return patches.reshape(n * ho * wo, k * k * c), n, ho, wo


def conv2d_pallas(x_nhwc, w_oihw, bias, stride, pad, *, relu=False, dual=False):
    """Conv2d matching torch.nn.Conv2d(Cin, Cout, k, stride, pad)."""
    cout, cin, k, _ = w_oihw.shape
    patches, n, ho, wo = _im2col(x_nhwc, k, stride, pad)
    # OIHW -> (kh, kw, Cin, Cout) -> (k*k*Cin, Cout), matching patch ordering.
    w_mat = jnp.transpose(w_oihw, (2, 3, 1, 0)).reshape(k * k * cin, cout)
    res = matmul_bias(patches, w_mat, bias.reshape(1, cout), relu=relu, dual=dual)
    if dual:
        pre, post = res
        return pre.reshape(n, ho, wo, cout), post.reshape(n, ho, wo, cout)
    return res.reshape(n, ho, wo, cout)


# ----------------------------------------------------------------------------
# CustomFE forward
# ----------------------------------------------------------------------------
def init_params(key):
    """Deterministic synthetic parameters with torch Conv2d shapes (OIHW)."""
    shapes = [
        (64, 3, 3, 3),
        (256, 64, 3, 3),
        (512, 256, 3, 3),
        (512, 512, 3, 3),
    ]
    params = {}
    for idx, (co, ci, kh, kw) in enumerate(shapes, start=1):
        key, kw_key, kb_key = jax.random.split(key, 3)
        fan_in = ci * kh * kw
        scale = 1.0 / jnp.sqrt(float(fan_in))
        params[f"conv{idx}_w"] = jax.random.uniform(
            kw_key, (co, ci, kh, kw), jnp.float32, -scale, scale)
        params[f"conv{idx}_b"] = jax.random.uniform(
            kb_key, (co,), jnp.float32, -scale, scale)
    return params


@jax.jit
def custom_fe_forward(params, x_nchw):
    """Replicates CustomFE.forward. Inputs/outputs are NCHW like PyTorch."""
    x = jnp.transpose(x_nchw, (0, 2, 3, 1))                    # NCHW -> NHWC

    # conv1 output is never returned -> fuse ReLU, keep only the activation.
    a1 = conv2d_pallas(x, params["conv1_w"], params["conv1_b"], 2, 1, relu=True)
    # conv2/conv3: need pre-activation (returned) AND ReLU'd activation (next
    # layer input) -> single fused kernel with two outputs.
    l2, a2 = conv2d_pallas(a1, params["conv2_w"], params["conv2_b"], 2, 1, dual=True)
    l3, a3 = conv2d_pallas(a2, params["conv3_w"], params["conv3_b"], 2, 1, dual=True)
    out = conv2d_pallas(a3, params["conv4_w"], params["conv4_b"], 1, 1)

    to_nchw = lambda t: jnp.transpose(t, (0, 3, 1, 2))          # NHWC -> NCHW
    return {
        "out_layer": to_nchw(out),
        "layer_3": to_nchw(l3),
        "layer_2": to_nchw(l2),
    }


# ----------------------------------------------------------------------------
# Pure-JAX reference (lax.conv) for correctness check
# ----------------------------------------------------------------------------
def _ref_conv(x_nchw, w, b, s, p):
    y = lax.conv_general_dilated(
        x_nchw, w, window_strides=(s, s), padding=((p, p), (p, p)),
        dimension_numbers=("NCHW", "OIHW", "NCHW"))
    return y + b[None, :, None, None]


def reference_forward(params, x):
    l1 = _ref_conv(x, params["conv1_w"], params["conv1_b"], 2, 1)
    a1 = jnp.maximum(l1, 0.0)
    l2 = _ref_conv(a1, params["conv2_w"], params["conv2_b"], 2, 1)
    a2 = jnp.maximum(l2, 0.0)
    l3 = _ref_conv(a2, params["conv3_w"], params["conv3_b"], 2, 1)
    a3 = jnp.maximum(l3, 0.0)
    out = _ref_conv(a3, params["conv4_w"], params["conv4_b"], 1, 1)
    return {"out_layer": out, "layer_3": l3, "layer_2": l2}


if __name__ == "__main__":
    key = jax.random.PRNGKey(0)
    pkey, xkey = jax.random.split(key)
    params = init_params(pkey)

    # Small deterministic input consistent with Conv2d(3, ...): N=2, C=3, 16x16.
    x = jax.random.normal(xkey, (2, 3, 16, 16), jnp.float32)

    result = custom_fe_forward(params, x)
    result = jax.block_until_ready(result)

    ref = reference_forward(params, x)
    for name in ("out_layer", "layer_3", "layer_2"):
        assert result[name].shape == ref[name].shape, name
        assert jnp.allclose(result[name], ref[name], rtol=1e-4, atol=1e-4), name

    print("KERNEL_OK")
</pallas_src>

<mosaic_0001>
module attributes {stable_mosaic.version = 11 : i64} {
  func.func @_mm_kernel(%arg0: i32, %arg1: i32, %arg2: i32, %arg3: memref<64x27xf32, #tpu.memory_space<vmem>>, %arg4: memref<27x128xf32, #tpu.memory_space<vmem>>, %arg5: memref<1x128xf32, #tpu.memory_space<vmem>>, %arg6: memref<64x128xf32, #tpu.memory_space<vmem>>, %arg7: memref<64x128xf32, #tpu.memory_space<vmem>>) attributes {dimension_semantics = [#tpu.dimension_semantics<parallel>, #tpu.dimension_semantics<parallel>, #tpu.dimension_semantics<arbitrary>], iteration_bounds = array<i64: 2, 1, 1>, scalar_prefetch = 0 : i64, scratch_operands = 1 : i64, tpu.core_type = #tpu.core_type<tc>, window_params = [{transform_indices = @transform_0, window_bounds = array<i64: 64, 27>}, {transform_indices = @transform_1, window_bounds = array<i64: 27, 128>}, {transform_indices = @transform_2, window_bounds = array<i64: 1, 128>}, {transform_indices = @transform_3, window_bounds = array<i64: 64, 128>}]} {
    %c0_i32 = arith.constant 0 : i32
    %0 = arith.cmpi eq, %arg2, %c0_i32 : i32
    %1 = arith.extui %0 : i1 to i32
    %c0_i32_0 = arith.constant 0 : i32
    %2 = arith.cmpi ne, %1, %c0_i32_0 : i32
    scf.if %2 {
      %cst_10 = arith.constant 0.000000e+00 : f32
      %12 = vector.broadcast %cst_10 : f32 to vector<64x128xf32>
      %c0_11 = arith.constant 0 : index
      %c0_12 = arith.constant 0 : index
      %13 = vector.load %arg7[%c0_11, %c0_12] : memref<64x128xf32, #tpu.memory_space<vmem>>, vector<64x128xf32>
      tpu.vector_store %arg7[%c0_11, %c0_12], %12 {strides = array<i32>} : memref<64x128xf32, #tpu.memory_space<vmem>>, vector<64x128xf32>,
    } else {
    }
    %c0 = arith.constant 0 : index
    %c0_1 = arith.constant 0 : index
    %3 = vector.load %arg7[%c0, %c0_1] : memref<64x128xf32, #tpu.memory_space<vmem>>, vector<64x128xf32>
    %c0_2 = arith.constant 0 : index
    %c0_3 = arith.constant 0 : index
    %4 = vector.load %arg3[%c0_2, %c0_3] : memref<64x27xf32, #tpu.memory_space<vmem>>, vector<64x27xf32>
    %c0_4 = arith.constant 0 : index
    %c0_5 = arith.constant 0 : index
    %5 = vector.load %arg4[%c0_4, %c0_5] : memref<27x128xf32, #tpu.memory_space<vmem>>, vector<27x128xf32>
    %cst = arith.constant dense<0.000000e+00> : vector<64x128xf32>
    %6 = tpu.matmul %4, %5, %cst {dimension_numbers = #tpu.dot_dimension_numbers<[1], [0], [0], [1], [0, 0, 1, 1], [], []>} : vector<64x27xf32>, vector<27x128xf32>, vector<64x128xf32> -> vector<64x128xf32>
    %7 = arith.addf %3, %6 : vector<64x128xf32>
    %c0_6 = arith.constant 0 : index
    %c0_7 = arith.constant 0 : index
    %8 = vector.load %arg7[%c0_6, %c0_7] : memref<64x128xf32, #tpu.memory_space<vmem>>, vector<64x128xf32>
    tpu.vector_store %arg7[%c0_6, %c0_7], %7 {strides = array<i32>} : memref<64x128xf32, #tpu.memory_space<vmem>>, vector<64x128xf32>,
    %c0_i32_8 = arith.constant 0 : i32
    %9 = arith.cmpi eq, %arg2, %c0_i32_8 : i32
    %10 = arith.extui %9 : i1 to i32
    %c0_i32_9 = arith.constant 0 : i32
    %11 = arith.cmpi ne, %10, %c0_i32_9 : i32
    scf.if %11 {
      %c0_10 = arith.constant 0 : index
      %c0_11 = arith.constant 0 : index
      %12 = vector.load %arg7[%c0_10, %c0_11] : memref<64x128xf32, #tpu.memory_space<vmem>>, vector<64x128xf32>
      %c0_12 = arith.constant 0 : index
      %c0_13 = arith.constant 0 : index
      %13 = vector.load %arg5[%c0_12, %c0_13] : memref<1x128xf32, #tpu.memory_space<vmem>>, vector<1x128xf32>
      %14 = vector.broadcast %13 : vector<1x128xf32> to vector<64x128xf32>
      %15 = arith.addf %12, %14 : vector<64x128xf32>
      %cst_14 = arith.constant 0.000000e+00 : f32
      %16 = vector.broadcast %cst_14 : f32 to vector<64x128xf32>
      %17 = arith.maximumf %15, %16 : vector<64x128xf32>
      %c0_15 = arith.constant 0 : index
      %c0_16 = arith.constant 0 : index
      %18 = vector.load %arg6[%c0_15, %c0_16] : memref<64x128xf32, #tpu.memory_space<vmem>>, vector<64x128xf32>
      tpu.vector_store %arg6[%c0_15, %c0_16], %17 {strides = array<i32>} : memref<64x128xf32, #tpu.memory_space<vmem>>, vector<64x128xf32>,
    } else {
    }
    return
  }
  func.func @transform_0(%arg0: i32, %arg1: i32, %arg2: i32) -> (i32, i32) {
    %c0_i32 = arith.constant 0 : i32
    return %arg0, %arg2 : i32, i32
  }
  func.func @transform_1(%arg0: i32, %arg1: i32, %arg2: i32) -> (i32, i32) {
    %c0_i32 = arith.constant 0 : i32
    return %arg2, %arg1 : i32, i32
  }
  func.func @transform_2(%arg0: i32, %arg1: i32, %arg2: i32) -> (i32, i32) {
    %c0_i32 = arith.constant 0 : i32
    %c0_i32_0 = arith.constant 0 : i32
    return %c0_i32, %arg1 : i32, i32
  }
  func.func @transform_3(%arg0: i32, %arg1: i32, %arg2: i32) -> (i32, i32) {
    %c0_i32 = arith.constant 0 : i32
    return %arg0, %arg1 : i32, i32
  }
}

module attributes {stable_mosaic.version = 11 : i64} {
  func.func @_mm_kernel(%arg0: i32, %arg1: i32, %arg2: i32, %arg3: memref<16x576xf32, #tpu.memory_space<vmem>>, %arg4: memref<576x256xf32, #tpu.memory_space<vmem>>, %arg5: memref<1x256xf32, #tpu.memory_space<vmem>>, %arg6: memref<16x256xf32, #tpu.memory_space<vmem>>, %arg7: memref<16x256xf32, #tpu.memory_space<vmem>>, %arg8: memref<16x256xf32, #tpu.memory_space<vmem>>) attributes {dimension_semantics = [#tpu.dimension_semantics<parallel>, #tpu.dimension_semantics<parallel>, #tpu.dimension_semantics<arbitrary>], iteration_bounds = array<i64: 2, 1, 1>, scalar_prefetch = 0 : i64, scratch_operands = 1 : i64, tpu.core_type = #tpu.core_type<tc>, window_params = [{transform_indices = @transform_0, window_bounds = array<i64: 16, 576>}, {transform_indices = @transform_1, window_bounds = array<i64: 576, 256>}, {transform_indices = @transform_2, window_bounds = array<i64: 1, 256>}, {transform_indices = @transform_3, window_bounds = array<i64: 16, 256>}, {transform_indices = @transform_4, window_bounds = array<i64: 16, 256>}]} {
    %c0_i32 = arith.constant 0 : i32
    %0 = arith.cmpi eq, %arg2, %c0_i32 : i32
    %1 = arith.extui %0 : i1 to i32
    %c0_i32_0 = arith.constant 0 : i32
    %2 = arith.cmpi ne, %1, %c0_i32_0 : i32
    scf.if %2 {
      %cst_10 = arith.constant 0.000000e+00 : f32
      %12 = vector.broadcast %cst_10 : f32 to vector<16x256xf32>
      %c0_11 = arith.constant 0 : index
      %c0_12 = arith.constant 0 : index
      %13 = vector.load %arg8[%c0_11, %c0_12] : memref<16x256xf32, #tpu.memory_space<vmem>>, vector<16x256xf32>
      tpu.vector_store %arg8[%c0_11, %c0_12], %12 {strides = array<i32>} : memref<16x256xf32, #tpu.memory_space<vmem>>, vector<16x256xf32>,
    } else {
    }
    %c0 = arith.constant 0 : index
    %c0_1 = arith.constant 0 : index
    %3 = vector.load %arg8[%c0, %c0_1] : memref<16x256xf32, #tpu.memory_space<vmem>>, vector<16x256xf32>
    %c0_2 = arith.constant 0 : index
    %c0_3 = arith.constant 0 : index
    %4 = vector.load %arg3[%c0_2, %c0_3] : memref<16x576xf32, #tpu.memory_space<vmem>>, vector<16x576xf32>
    %c0_4 = arith.constant 0 : index
    %c0_5 = arith.constant 0 : index
    %5 = vector.load %arg4[%c0_4, %c0_5] : memref<576x256xf32, #tpu.memory_space<vmem>>, vector<576x256xf32>
    %cst = arith.constant dense<0.000000e+00> : vector<16x256xf32>
    %6 = tpu.matmul %4, %5, %cst {dimension_numbers = #tpu.dot_dimension_numbers<[1], [0], [0], [1], [0, 0, 1, 1], [], []>} : vector<16x576xf32>, vector<576x256xf32>, vector<16x256xf32> -> vector<16x256xf32>
    %7 = arith.addf %3, %6 : vector<16x256xf32>
    %c0_6 = arith.constant 0 : index
    %c0_7 = arith.constant 0 : index
    %8 = vector.load %arg8[%c0_6, %c0_7] : memref<16x256xf32, #tpu.memory_space<vmem>>, vector<16x256xf32>
    tpu.vector_store %arg8[%c0_6, %c0_7], %7 {strides = array<i32>} : memref<16x256xf32, #tpu.memory_space<vmem>>, vector<16x256xf32>,
    %c0_i32_8 = arith.constant 0 : i32
    %9 = arith.cmpi eq, %arg2, %c0_i32_8 : i32
    %10 = arith.extui %9 : i1 to i32
    %c0_i32_9 = arith.constant 0 : i32
    %11 = arith.cmpi ne, %10, %c0_i32_9 : i32
    scf.if %11 {
      %c0_10 = arith.constant 0 : index
      %c0_11 = arith.constant 0 : index
      %12 = vector.load %arg8[%c0_10, %c0_11] : memref<16x256xf32, #tpu.memory_space<vmem>>, vector<16x256xf32>
      %c0_12 = arith.constant 0 : index
      %c0_13 = arith.constant 0 : index
      %13 = vector.load %arg5[%c0_12, %c0_13] : memref<1x256xf32, #tpu.memory_space<vmem>>, vector<1x256xf32>
      %14 = vector.broadcast %13 : vector<1x256xf32> to vector<16x256xf32>
      %15 = arith.addf %12, %14 : vector<16x256xf32>
      %c0_14 = arith.constant 0 : index
      %c0_15 = arith.constant 0 : index
      %16 = vector.load %arg6[%c0_14, %c0_15] : memref<16x256xf32, #tpu.memory_space<vmem>>, vector<16x256xf32>
      tpu.vector_store %arg6[%c0_14, %c0_15], %15 {strides = array<i32>} : memref<16x256xf32, #tpu.memory_space<vmem>>, vector<16x256xf32>,
      %cst_16 = arith.constant 0.000000e+00 : f32
      %17 = vector.broadcast %cst_16 : f32 to vector<16x256xf32>
      %18 = arith.maximumf %15, %17 : vector<16x256xf32>
      %c0_17 = arith.constant 0 : index
      %c0_18 = arith.constant 0 : index
      %19 = vector.load %arg7[%c0_17, %c0_18] : memref<16x256xf32, #tpu.memory_space<vmem>>, vector<16x256xf32>
      tpu.vector_store %arg7[%c0_17, %c0_18], %18 {strides = array<i32>} : memref<16x256xf32, #tpu.memory_space<vmem>>, vector<16x256xf32>,
    } else {
    }
    return
  }
  func.func @transform_0(%arg0: i32, %arg1: i32, %arg2: i32) -> (i32, i32) {
    %c0_i32 = arith.constant 0 : i32
    return %arg0, %arg2 : i32, i32
  }
  func.func @transform_1(%arg0: i32, %arg1: i32, %arg2: i32) -> (i32, i32) {
    %c0_i32 = arith.constant 0 : i32
    return %arg2, %arg1 : i32, i32
  }
  func.func @transform_2(%arg0: i32, %arg1: i32, %arg2: i32) -> (i32, i32) {
    %c0_i32 = arith.constant 0 : i32
    %c0_i32_0 = arith.constant 0 : i32
    return %c0_i32, %arg1 : i32, i32
  }
  func.func @transform_3(%arg0: i32, %arg1: i32, %arg2: i32) -> (i32, i32) {
    %c0_i32 = arith.constant 0 : i32
    return %arg0, %arg1 : i32, i32
  }
  func.func @transform_4(%arg0: i32, %arg1: i32, %arg2: i32) -> (i32, i32) {
    %c0_i32 = arith.constant 0 : i32
    return %arg0, %arg1 : i32, i32
  }
}

module attributes {stable_mosaic.version = 11 : i64} {
  func.func @_mm_kernel(%arg0: i32, %arg1: i32, %arg2: i32, %arg3: memref<8x1152xf32, #tpu.memory_space<vmem>>, %arg4: memref<1152x256xf32, #tpu.memory_space<vmem>>, %arg5: memref<1x256xf32, #tpu.memory_space<vmem>>, %arg6: memref<8x256xf32, #tpu.memory_space<vmem>>, %arg7: memref<8x256xf32, #tpu.memory_space<vmem>>, %arg8: memref<8x256xf32, #tpu.memory_space<vmem>>) attributes {dimension_semantics = [#tpu.dimension_semantics<parallel>, #tpu.dimension_semantics<parallel>, #tpu.dimension_semantics<arbitrary>], iteration_bounds = array<i64: 1, 2, 2>, scalar_prefetch = 0 : i64, scratch_operands = 1 : i64, tpu.core_type = #tpu.core_type<tc>, window_params = [{transform_indices = @transform_0, window_bounds = array<i64: 8, 1152>}, {transform_indices = @transform_1, window_bounds = array<i64: 1152, 256>}, {transform_indices = @transform_2, window_bounds = array<i64: 1, 256>}, {transform_indices = @transform_3, window_bounds = array<i64: 8, 256>}, {transform_indices = @transform_4, window_bounds = array<i64: 8, 256>}]} {
    %c0_i32 = arith.constant 0 : i32
    %0 = arith.cmpi eq, %arg2, %c0_i32 : i32
    %1 = arith.extui %0 : i1 to i32
    %c0_i32_0 = arith.constant 0 : i32
    %2 = arith.cmpi ne, %1, %c0_i32_0 : i32
    scf.if %2 {
      %cst_9 = arith.constant 0.000000e+00 : f32
      %12 = vector.broadcast %cst_9 : f32 to vector<8x256xf32>
      %c0_10 = arith.constant 0 : index
      %c0_11 = arith.constant 0 : index
      %13 = vector.load %arg8[%c0_10, %c0_11] : memref<8x256xf32, #tpu.memory_space<vmem>>, vector<8x256xf32>
      tpu.vector_store %arg8[%c0_10, %c0_11], %12 {strides = array<i32>} : memref<8x256xf32, #tpu.memory_space<vmem>>, vector<8x256xf32>,
    } else {
    }
    %c0 = arith.constant 0 : index
    %c0_1 = arith.constant 0 : index
    %3 = vector.load %arg8[%c0, %c0_1] : memref<8x256xf32, #tpu.memory_space<vmem>>, vector<8x256xf32>
    %c0_2 = arith.constant 0 : index
    %c0_3 = arith.constant 0 : index
    %4 = vector.load %arg3[%c0_2, %c0_3] : memref<8x1152xf32, #tpu.memory_space<vmem>>, vector<8x1152xf32>
    %c0_4 = arith.constant 0 : index
    %c0_5 = arith.constant 0 : index
    %5 = vector.load %arg4[%c0_4, %c0_5] : memref<1152x256xf32, #tpu.memory_space<vmem>>, vector<1152x256xf32>
    %cst = arith.constant dense<0.000000e+00> : vector<8x256xf32>
    %6 = tpu.matmul %4, %5, %cst {dimension_numbers = #tpu.dot_dimension_numbers<[1], [0], [0], [1], [0, 0, 1, 1], [], []>} : vector<8x1152xf32>, vector<1152x256xf32>, vector<8x256xf32> -> vector<8x256xf32>
    %7 = arith.addf %3, %6 : vector<8x256xf32>
    %c0_6 = arith.constant 0 : index
    %c0_7 = arith.constant 0 : index
    %8 = vector.load %arg8[%c0_6, %c0_7] : memref<8x256xf32, #tpu.memory_space<vmem>>, vector<8x256xf32>
    tpu.vector_store %arg8[%c0_6, %c0_7], %7 {strides = array<i32>} : memref<8x256xf32, #tpu.memory_space<vmem>>, vector<8x256xf32>,
    %c1_i32 = arith.constant 1 : i32
    %9 = arith.cmpi eq, %arg2, %c1_i32 : i32
    %10 = arith.extui %9 : i1 to i32
    %c0_i32_8 = arith.constant 0 : i32
    %11 = arith.cmpi ne, %10, %c0_i32_8 : i32
    scf.if %11 {
      %c0_9 = arith.constant 0 : index
      %c0_10 = arith.constant 0 : index
      %12 = vector.load %arg8[%c0_9, %c0_10] : memref<8x256xf32, #tpu.memory_space<vmem>>, vector<8x256xf32>
      %c0_11 = arith.constant 0 : index
      %c0_12 = arith.constant 0 : index
      %13 = vector.load %arg5[%c0_11, %c0_12] : memref<1x256xf32, #tpu.memory_space<vmem>>, vector<1x256xf32>
      %14 = vector.broadcast %13 : vector<1x256xf32> to vector<8x256xf32>
      %15 = arith.addf %12, %14 : vector<8x256xf32>
      %c0_13 = arith.constant 0 : index
      %c0_14 = arith.constant 0 : index
      %16 = vector.load %arg6[%c0_13, %c0_14] : memref<8x256xf32, #tpu.memory_space<vmem>>, vector<8x256xf32>
      tpu.vector_store %arg6[%c0_13, %c0_14], %15 {strides = array<i32>} : memref<8x256xf32, #tpu.memory_space<vmem>>, vector<8x256xf32>,
      %cst_15 = arith.constant 0.000000e+00 : f32
      %17 = vector.broadcast %cst_15 : f32 to vector<8x256xf32>
      %18 = arith.maximumf %15, %17 : vector<8x256xf32>
      %c0_16 = arith.constant 0 : index
      %c0_17 = arith.constant 0 : index
      %19 = vector.load %arg7[%c0_16, %c0_17] : memref<8x256xf32, #tpu.memory_space<vmem>>, vector<8x256xf32>
      tpu.vector_store %arg7[%c0_16, %c0_17], %18 {strides = array<i32>} : memref<8x256xf32, #tpu.memory_space<vmem>>, vector<8x256xf32>,
    } else {
    }
    return
  }
  func.func @transform_0(%arg0: i32, %arg1: i32, %arg2: i32) -> (i32, i32) {
    %c0_i32 = arith.constant 0 : i32
    return %arg0, %arg2 : i32, i32
  }
  func.func @transform_1(%arg0: i32, %arg1: i32, %arg2: i32) -> (i32, i32) {
    %c0_i32 = arith.constant 0 : i32
    return %arg2, %arg1 : i32, i32
  }
  func.func @transform_2(%arg0: i32, %arg1: i32, %arg2: i32) -> (i32, i32) {
    %c0_i32 = arith.constant 0 : i32
    %c0_i32_0 = arith.constant 0 : i32
    return %c0_i32, %arg1 : i32, i32
  }
  func.func @transform_3(%arg0: i32, %arg1: i32, %arg2: i32) -> (i32, i32) {
    %c0_i32 = arith.constant 0 : i32
    return %arg0, %arg1 : i32, i32
  }
  func.func @transform_4(%arg0: i32, %arg1: i32, %arg2: i32) -> (i32, i32) {
    %c0_i32 = arith.constant 0 : i32
    return %arg0, %arg1 : i32, i32
  }
}

module attributes {stable_mosaic.version = 11 : i64} {
  func.func @_mm_kernel(%arg0: i32, %arg1: i32, %arg2: i32, %arg3: memref<8x1152xf32, #tpu.memory_space<vmem>>, %arg4: memref<1152x256xf32, #tpu.memory_space<vmem>>, %arg5: memref<1x256xf32, #tpu.memory_space<vmem>>, %arg6: memref<8x256xf32, #tpu.memory_space<vmem>>, %arg7: memref<8x256xf32, #tpu.memory_space<vmem>>) attributes {dimension_semantics = [#tpu.dimension_semantics<parallel>, #tpu.dimension_semantics<parallel>, #tpu.dimension_semantics<arbitrary>], iteration_bounds = array<i64: 1, 2, 4>, scalar_prefetch = 0 : i64, scratch_operands = 1 : i64, tpu.core_type = #tpu.core_type<tc>, window_params = [{transform_indices = @transform_0, window_bounds = array<i64: 8, 1152>}, {transform_indices = @transform_1, window_bounds = array<i64: 1152, 256>}, {transform_indices = @transform_2, window_bounds = array<i64: 1, 256>}, {transform_indices = @transform_3, window_bounds = array<i64: 8, 256>}]} {
    %c0_i32 = arith.constant 0 : i32
    %0 = arith.cmpi eq, %arg2, %c0_i32 : i32
    %1 = arith.extui %0 : i1 to i32
    %c0_i32_0 = arith.constant 0 : i32
    %2 = arith.cmpi ne, %1, %c0_i32_0 : i32
    scf.if %2 {
      %cst_9 = arith.constant 0.000000e+00 : f32
      %12 = vector.broadcast %cst_9 : f32 to vector<8x256xf32>
      %c0_10 = arith.constant 0 : index
      %c0_11 = arith.constant 0 : index
      %13 = vector.load %arg7[%c0_10, %c0_11] : memref<8x256xf32, #tpu.memory_space<vmem>>, vector<8x256xf32>
      tpu.vector_store %arg7[%c0_10, %c0_11], %12 {strides = array<i32>} : memref<8x256xf32, #tpu.memory_space<vmem>>, vector<8x256xf32>,
    } else {
    }
    %c0 = arith.constant 0 : index
    %c0_1 = arith.constant 0 : index
    %3 = vector.load %arg7[%c0, %c0_1] : memref<8x256xf32, #tpu.memory_space<vmem>>, vector<8x256xf32>
    %c0_2 = arith.constant 0 : index
    %c0_3 = arith.constant 0 : index
    %4 = vector.load %arg3[%c0_2, %c0_3] : memref<8x1152xf32, #tpu.memory_space<vmem>>, vector<8x1152xf32>
    %c0_4 = arith.constant 0 : index
    %c0_5 = arith.constant 0 : index
    %5 = vector.load %arg4[%c0_4, %c0_5] : memref<1152x256xf32, #tpu.memory_space<vmem>>, vector<1152x256xf32>
    %cst = arith.constant dense<0.000000e+00> : vector<8x256xf32>
    %6 = tpu.matmul %4, %5, %cst {dimension_numbers = #tpu.dot_dimension_numbers<[1], [0], [0], [1], [0, 0, 1, 1], [], []>} : vector<8x1152xf32>, vector<1152x256xf32>, vector<8x256xf32> -> vector<8x256xf32>
    %7 = arith.addf %3, %6 : vector<8x256xf32>
    %c0_6 = arith.constant 0 : index
    %c0_7 = arith.constant 0 : index
    %8 = vector.load %arg7[%c0_6, %c0_7] : memref<8x256xf32, #tpu.memory_space<vmem>>, vector<8x256xf32>
    tpu.vector_store %arg7[%c0_6, %c0_7], %7 {strides = array<i32>} : memref<8x256xf32, #tpu.memory_space<vmem>>, vector<8x256xf32>,
    %c3_i32 = arith.constant 3 : i32
    %9 = arith.cmpi eq, %arg2, %c3_i32 : i32
    %10 = arith.extui %9 : i1 to i32
    %c0_i32_8 = arith.constant 0 : i32
    %11 = arith.cmpi ne, %10, %c0_i32_8 : i32
    scf.if %11 {
      %c0_9 = arith.constant 0 : index
      %c0_10 = arith.constant 0 : index
      %12 = vector.load %arg7[%c0_9, %c0_10] : memref<8x256xf32, #tpu.memory_space<vmem>>, vector<8x256xf32>
      %c0_11 = arith.constant 0 : index
      %c0_12 = arith.constant 0 : index
      %13 = vector.load %arg5[%c0_11, %c0_12] : memref<1x256xf32, #tpu.memory_space<vmem>>, vector<1x256xf32>
      %14 = vector.broadcast %13 : vector<1x256xf32> to vector<8x256xf32>
      %15 = arith.addf %12, %14 : vector<8x256xf32>
      %c0_13 = arith.constant 0 : index
      %c0_14 = arith.constant 0 : index
      %16 = vector.load %arg6[%c0_13, %c0_14] : memref<8x256xf32, #tpu.memory_space<vmem>>, vector<8x256xf32>
      tpu.vector_store %arg6[%c0_13, %c0_14], %15 {strides = array<i32>} : memref<8x256xf32, #tpu.memory_space<vmem>>, vector<8x256xf32>,
    } else {
    }
    return
  }
  func.func @transform_0(%arg0: i32, %arg1: i32, %arg2: i32) -> (i32, i32) {
    %c0_i32 = arith.constant 0 : i32
    return %arg0, %arg2 : i32, i32
  }
  func.func @transform_1(%arg0: i32, %arg1: i32, %arg2: i32) -> (i32, i32) {
    %c0_i32 = arith.constant 0 : i32
    return %arg2, %arg1 : i32, i32
  }
  func.func @transform_2(%arg0: i32, %arg1: i32, %arg2: i32) -> (i32, i32) {
    %c0_i32 = arith.constant 0 : i32
    %c0_i32_0 = arith.constant 0 : i32
    return %c0_i32, %arg1 : i32, i32
  }
  func.func @transform_3(%arg0: i32, %arg1: i32, %arg2: i32) -> (i32, i32) {
    %c0_i32 = arith.constant 0 : i32
    return %arg0, %arg1 : i32, i32
  }
}

</mosaic_0001>

<llo_original>
// kernel: custom_fe_forward.4
$region0: #{custom_fe_forward.4}
  #allocation0 [shape = 'u32[]', space=smem, size = 0x4, offset = 0x4, fixed_abs, tag = 'smem constant byte address 0x4 - core index']
  #allocation1 [shape = 'u32[144,128]{1,0:T(1,128)}', space=vmem, size = 0x12000, scoped, tag = 'internal scratch']
  #allocation2 [shape = 'f32[64,128]{1,0:T(8,128)}', space=vmem, size = 0x8000, scoped, tag = 'scratch operand']
  %s0 = inlined_call_operand.vmem [shape: f32[128,27], index: 0, kind: input, shape index: {}]
  %s1 = inlined_call_operand.vmem [shape: f32[27,128], index: 1, kind: input, shape index: {}]
  %s2 = inlined_call_operand.vmem [shape: f32[1,128], index: 2, kind: input, shape index: {}]
  %s3 = inlined_call_operand.vmem [shape: f32[128,128], index: 3, kind: output, shape index: {}]
  %s4 = sld [smem:[#allocation0]]
  $region53: #{custom_fe_forward.4} parent=0
    _
  %s6 = ssub.s32 1, %s4
  %s7 = scalar_select 0, %s6, %s4
  loop: start=0, step=1, limit=4
  $region2: #{custom_fe_forward.4} parent=0 // loop_pre_header
    _
  $region3: #{custom_fe_forward.4} parent=0 // loop_header
    %s9 = sphi 0, %s13
    %p10 = scmp.ge.s32.totalorder %s9, 4
    %s16 = sphi 0, %s35
    %s17 = sphi 0, %s31
    %s18 = sphi 0, %s27
    %s19 = sphi 0, %s16
    %s20 = sphi 0, %s17
    %s21 = sphi 0, %s18
    %s22 = sphi 0, %s19
    %s23 = sphi 0, %s20
    %s24 = sphi 0, %s21
    %s40 = sphi 0, %s42
    %s43 = sphi 0, %s40
    %s44 = sphi 0, %s43
    %s60 = sphi 0, %s44
    %s68 = sphi 0, %s70
    %s71 = sphi 0, %s68
    %s72 = sphi 0, %s71
    %s88 = sphi 0, %s72
    %s94 = sphi 0, %s96
    %s97 = sphi 0, %s94
    %s98 = sphi 0, %s97
    %s114 = sphi 0, %s98
    %s122 = sphi 0, %s124
    %s125 = sphi 0, %s122
    %s126 = sphi 0, %s125
    %s142 = sphi 0, %s126
  $region4: #{custom_fe_forward.4} parent=0 // loop_header_branch
    %12 = sbr.rel (%p10) target = $region8
  $region5: #{custom_fe_forward.4} parent=0 // loop_body
    %s14 = ssub.s32 %s9, 1
    %s15 = ssub.s32 %s9, 2
    %s25 = sadd.s32 1, %s18
    %p26 = scmp.ge.s32.totalorder %s25, 1
    %s27 = scalar_select %p26, 0, %s25
    %s28 = sadd.s32 1, %s17
    %s29 = scalar_select %p26, %s28, %s17
    %p30 = scmp.ge.s32.totalorder %s29, 1
    %s31 = scalar_select %p30, 0, %s29
    %s32 = sadd.s32 1, %s16
    %s33 = scalar_select %p30, %s32, %s16
    %p34 = scmp.ge.s32.totalorder %s33, 2
    %s35 = scalar_select %p34, 0, %s33
    %s36 = ssub.s32 %s16, %s35
    %s37 = ssub.s32 %s18, %s27
    %s38 = sor.u32 %s36, %s37
    %p39 = scmp.eq.s32.totalorder %s38, 0
    %s41 = sadd.s32 %s40, 1
    %s42 = scalar_select %p39, %s40, %s41
    %p45 = pneg %p39
    %p46 = scmp.eq.s32.totalorder %s9, 1
    %p47 = por %p45, %p46
    %p48 = scmp.ne.s32.totalorder %s40, %s43
    %p49 = scmp.eq.s32.totalorder %s9, 0
    %p50 = por %p48, %p49
    %p51 = scmp.ne.s32.totalorder %s40, %s43
    %p52 = scmp.eq.s32.totalorder %s14, 1
    %p53 = por %p51, %p52
    %p54 = scmp.ne.s32.totalorder %s43, %s44
    %p55 = scmp.eq.s32.totalorder %s14, 0
    %p56 = por %p54, %p55
    %p57 = scmp.ne.s32.totalorder %s43, %s44
    %p58 = scmp.eq.s32.totalorder %s15, 1
    %p59 = por %p57, %p58
    %p61 = scmp.ne.s32.totalorder %s44, %s60
    %p62 = scmp.eq.s32.totalorder %s15, 0
    %p63 = por %p61, %p62
    %s64 = ssub.s32 %s18, %s27
    %s65 = ssub.s32 %s17, %s31
    %s66 = sor.u32 %s64, %s65
    %p67 = scmp.eq.s32.totalorder %s66, 0
    %s69 = sadd.s32 %s68, 1
    %s70 = scalar_select %p67, %s68, %s69
    %p73 = pneg %p67
    %p74 = scmp.eq.s32.totalorder %s9, 1
    %p75 = por %p73, %p74
    %p76 = scmp.ne.s32.totalorder %s68, %s71
    %p77 = scmp.eq.s32.totalorder %s9, 0
    %p78 = por %p76, %p77
    %p79 = scmp.ne.s32.totalorder %s68, %s71
    %p80 = scmp.eq.s32.totalorder %s14, 1
    %p81 = por %p79, %p80
    %p82 = scmp.ne.s32.totalorder %s71, %s72
    %p83 = scmp.eq.s32.totalorder %s14, 0
    %p84 = por %p82, %p83
    %p85 = scmp.ne.s32.totalorder %s71, %s72
    %p86 = scmp.eq.s32.totalorder %s15, 1
    %p87 = por %p85, %p86
    %p89 = scmp.ne.s32.totalorder %s72, %s88
    %p90 = scmp.eq.s32.totalorder %s15, 0
    %p91 = por %p89, %p90
    %s92 = ssub.s32 %s17, %s31
    %p93 = scmp.eq.s32.totalorder %s92, 0
    %s95 = sadd.s32 %s94, 1
    %s96 = scalar_select %p93, %s94, %s95
    %p99 = pneg %p93
    %p100 = scmp.eq.s32.totalorder %s9, 1
    %p101 = por %p99, %p100
    %p102 = scmp.ne.s32.totalorder %s94, %s97
    %p103 = scmp.eq.s32.totalorder %s9, 0
    %p104 = por %p102, %p103
    %p105 = scmp.ne.s32.totalorder %s94, %s97
    %p106 = scmp.eq.s32.totalorder %s14, 1
    %p107 = por %p105, %p106
    %p108 = scmp.ne.s32.totalorder %s97, %s98
    %p109 = scmp.eq.s32.totalorder %s14, 0
    %p110 = por %p108, %p109
    %p111 = scmp.ne.s32.totalorder %s97, %s98
    %p112 = scmp.eq.s32.totalorder %s15, 1
    %p113 = por %p111, %p112
    %p115 = scmp.ne.s32.totalorder %s98, %s114
    %p116 = scmp.eq.s32.totalorder %s15, 0
    %p117 = por %p115, %p116
    %s118 = ssub.s32 %s16, %s35
    %s119 = ssub.s32 %s17, %s31
    %s120 = sor.u32 %s118, %s119
    %p121 = scmp.eq.s32.totalorder %s120, 0
    %s123 = sadd.s32 %s122, 1
    %s124 = scalar_select %p121, %s122, %s123
    %p127 = pneg %p121
    %p128 = scmp.eq.s32.totalorder %s9, 1
    %p129 = por %p127, %p128
    %p130 = scmp.ne.s32.totalorder %s122, %s125
    %p131 = scmp.eq.s32.totalorder %s9, 0
    %p132 = por %p130, %p131
    %p133 = scmp.ne.s32.totalorder %s122, %s125
    %p134 = scmp.eq.s32.totalorder %s14, 1
    %p135 = por %p133, %p134
    %p136 = scmp.ne.s32.totalorder %s125, %s126
    %p137 = scmp.eq.s32.totalorder %s14, 0
    %p138 = por %p136, %p137
    %p139 = scmp.ne.s32.totalorder %s125, %s126
    %p140 = scmp.eq.s32.totalorder %s15, 1
    %p141 = por %p139, %p140
    %p143 = scmp.ne.s32.totalorder %s126, %s142
    %p144 = scmp.eq.s32.totalorder %s15, 0
    %p145 = por %p143, %p144
    %p146 = scmp.le.s32.totalorder 1, %s9
    %p147 = scmp.lt.s32.totalorder %s9, 3
    %p148 = pnand %p146, %p147
    %p149 = pneg %p148
    // Predicated region
    $region9: #{custom_fe_forward.4} parent=5 // pred_check
      _
    $region10: #{custom_fe_forward.4} parent=5 // pred_check_branch
      %151 = sbr.rel (%p148) target = $region12
    $region11: #{custom_fe_forward.4} parent=5 // pred_region
      %s152 = ssub.s32 %s9, 1
      // Predicated region
      $region13: #{custom_fe_forward.4} parent=11 // pred_check
        %p153 = pneg %p84
      $region14: #{custom_fe_forward.4} parent=11 // pred_check_branch
        %155 = sbr.rel (%p153) target = $region16
      $region15: #{custom_fe_forward.4} parent=11 // pred_region
        %s156 = smul.u32 4, %s21
        %p157 = scmp.lt.s32.totalorder %s156, 3
        %s158 = scalar_select %p157, %s156, 3
        %p159 = scmp.lt.s32.totalorder %s20, 0
        %s160 = scalar_select %p159, %s20, 0
        %s161 = sadd.s32 %s160, %s158
        %s162 = smul.addr %s161, 8
        %s163 = scalar_lea.vmem %s1, %s162
        %s164 = smul.u32 4, %s21
      $region16: #{custom_fe_forward.4} parent=11 // pred_fallthru
        _
      // Predicated region
      $region17: #{custom_fe_forward.4} parent=11 // pred_check
        %p165 = pneg %p110
      $region18: #{custom_fe_forward.4} parent=11 // pred_check_branch
        %167 = sbr.rel (%p165) target = $region20
      $region19: #{custom_fe_forward.4} parent=11 // pred_region
        %p168 = scmp.lt.s32.totalorder %s20, 0
        %s169 = scalar_select %p168, %s20, 0
        %s170 = scalar_lea.vmem %s2, %s169
      $region20: #{custom_fe_forward.4} parent=11 // pred_fallthru
        _
    $region12: #{custom_fe_forward.4} parent=5 // pred_fallthru
      _
    %p171 = scmp.lt.s32.totalorder %s9, 2
    // Predicated region
    $region21: #{custom_fe_forward.4} parent=5 // pred_check
      %p172 = pneg %p171
    $region22: #{custom_fe_forward.4} parent=5 // pred_check_branch
      %174 = sbr.rel (%p172) target = $region24
    $region23: #{custom_fe_forward.4} parent=5 // pred_region
      // Predicated region
      $region25: #{custom_fe_forward.4} parent=23 // pred_check
        %p175 = pneg %p50
      $region26: #{custom_fe_forward.4} parent=23 // pred_check_branch
        %177 = sbr.rel (%p175) target = $region28
      $region27: #{custom_fe_forward.4} parent=23 // pred_region
        %s178 = smul.u32 8, %s16
        %p179 = scmp.lt.s32.totalorder %s178, 15
        %s180 = scalar_select %p179, %s178, 15
        %p181 = scmp.lt.s32.totalorder %s18, 0
        %s182 = scalar_select %p181, %s18, 0
        %s183 = sadd.s32 %s182, %s180
        %s184 = smul.addr %s183, 8
        %s185 = scalar_lea.vmem %s0, %s184
        %s186 = smul.u32 8, %s16
      $region28: #{custom_fe_forward.4} parent=23 // pred_fallthru
        _
    $region24: #{custom_fe_forward.4} parent=5 // pred_fallthru
      _
    %p187 = scmp.le.s32.totalorder 1, %s9
    %p188 = scmp.lt.s32.totalorder %s9, 3
    %p189 = pnand %p187, %p188
    %p190 = pneg %p189
    // Predicated region
    $region29: #{custom_fe_forward.4} parent=5 // pred_check
      _
    $region30: #{custom_fe_forward.4} parent=5 // pred_check_branch
      %192 = sbr.rel (%p189) target = $region32
    $region31: #{custom_fe_forward.4} parent=5 // pred_region
      %s193 = ssub.s32 %s9, 1
      %s194 = smul.u32 8, %s19
      %p195 = scmp.lt.s32.totalorder %s194, 15
      %s196 = scalar_select %p195, %s194, 15
      %p197 = scmp.lt.s32.totalorder %s21, 0
      %s198 = scalar_select %p197, %s21, 0
      %s199 = sadd.s32 %s198, %s196
      %s200 = smul.addr %s199, 8
      %s201 = scalar_lea.vmem %s0, %s200
      %p202 = pneg %p56
      %p203 = pneg %p53
      %s204 = smul.u32 4, %s21
      %p205 = scmp.lt.s32.totalorder %s204, 3
      %s206 = scalar_select %p205, %s204, 3
      %p207 = scmp.lt.s32.totalorder %s20, 0
      %s208 = scalar_select %p207, %s20, 0
      %s209 = sadd.s32 %s208, %s206
      %s210 = smul.addr %s209, 8
      %s211 = scalar_lea.vmem %s1, %s210
      %p212 = pneg %p84
      %p213 = pneg %p81
      %p214 = scmp.lt.s32.totalorder %s20, 0
      %s215 = scalar_select %p214, %s20, 0
      %s216 = scalar_lea.vmem %s2, %s215
      %p217 = pneg %p110
      %p218 = pneg %p107
      %p219 = pneg %p138
      %p220 = pneg %p135
      %s221 = smul.u32 8, %s19
      %p222 = scmp.lt.s32.totalorder %s221, 15
      %s223 = scalar_select %p222, %s221, 15
      %p224 = scmp.lt.s32.totalorder %s20, 0
      %s225 = scalar_select %p224, %s20, 0
      %s226 = sadd.s32 %s225, %s223
      %s227 = smul.addr %s226, 8
      %s228 = scalar_lea.vmem %s3, %s227
      %s229 = smul.u32 8, %s19
      %p230 = scmp.lt.s32.totalorder %s229, 15
      %s231 = scalar_select %p230, %s229, 15
      %p232 = scmp.lt.s32.totalorder %s21, 0
      %s233 = scalar_select %p232, %s21, 0
      %s234 = sadd.s32 %s233, %s231
      %s235 = smul.addr %s234, 8
      %s236 = scalar_lea.vmem %s0, %s235
      %s237 = smul.u32 8, %s19
      %s238 = smul.u32 4, %s21
      %p239 = scmp.lt.s32.totalorder %s238, 3
      %s240 = scalar_select %p239, %s238, 3
      %p241 = scmp.lt.s32.totalorder %s20, 0
      %s242 = scalar_select %p241, %s20, 0
      %s243 = sadd.s32 %s242, %s240
      %s244 = smul.addr %s243, 8
      %s245 = scalar_lea.vmem %s1, %s244
      %s246 = smul.u32 4, %s21
      %p247 = scmp.lt.s32.totalorder %s20, 0
      %s248 = scalar_select %p247, %s20, 0
      %s249 = scalar_lea.vmem %s2, %s248
      %s250 = smul.u32 8, %s19
      %p251 = scmp.lt.s32.totalorder %s250, 15
      %s252 = scalar_select %p251, %s250, 15
      %p253 = scmp.lt.s32.totalorder %s20, 0
      %s254 = scalar_select %p253, %s20, 0
      %s255 = sadd.s32 %s254, %s252
      %s256 = smul.addr %s255, 8
      %s257 = scalar_lea.vmem %s3, %s256
      %s258 = smul.u32 8, %s19
      %p259 = scmp.eq.s32.totalorder %s21, 0
      // Predicated region
      $region33: #{custom_fe_forward.4} parent=31 // pred_check
        %p260 = pneg %p259
      $region34: #{custom_fe_forward.4} parent=31 // pred_check_branch
        %262 = sbr.rel (%p260) target = $region36
      $region35: #{custom_fe_forward.4} parent=31 // pred_region
        %263 = vst [vmem:[#allocation2] sm:$0xff] 0.0
        %264 = vst [vmem:[#allocation2 + $0x8] sm:$0xff] 0.0
        %265 = vst [vmem:[#allocation2 + $0x10] sm:$0xff] 0.0
        %266 = vst [vmem:[#allocation2 + $0x18] sm:$0xff] 0.0
        %267 = vst [vmem:[#allocation2 + $0x20] sm:$0xff] 0.0
        %268 = vst [vmem:[#allocation2 + $0x28] sm:$0xff] 0.0
        %269 = vst [vmem:[#allocation2 + $0x30] sm:$0xff] 0.0
        %270 = vst [vmem:[#allocation2 + $0x38] sm:$0xff] 0.0
      $region36: #{custom_fe_forward.4} parent=31 // pred_fallthru
        _
      %v271 = vld [vmem:[#allocation2] sm:$0xff]
      %v272 = vld [vmem:[#allocation2 + $0x8] sm:$0xff]
      %v273 = vld [vmem:[#allocation2 + $0x10] sm:$0xff]
      %v274 = vld [vmem:[#allocation2 + $0x18] sm:$0xff]
      %v275 = vld [vmem:[#allocation2 + $0x20] sm:$0xff]
      %v276 = vld [vmem:[#allocation2 + $0x28] sm:$0xff]
      %v277 = vld [vmem:[#allocation2 + $0x30] sm:$0xff]
      %v278 = vld [vmem:[#allocation2 + $0x38] sm:$0xff]
      %v279 = vld [vmem:[%s236] sm:$0xff]
      %v280 = vld [vmem:[%s236 + $0x8] sm:$0xff]
      %v281 = vld [vmem:[%s236 + $0x10] sm:$0xff]
      %v282 = vld [vmem:[%s236 + $0x18] sm:$0xff]
      %v283 = vld [vmem:[%s236 + $0x20] sm:$0xff]
      %v284 = vld [vmem:[%s236 + $0x28] sm:$0xff]
      %v285 = vld [vmem:[%s236 + $0x30] sm:$0xff]
      %v286 = vld [vmem:[%s236 + $0x38] sm:$0xff]
      %v287 = vld [vmem:[%s245] sm:$0xff]
      %v288 = vld [vmem:[%s245 + $0x8] sm:$0xff]
      %v289 = vld [vmem:[%s245 + $0x10] sm:$0xff]
      %v290 = vld [vmem:[%s245 + $0x18] sm:$0x7]
      %vm291 = vcmask 220160
      %v293 = vsel %vm291, %v279, 0
      %v296 = vsel %vm291, %v280, 0
      %v299 = vsel %vm291, %v281, 0
      %v302 = vsel %vm291, %v282, 0
      %v305 = vsel %vm291, %v283, 0
      %v308 = vsel %vm291, %v284, 0
      %v311 = vsel %vm291, %v285, 0
      %v314 = vsel %vm291, %v286, 0
      %vm316 = vcmask 1042432
      %v318 = vsel %vm316, %v290, 0
      %320 = vmatprep.subr.mxu0 0.0
      %321 = vmatpush1.msra.mxu0 %v287
      %322 = vmatprep.subr.mxu0 0.0
      %323 = vmatpush1.msra.mxu0 %v288
      %324 = vmatprep.subr.mxu0 0.0
      %325 = vmatpush1.msra.mxu0 %v289
      %326 = vmatprep.subr.mxu0 0.0
      %327 = vmatpush1.msra.mxu0 %v318
      %328 = vmatprep.subr.mxu0 0.0
      %329 = vmatpush1.msra.mxu0 0.0
      %330 = vmatprep.subr.mxu0 0.0
      %331 = vmatpush1.msra.mxu0 0.0
      %332 = vmatprep.subr.mxu0 0.0
      %333 = vmatpush1.msra.mxu0 0.0
      %334 = vmatprep.subr.mxu0 0.0
      %335 = vmatpush1.msra.mxu0 0.0
      %336 = vmatprep.subr.mxu0 0.0
      %337 = vmatpush1.msra.mxu0 0.0
      %338 = vmatprep.subr.mxu0 0.0
      %339 = vmatpush1.msra.mxu0 0.0
      %340 = vmatprep.subr.mxu0 0.0
      %341 = vmatpush1.msra.mxu0 0.0
      %342 = vmatprep.subr.mxu0 0.0
      %343 = vmatpush1.msra.mxu0 0.0
      %344 = vmatprep.subr.mxu0 0.0
      %345 = vmatpush1.msra.mxu0 0.0
      %346 = vmatprep.subr.mxu0 0.0
      %347 = vmatpush1.msra.mxu0 0.0
      %348 = vmatprep.subr.mxu0 0.0
      %349 = vmatpush1.msra.mxu0 0.0
      %350 = vmatprep.subr.mxu0 0.0
      %351 = vmatpush1.msra.mxu0 0.0
      %352 = vmatprep.subr.mxu0 0.0
      %353 = vmatpush1.msra.mxu0 0.0
      %354 = vmatprep.subr.mxu0 0.0
      %355 = vmatpush1.msra.mxu0 0.0
      %356 = vmatprep.subr.mxu0 0.0
      %357 = vmatpush1.msra.mxu0 0.0
      %358 = vmatprep.subr.mxu0 0.0
      %359 = vmatpush1.msra.mxu0 0.0
      %360 = vmatprep.subr.mxu0 0.0
      %361 = vmatpush1.msra.mxu0 0.0
      %362 = vmatprep.subr.mxu0 0.0
      %363 = vmatpush1.msra.mxu0 0.0
      %364 = vmatprep.subr.mxu0 0.0
      %365 = vmatpush1.msra.mxu0 0.0
      %366 = vmatprep.subr.mxu0 0.0
      %367 = vmatpush1.msra.mxu0 0.0
      %368 = vmatprep.subr.mxu0 0.0
      %369 = vmatpush1.msra.mxu0 0.0
      %370 = vmatprep.subr.mxu0 0.0
      %371 = vmatpush1.msra.mxu0 0.0
      %372 = vmatprep.subr.mxu0 0.0
      %373 = vmatpush1.msra.mxu0 0.0
      %374 = vmatprep.subr.mxu0 0.0
      %375 = vmatpush1.msra.mxu0 0.0
      %376 = vmatprep.subr.mxu0 0.0
      %377 = vmatpush1.msra.mxu0 0.0
      %378 = vmatprep.subr.mxu0 0.0
      %379 = vmatpush1.msra.mxu0 0.0
      %380 = vmatprep.subr.mxu0 0.0
      %381 = vmatpush1.msra.mxu0 0.0
      %382 = vmatprep.subr.mxu0 0.0
      %383 = vmatpush1.msra.mxu0 0.0
      %384 = vmatprep.mubr.f32.mxu0 0.0
      %385 = vmatmul.mubr.f32.gmra.mrb[0].mxu0 %v293
      %v386 = vpop.f32.mrb[0].mxu0
      %v387 = vadd.f32 0.0, %v386
      %v388 = vpop.f32.mrb[0].mxu0
      %389 = vmatprep.mubr.f32.mxu0 0.0
      %390 = vmatmul.mubr.f32.gmra.mrb[0].mxu0 %v296
      %v391 = vpop.f32.mrb[0].mxu0
      %v392 = vadd.f32 0.0, %v391
      %v393 = vpop.f32.mrb[0].mxu0
      %394 = vmatprep.mubr.f32.mxu0 0.0
      %395 = vmatmul.mubr.f32.gmra.mrb[0].mxu0 %v299
      %v396 = vpop.f32.mrb[0].mxu0
      %v397 = vadd.f32 0.0, %v396
      %v398 = vpop.f32.mrb[0].mxu0
      %399 = vmatprep.mubr.f32.mxu0 0.0
      %400 = vmatmul.mubr.f32.gmra.mrb[0].mxu0 %v302
      %v401 = vpop.f32.mrb[0].mxu0
      %v402 = vadd.f32 0.0, %v401
      %v403 = vpop.f32.mrb[0].mxu0
      %404 = vmatprep.mubr.f32.mxu0 0.0
      %405 = vmatmul.mubr.f32.gmra.mrb[0].mxu0 %v305
      %v406 = vpop.f32.mrb[0].mxu0
      %v407 = vadd.f32 0.0, %v406
      %v408 = vpop.f32.mrb[0].mxu0
      %409 = vmatprep.mubr.f32.mxu0 0.0
      %410 = vmatmul.mubr.f32.gmra.mrb[0].mxu0 %v308
      %v411 = vpop.f32.mrb[0].mxu0
      %v412 = vadd.f32 0.0, %v411
      %v413 = vpop.f32.mrb[0].mxu0
      %414 = vmatprep.mubr.f32.mxu0 0.0
      %415 = vmatmul.mubr.f32.gmra.mrb[0].mxu0 %v311
      %v416 = vpop.f32.mrb[0].mxu0
      %v417 = vadd.f32 0.0, %v416
      %v418 = vpop.f32.mrb[0].mxu0
      %419 = vmatprep.mubr.f32.mxu0 0.0
      %420 = vmatmul.mubr.f32.gmra.mrb[0].mxu0 %v314
      %v421 = vpop.f32.mrb[0].mxu0
      %v422 = vadd.f32 0.0, %v421
      %v423 = vpop.f32.mrb[0].mxu0
      %424 = vdwg.mxu0
      %v425 = vadd.f32 %v271, %v387
      %v426 = vadd.f32 %v272, %v392
      %v427 = vadd.f32 %v273, %v397
      %v428 = vadd.f32 %v274, %v402
      %v429 = vadd.f32 %v275, %v407
      %v430 = vadd.f32 %v276, %v412
      %v431 = vadd.f32 %v277, %v417
      %v432 = vadd.f32 %v278, %v422
      %433 = vst [vmem:[#allocation2] sm:$0xff] %v425
      %434 = vst [vmem:[#allocation2 + $0x8] sm:$0xff] %v426
      %435 = vst [vmem:[#allocation2 + $0x10] sm:$0xff] %v427
      %436 = vst [vmem:[#allocation2 + $0x18] sm:$0xff] %v428
      %437 = vst [vmem:[#allocation2 + $0x20] sm:$0xff] %v429
      %438 = vst [vmem:[#allocation2 + $0x28] sm:$0xff] %v430
      %439 = vst [vmem:[#allocation2 + $0x30] sm:$0xff] %v431
      %440 = vst [vmem:[#allocation2 + $0x38] sm:$0xff] %v432
      // Predicated region
      $region37: #{custom_fe_forward.4} parent=31 // pred_check
        %p441 = pneg %p259
      $region38: #{custom_fe_forward.4} parent=31 // pred_check_branch
        %443 = sbr.rel (%p441) target = $region40
      $region39: #{custom_fe_forward.4} parent=31 // pred_region
        %v444 = vld [vmem:[#allocation2] sm:$0xff]
        %v445 = vld [vmem:[#allocation2 + $0x8] sm:$0xff]
        %v446 = vld [vmem:[#allocation2 + $0x10] sm:$0xff]
        %v447 = vld [vmem:[#allocation2 + $0x18] sm:$0xff]
        %v448 = vld [vmem:[#allocation2 + $0x20] sm:$0xff]
        %v449 = vld [vmem:[#allocation2 + $0x28] sm:$0xff]
        %v450 = vld [vmem:[#allocation2 + $0x30] sm:$0xff]
        %v451 = vld [vmem:[#allocation2 + $0x38] sm:$0xff]
        %v452 = vld [vmem:[%s249] sm:$0x1]
        %v454 = vlaneseq
        %v455 = vshrl.u32 %v454, 7
        %v456 = vsub.s32 0, %v455
        %v457 = vrot.slane %v452, %v456
        %v459 = vadd.f32 %v444, %v457
        %v460 = vadd.f32 %v445, %v457
        %v461 = vadd.f32 %v446, %v457
        %v462 = vadd.f32 %v447, %v457
        %v463 = vadd.f32 %v448, %v457
        %v464 = vadd.f32 %v449, %v457
        %v465 = vadd.f32 %v450, %v457
        %v466 = vadd.f32 %v451, %v457
        %v467 = vmax.f32 %v459, 0.0
        %v468 = vmax.f32 %v460, 0.0
        %v469 = vmax.f32 %v461, 0.0
        %v470 = vmax.f32 %v462, 0.0
        %v471 = vmax.f32 %v463, 0.0
        %v472 = vmax.f32 %v464, 0.0
        %v473 = vmax.f32 %v465, 0.0
        %v474 = vmax.f32 %v466, 0.0
        %475 = vst [vmem:[%s257] sm:$0xff] %v467
        %476 = vst [vmem:[%s257 + $0x8] sm:$0xff] %v468
        %477 = vst [vmem:[%s257 + $0x10] sm:$0xff] %v469
        %478 = vst [vmem:[%s257 + $0x18] sm:$0xff] %v470
        %479 = vst [vmem:[%s257 + $0x20] sm:$0xff] %v471
        %480 = vst [vmem:[%s257 + $0x28] sm:$0xff] %v472
        %481 = vst [vmem:[%s257 + $0x30] sm:$0xff] %v473
        %482 = vst [vmem:[%s257 + $0x38] sm:$0xff] %v474
      $region40: #{custom_fe_forward.4} parent=31 // pred_fallthru
        _
      %s483 = smul.u32 8, %s19
      %p484 = scmp.lt.s32.totalorder %s483, 15
      %s485 = scalar_select %p484, %s483, 15
      %p486 = scmp.lt.s32.totalorder %s20, 0
      %s487 = scalar_select %p486, %s20, 0
      %s488 = sadd.s32 %s487, %s485
      %s489 = smul.addr %s488, 8
      %s490 = scalar_lea.vmem %s3, %s489
      // Predicated region
      $region41: #{custom_fe_forward.4} parent=31 // pred_check
        %p491 = pneg %p135
      $region42: #{custom_fe_forward.4} parent=31 // pred_check_branch
        %493 = sbr.rel (%p491) target = $region44
      $region43: #{custom_fe_forward.4} parent=31 // pred_region
        %s494 = smul.u32 8, %s19
      $region44: #{custom_fe_forward.4} parent=31 // pred_fallthru
        _
    $region32: #{custom_fe_forward.4} parent=5 // pred_fallthru
      _
    %p495 = scmp.le.s32.totalorder 2, %s9
    // Predicated region
    $region45: #{custom_fe_forward.4} parent=5 // pred_check
      %p496 = pneg %p495
    $region46: #{custom_fe_forward.4} parent=5 // pred_check_branch
      %498 = sbr.rel (%p496) target = $region48
    $region47: #{custom_fe_forward.4} parent=5 // pred_region
      %s499 = ssub.s32 %s9, 2
      // Predicated region
      $region49: #{custom_fe_forward.4} parent=47 // pred_check
        %p500 = pneg %p141
      $region50: #{custom_fe_forward.4} parent=47 // pred_check_branch
        %502 = sbr.rel (%p500) target = $region52
      $region51: #{custom_fe_forward.4} parent=47 // pred_region
        %s503 = smul.u32 8, %s22
        %p504 = scmp.lt.s32.totalorder %s503, 15
        %s505 = scalar_select %p504, %s503, 15
        %p506 = scmp.lt.s32.totalorder %s23, 0
        %s507 = scalar_select %p506, %s23, 0
        %s508 = sadd.s32 %s507, %s505
        %s509 = smul.addr %s508, 8
        %s510 = scalar_lea.vmem %s3, %s509
      $region52: #{custom_fe_forward.4} parent=47 // pred_fallthru
        _
    $region48: #{custom_fe_forward.4} parent=5 // pred_fallthru
      _
  $region6: #{custom_fe_forward.4} parent=0 // loop_footer
    %s13 = sadd.s32 1, %s9
  $region7: #{custom_fe_forward.4} parent=0 // loop_footer_branch
    %8 = sbr.rel target = $region3
  $region8: #{custom_fe_forward.4} parent=0 // loop_exit
    _

// kernel: custom_fe_forward.5
$region0: #{custom_fe_forward.5}
  #allocation0 [shape = 'u32[]', space=smem, size = 0x4, offset = 0x4, fixed_abs, tag = 'smem constant byte address 0x4 - core index']
  #allocation1 [shape = 'u32[144,128]{1,0:T(1,128)}', space=vmem, size = 0x12000, scoped, tag = 'internal scratch']
  #allocation2 [shape = 'f32[16,256]{1,0:T(8,128)}', space=vmem, size = 0x4000, scoped, tag = 'scratch operand']
  %s0 = inlined_call_operand.vmem [shape: f32[32,576], index: 0, kind: input, shape index: {}]
  %s1 = inlined_call_operand.hbm [shape: f32[576,256], index: 1, kind: input, shape index: {}]
  %s2 = inlined_call_operand.hbm [shape: f32[1,256], index: 2, kind: input, shape index: {}]
  %s3 = inlined_call_operand.vmem [shape: f32[32,256], index: 3, kind: output, shape index: {0}]
  %s4 = inlined_call_operand.vmem [shape: f32[32,256], index: 4, kind: output, shape index: {1}]
  %5 = xla_tuple %s3, %s4
  %s6 = sld [smem:[#allocation0]]
  $region69: #{custom_fe_forward.5} parent=0
    _
  %s8 = ssub.s32 1, %s6
  %s9 = scalar_select 0, %s8, %s6
  $region1: #{custom_fe_forward.5} parent=0
    #allocation3 [shape = 'u8[589824]{0}', space=vmem, size = 0x90000, scoped, tag = 'input window, operand 1, single buffered']
    #allocation4 [shape = 's32[2]{0}', space=sflag, size = 0x8, scoped, tag = 'scoped memory for custom_fe_forward.5']
    #allocation5 [shape = 'u8[1024]{0}', space=vmem, size = 0x400, scoped, tag = 'input window, operand 2, single buffered']
    #allocation6 [shape = 's32[1]{0}', space=sflag, size = 0x4, scoped, tag = 'scoped memory for custom_fe_forward.5']
    %10 = vsyncpa [#allocation4], 0
    %11 = vsyncpa [#allocation6], 0
    loop: start=0, step=1, limit=4
    $region2: #{custom_fe_forward.5} parent=1 // loop_pre_header
      _
    $region3: #{custom_fe_forward.5} parent=1 // loop_header
      %s13 = sphi 0, %s17
      %p14 = scmp.ge.s32.totalorder %s13, 4
      %s20 = sphi 0, %s39
      %s21 = sphi 0, %s35
      %s22 = sphi 0, %s31
      %s23 = sphi 0, %s20
      %s24 = sphi 0, %s21
      %s25 = sphi 0, %s22
      %s26 = sphi 0, %s23
      %s27 = sphi 0, %s24
      %s28 = sphi 0, %s25
      %s44 = sphi 0, %s46
      %s47 = sphi 0, %s44
      %s48 = sphi 0, %s47
      %s64 = sphi 0, %s48
      %s72 = sphi 0, %s74
      %s75 = sphi 0, %s72
      %s76 = sphi 0, %s75
      %s92 = sphi 0, %s76
      %s98 = sphi 0, %s100
      %s101 = sphi 0, %s98
      %s102 = sphi 0, %s101
      %s118 = sphi 0, %s102
      %s126 = sphi 0, %s128
      %s129 = sphi 0, %s126
      %s130 = sphi 0, %s129
      %s146 = sphi 0, %s130
      %s154 = sphi 0, %s156
      %s157 = sphi 0, %s154
      %s158 = sphi 0, %s157
      %s174 = sphi 0, %s158
    $region4: #{custom_fe_forward.5} parent=1 // loop_header_branch
      %16 = sbr.rel (%p14) target = $region8
    $region5: #{custom_fe_forward.5} parent=1 // loop_body
      %s18 = ssub.s32 %s13, 1
      %s19 = ssub.s32 %s13, 2
      %s29 = sadd.s32 1, %s22
      %p30 = scmp.ge.s32.totalorder %s29, 1
      %s31 = scalar_select %p30, 0, %s29
      %s32 = sadd.s32 1, %s21
      %s33 = scalar_select %p30, %s32, %s21
      %p34 = scmp.ge.s32.totalorder %s33, 1
      %s35 = scalar_select %p34, 0, %s33
      %s36 = sadd.s32 1, %s20
      %s37 = scalar_select %p34, %s36, %s20
      %p38 = scmp.ge.s32.totalorder %s37, 2
      %s39 = scalar_select %p38, 0, %s37
      %s40 = ssub.s32 %s20, %s39
      %s41 = ssub.s32 %s22, %s31
      %s42 = sor.u32 %s40, %s41
      %p43 = scmp.eq.s32.totalorder %s42, 0
      %s45 = sadd.s32 %s44, 1
      %s46 = scalar_select %p43, %s44, %s45
      %p49 = pneg %p43
      %p50 = scmp.eq.s32.totalorder %s13, 1
      %p51 = por %p49, %p50
      %p52 = scmp.ne.s32.totalorder %s44, %s47
      %p53 = scmp.eq.s32.totalorder %s13, 0
      %p54 = por %p52, %p53
      %p55 = scmp.ne.s32.totalorder %s44, %s47
      %p56 = scmp.eq.s32.totalorder %s18, 1
      %p57 = por %p55, %p56
      %p58 = scmp.ne.s32.totalorder %s47, %s48
      %p59 = scmp.eq.s32.totalorder %s18, 0
      %p60 = por %p58, %p59
      %p61 = scmp.ne.s32.totalorder %s47, %s48
      %p62 = scmp.eq.s32.totalorder %s19, 1
      %p63 = por %p61, %p62
      %p65 = scmp.ne.s32.totalorder %s48, %s64
      %p66 = scmp.eq.s32.totalorder %s19, 0
      %p67 = por %p65, %p66
      %s68 = ssub.s32 %s22, %s31
      %s69 = ssub.s32 %s21, %s35
      %s70 = sor.u32 %s68, %s69
      %p71 = scmp.eq.s32.totalorder %s70, 0
      %s73 = sadd.s32 %s72, 1
      %s74 = scalar_select %p71, %s72, %s73
      %p77 = pneg %p71
      %p78 = scmp.eq.s32.totalorder %s13, 1
      %p79 = por %p77, %p78
      %p80 = scmp.ne.s32.totalorder %s72, %s75
      %p81 = scmp.eq.s32.totalorder %s13, 0
      %p82 = por %p80, %p81
      %p83 = scmp.ne.s32.totalorder %s72, %s75
      %p84 = scmp.eq.s32.totalorder %s18, 1
      %p85 = por %p83, %p84
      %p86 = scmp.ne.s32.totalorder %s75, %s76
      %p87 = scmp.eq.s32.totalorder %s18, 0
      %p88 = por %p86, %p87
      %p89 = scmp.ne.s32.totalorder %s75, %s76
      %p90 = scmp.eq.s32.totalorder %s19, 1
      %p91 = por %p89, %p90
      %p93 = scmp.ne.s32.totalorder %s76, %s92
      %p94 = scmp.eq.s32.totalorder %s19, 0
      %p95 = por %p93, %p94
      %s96 = ssub.s32 %s21, %s35
      %p97 = scmp.eq.s32.totalorder %s96, 0
      %s99 = sadd.s32 %s98, 1
      %s100 = scalar_select %p97, %s98, %s99
      %p103 = pneg %p97
      %p104 = scmp.eq.s32.totalorder %s13, 1
      %p105 = por %p103, %p104
      %p106 = scmp.ne.s32.totalorder %s98, %s101
      %p107 = scmp.eq.s32.totalorder %s13, 0
      %p108 = por %p106, %p107
      %p109 = scmp.ne.s32.totalorder %s98, %s101
      %p110 = scmp.eq.s32.totalorder %s18, 1
      %p111 = por %p109, %p110
      %p112 = scmp.ne.s32.totalorder %s101, %s102
      %p113 = scmp.eq.s32.totalorder %s18, 0
      %p114 = por %p112, %p113
      %p115 = scmp.ne.s32.totalorder %s101, %s102
      %p116 = scmp.eq.s32.totalorder %s19, 1
      %p117 = por %p115, %p116
      %p119 = scmp.ne.s32.totalorder %s102, %s118
      %p120 = scmp.eq.s32.totalorder %s19, 0
      %p121 = por %p119, %p120
      %s122 = ssub.s32 %s20, %s39
      %s123 = ssub.s32 %s21, %s35
      %s124 = sor.u32 %s122, %s123
      %p125 = scmp.eq.s32.totalorder %s124, 0
      %s127 = sadd.s32 %s126, 1
      %s128 = scalar_select %p125, %s126, %s127
      %p131 = pneg %p125
      %p132 = scmp.eq.s32.totalorder %s13, 1
      %p133 = por %p131, %p132
      %p134 = scmp.ne.s32.totalorder %s126, %s129
      %p135 = scmp.eq.s32.totalorder %s13, 0
      %p136 = por %p134, %p135
      %p137 = scmp.ne.s32.totalorder %s126, %s129
      %p138 = scmp.eq.s32.totalorder %s18, 1
      %p139 = por %p137, %p138
      %p140 = scmp.ne.s32.totalorder %s129, %s130
      %p141 = scmp.eq.s32.totalorder %s18, 0
      %p142 = por %p140, %p141
      %p143 = scmp.ne.s32.totalorder %s129, %s130
      %p144 = scmp.eq.s32.totalorder %s19, 1
      %p145 = por %p143, %p144
      %p147 = scmp.ne.s32.totalorder %s130, %s146
      %p148 = scmp.eq.s32.totalorder %s19, 0
      %p149 = por %p147, %p148
      %s150 = ssub.s32 %s20, %s39
      %s151 = ssub.s32 %s21, %s35
      %s152 = sor.u32 %s150, %s151
      %p153 = scmp.eq.s32.totalorder %s152, 0
      %s155 = sadd.s32 %s154, 1
      %s156 = scalar_select %p153, %s154, %s155
      %p159 = pneg %p153
      %p160 = scmp.eq.s32.totalorder %s13, 1
      %p161 = por %p159, %p160
      %p162 = scmp.ne.s32.totalorder %s154, %s157
      %p163 = scmp.eq.s32.totalorder %s13, 0
      %p164 = por %p162, %p163
      %p165 = scmp.ne.s32.totalorder %s154, %s157
      %p166 = scmp.eq.s32.totalorder %s18, 1
      %p167 = por %p165, %p166
      %p168 = scmp.ne.s32.totalorder %s157, %s158
      %p169 = scmp.eq.s32.totalorder %s18, 0
      %p170 = por %p168, %p169
      %p171 = scmp.ne.s32.totalorder %s157, %s158
      %p172 = scmp.eq.s32.totalorder %s19, 1
      %p173 = por %p171, %p172
      %p175 = scmp.ne.s32.totalorder %s158, %s174
      %p176 = scmp.eq.s32.totalorder %s19, 0
      %p177 = por %p175, %p176
      %p178 = scmp.le.s32.totalorder 1, %s13
      %p179 = scmp.lt.s32.totalorder %s13, 3
      %p180 = pnand %p178, %p179
      %p181 = pneg %p180
      // Predicated region
      $region9: #{custom_fe_forward.5} parent=5 // pred_check
        _
      $region10: #{custom_fe_forward.5} parent=5 // pred_check_branch
        %183 = sbr.rel (%p180) target = $region12
      $region11: #{custom_fe_forward.5} parent=5 // pred_region
        %s184 = ssub.s32 %s13, 1
        // Predicated region
        $region13: #{custom_fe_forward.5} parent=11 // pred_check
          %p185 = pneg %p88
        $region14: #{custom_fe_forward.5} parent=11 // pred_check_branch
          %187 = sbr.rel (%p185) target = $region16
        $region15: #{custom_fe_forward.5} parent=11 // pred_region
          %s188 = smul.u32 72, %s25
          %s189 = smul.u32 2, %s24
          %s191 = ssub.s32 18432, 18432
          %192 = vsyncadd [#allocation4], %s191
          %s193 = smul.addr %s188, 2
          %s194 = sadd.s32 %s189, %s193
          %s195 = smul.addr %s194, 128
          %s196 = scalar_lea.hbm %s1, %s195
          %s197 = sshll.u32 [#allocation3], 4
          %s198 = int_to_ptr.vmem [resolvable:$true] %s197
          %203 = dma.hbm_to_vmem [thread:$0]  %s196, 18432, %s198, [#allocation4], 256, 256, 16
        $region16: #{custom_fe_forward.5} parent=11 // pred_fallthru
          _
        // Predicated region
        $region17: #{custom_fe_forward.5} parent=11 // pred_check
          %p204 = pneg %p114
        $region18: #{custom_fe_forward.5} parent=11 // pred_check_branch
          %206 = sbr.rel (%p204) target = $region20
        $region19: #{custom_fe_forward.5} parent=11 // pred_region
          %s207 = smul.u32 2, %s24
          %s209 = ssub.s32 32, 32
          %210 = vsyncadd [#allocation6], %s209
          %s211 = smul.addr %s207, 16
          %s212 = scalar_lea.hbm %s2, %s211
          %s214 = sshll.u32 [#allocation5], 4
          %s215 = int_to_ptr.vmem [resolvable:$true] %s214
          %217 = dma.hbm_to_vmem [thread:$0]  %s212, 32, %s215, [#allocation6]
        $region20: #{custom_fe_forward.5} parent=11 // pred_fallthru
          _
      $region12: #{custom_fe_forward.5} parent=5 // pred_fallthru
        _
      %p218 = scmp.lt.s32.totalorder %s13, 2
      // Predicated region
      $region21: #{custom_fe_forward.5} parent=5 // pred_check
        %p219 = pneg %p218
      $region22: #{custom_fe_forward.5} parent=5 // pred_check_branch
        %221 = sbr.rel (%p219) target = $region24
      $region23: #{custom_fe_forward.5} parent=5 // pred_region
        // Predicated region
        $region25: #{custom_fe_forward.5} parent=23 // pred_check
          %p222 = pneg %p54
        $region26: #{custom_fe_forward.5} parent=23 // pred_check_branch
          %224 = sbr.rel (%p222) target = $region28
        $region27: #{custom_fe_forward.5} parent=23 // pred_region
          %s225 = smul.u32 2, %s20
          %s226 = smul.u32 5, %s22
          %p227 = scmp.lt.s32.totalorder %s225, 3
          %s228 = scalar_select %p227, %s225, 3
          %p229 = scmp.lt.s32.totalorder %s226, 4
          %s230 = scalar_select %p229, %s226, 4
          %s231 = smul.addr %s228, 5
          %s232 = sadd.s32 %s230, %s231
          %s233 = smul.addr %s232, 8
          %s234 = scalar_lea.vmem %s0, %s233
          %s235 = smul.u32 2, %s20
          %s236 = smul.u32 5, %s22
        $region28: #{custom_fe_forward.5} parent=23 // pred_fallthru
          _
      $region24: #{custom_fe_forward.5} parent=5 // pred_fallthru
        _
      %p237 = scmp.le.s32.totalorder 1, %s13
      %p238 = scmp.lt.s32.totalorder %s13, 3
      %p239 = pnand %p237, %p238
      %p240 = pneg %p239
      // Predicated region
      $region29: #{custom_fe_forward.5} parent=5 // pred_check
        _
      $region30: #{custom_fe_forward.5} parent=5 // pred_check_branch
        %242 = sbr.rel (%p239) target = $region32
      $region31: #{custom_fe_forward.5} parent=5 // pred_region
        %s243 = ssub.s32 %s13, 1
        // Predicated region
        $region33: #{custom_fe_forward.5} parent=31 // pred_check
          %p244 = pneg %p88
        $region34: #{custom_fe_forward.5} parent=31 // pred_check_branch
          %246 = sbr.rel (%p244) target = $region36
        $region35: #{custom_fe_forward.5} parent=31 // pred_region
          %247 = dma.done [#allocation4], 18432
        $region36: #{custom_fe_forward.5} parent=31 // pred_fallthru
          _
        // Predicated region
        $region37: #{custom_fe_forward.5} parent=31 // pred_check
          %p248 = pneg %p114
        $region38: #{custom_fe_forward.5} parent=31 // pred_check_branch
          %250 = sbr.rel (%p248) target = $region40
        $region39: #{custom_fe_forward.5} parent=31 // pred_region
          %251 = dma.done [#allocation6], 32
        $region40: #{custom_fe_forward.5} parent=31 // pred_fallthru
          _
        %s252 = smul.u32 2, %s23
        %s253 = smul.u32 5, %s25
        %p254 = scmp.lt.s32.totalorder %s252, 3
        %s255 = scalar_select %p254, %s252, 3
        %p256 = scmp.lt.s32.totalorder %s253, 4
        %s257 = scalar_select %p256, %s253, 4
        %s258 = smul.addr %s255, 5
        %s259 = sadd.s32 %s257, %s258
        %s260 = smul.addr %s259, 8
        %s261 = scalar_lea.vmem %s0, %s260
        %p262 = pneg %p60
        %p263 = pneg %p57
        %p264 = pneg %p88
        %p265 = pneg %p85
        %p266 = pneg %p114
        %p267 = pneg %p111
        %p268 = pneg %p142
        %p269 = pneg %p139
        %s270 = smul.u32 2, %s23
        %s271 = smul.u32 2, %s24
        %p272 = scmp.lt.s32.totalorder %s270, 3
        %s273 = scalar_select %p272, %s270, 3
        %p274 = scmp.lt.s32.totalorder %s271, 1
        %s275 = scalar_select %p274, %s271, 1
        %s276 = smul.addr %s273, 2
        %s277 = sadd.s32 %s275, %s276
        %s278 = smul.addr %s277, 8
        %s279 = scalar_lea.vmem %s3, %s278
        %p280 = pneg %p170
        %p281 = pneg %p167
        %s282 = smul.u32 2, %s23
        %s283 = smul.u32 2, %s24
        %p284 = scmp.lt.s32.totalorder %s282, 3
        %s285 = scalar_select %p284, %s282, 3
        %p286 = scmp.lt.s32.totalorder %s283, 1
        %s287 = scalar_select %p286, %s283, 1
        %s288 = smul.addr %s285, 2
        %s289 = sadd.s32 %s287, %s288
        %s290 = smul.addr %s289, 8
        %s291 = scalar_lea.vmem %s4, %s290
        %s292 = smul.u32 2, %s23
        %s293 = smul.u32 5, %s25
        %p294 = scmp.lt.s32.totalorder %s292, 3
        %s295 = scalar_select %p294, %s292, 3
        %p296 = scmp.lt.s32.totalorder %s293, 4
        %s297 = scalar_select %p296, %s293, 4
        %s298 = smul.addr %s295, 5
        %s299 = sadd.s32 %s297, %s298
        %s300 = smul.addr %s299, 8
        %s301 = scalar_lea.vmem %s0, %s300
        %s302 = smul.u32 2, %s23
        %s303 = smul.u32 5, %s25
        %s304 = smul.u32 72, %s25
        %s305 = smul.u32 2, %s24
        %s306 = smul.u32 2, %s24
        %s307 = smul.u32 2, %s23
        %s308 = smul.u32 2, %s24
        %p309 = scmp.lt.s32.totalorder %s307, 3
        %s310 = scalar_select %p309, %s307, 3
        %p311 = scmp.lt.s32.totalorder %s308, 1
        %s312 = scalar_select %p311, %s308, 1
        %s313 = smul.addr %s310, 2
        %s314 = sadd.s32 %s312, %s313
        %s315 = smul.addr %s314, 8
        %s316 = scalar_lea.vmem %s3, %s315
        %s317 = smul.u32 2, %s23
        %s318 = smul.u32 2, %s24
        %s319 = smul.u32 2, %s23
        %s320 = smul.u32 2, %s24
        %p321 = scmp.lt.s32.totalorder %s319, 3
        %s322 = scalar_select %p321, %s319, 3
        %p323 = scmp.lt.s32.totalorder %s320, 1
        %s324 = scalar_select %p323, %s320, 1
        %s325 = smul.addr %s322, 2
        %s326 = sadd.s32 %s324, %s325
        %s327 = smul.addr %s326, 8
        %s328 = scalar_lea.vmem %s4, %s327
        %s329 = smul.u32 2, %s23
        %s330 = smul.u32 2, %s24
        %p331 = scmp.eq.s32.totalorder %s25, 0
        // Predicated region
        $region41: #{custom_fe_forward.5} parent=31 // pred_check
          %p332 = pneg %p331
        $region42: #{custom_fe_forward.5} parent=31 // pred_check_branch
          %334 = sbr.rel (%p332) target = $region44
        $region43: #{custom_fe_forward.5} parent=31 // pred_region
          %335 = vst [vmem:[#allocation2] sm:$0xff] 0.0
          %336 = vst [vmem:[#allocation2 + $0x8] sm:$0xff] 0.0
          %337 = vst [vmem:[#allocation2 + $0x10] sm:$0xff] 0.0
          %338 = vst [vmem:[#allocation2 + $0x18] sm:$0xff] 0.0
        $region44: #{custom_fe_forward.5} parent=31 // pred_fallthru
          _
        %v339 = vld [vmem:[#allocation2] sm:$0xff]
        %v340 = vld [vmem:[#allocation2 + $0x8] sm:$0xff]
        %v341 = vld [vmem:[#allocation2 + $0x10] sm:$0xff]
        %v342 = vld [vmem:[#allocation2 + $0x18] sm:$0xff]
        %v343 = vld [vmem:[%s301] sm:$0xff]
        %v344 = vld [vmem:[%s301 + $0x8] sm:$0xff]
        %v345 = vld [vmem:[%s301 + $0x10] sm:$0xff]
        %v346 = vld [vmem:[%s301 + $0x18] sm:$0xff]
        %v347 = vld [vmem:[%s301 + $0x20] sm:$0xff]
        %v348 = vld [vmem:[%s301 + $0x28] sm:$0xff]
        %v349 = vld [vmem:[%s301 + $0x30] sm:$0xff]
        %v350 = vld [vmem:[%s301 + $0x38] sm:$0xff]
        %v351 = vld [vmem:[%s301 + $0x40] sm:$0xff]
        %v352 = vld [vmem:[%s301 + $0x48] sm:$0xff]
        %v353 = vld [vmem:[#allocation3] sm:$0xff]
        %v354 = vld [vmem:[#allocation3 + $0x8] sm:$0xff]
        %v355 = vld [vmem:[#allocation3 + $0x10] sm:$0xff]
        %v356 = vld [vmem:[#allocation3 + $0x18] sm:$0xff]
        %v357 = vld [vmem:[#allocation3 + $0x20] sm:$0xff]
        %v358 = vld [vmem:[#allocation3 + $0x28] sm:$0xff]
        %v359 = vld [vmem:[#allocation3 + $0x30] sm:$0xff]
        %v360 = vld [vmem:[#allocation3 + $0x38] sm:$0xff]
        %v361 = vld [vmem:[#allocation3 + $0x40] sm:$0xff]
        %v362 = vld [vmem:[#allocation3 + $0x48] sm:$0xff]
        %v363 = vld [vmem:[#allocation3 + $0x50] sm:$0xff]
        %v364 = vld [vmem:[#allocation3 + $0x58] sm:$0xff]
        %v365 = vld [vmem:[#allocation3 + $0x60] sm:$0xff]
        %v366 = vld [vmem:[#allocation3 + $0x68] sm:$0xff]
        %v367 = vld [vmem:[#allocation3 + $0x70] sm:$0xff]
        %v368 = vld [vmem:[#allocation3 + $0x78] sm:$0xff]
        %v369 = vld [vmem:[#allocation3 + $0x80] sm:$0xff]
        %v370 = vld [vmem:[#allocation3 + $0x88] sm:$0xff]
        %v371 = vld [vmem:[#allocation3 + $0x90] sm:$0xff]
        %v372 = vld [vmem:[#allocation3 + $0x98] sm:$0xff]
        %v373 = vld [vmem:[#allocation3 + $0xa0] sm:$0xff]
        %v374 = vld [vmem:[#allocation3 + $0xa8] sm:$0xff]
        %v375 = vld [vmem:[#allocation3 + $0xb0] sm:$0xff]
        %v376 = vld [vmem:[#allocation3 + $0xb8] sm:$0xff]
        %v377 = vld [vmem:[#allocation3 + $0xc0] sm:$0xff]
        %v378 = vld [vmem:[#allocation3 + $0xc8] sm:$0xff]
        %v379 = vld [vmem:[#allocation3 + $0xd0] sm:$0xff]
        %v380 = vld [vmem:[#allocation3 + $0xd8] sm:$0xff]
        %v381 = vld [vmem:[#allocation3 + $0xe0] sm:$0xff]
        %v382 = vld [vmem:[#allocation3 + $0xe8] sm:$0xff]
        %v383 = vld [vmem:[#allocation3 + $0xf0] sm:$0xff]
        %v384 = vld [vmem:[#allocation3 + $0xf8] sm:$0xff]
        %v385 = vld [vmem:[#allocation3 + $0x100] sm:$0xff]
        %v386 = vld [vmem:[#allocation3 + $0x108] sm:$0xff]
        %v387 = vld [vmem:[#allocation3 + $0x110] sm:$0xff]
        %v388 = vld [vmem:[#allocation3 + $0x118] sm:$0xff]
        %v389 = vld [vmem:[#allocation3 + $0x120] sm:$0xff]
        %v390 = vld [vmem:[#allocation3 + $0x128] sm:$0xff]
        %v391 = vld [vmem:[#allocation3 + $0x130] sm:$0xff]
        %v392 = vld [vmem:[#allocation3 + $0x138] sm:$0xff]
        %v393 = vld [vmem:[#allocation3 + $0x140] sm:$0xff]
        %v394 = vld [vmem:[#allocation3 + $0x148] sm:$0xff]
        %v395 = vld [vmem:[#allocation3 + $0x150] sm:$0xff]
        %v396 = vld [vmem:[#allocation3 + $0x158] sm:$0xff]
        %v397 = vld [vmem:[#allocation3 + $0x160] sm:$0xff]
        %v398 = vld [vmem:[#allocation3 + $0x168] sm:$0xff]
        %v399 = vld [vmem:[#allocation3 + $0x170] sm:$0xff]
        %v400 = vld [vmem:[#allocation3 + $0x178] sm:$0xff]
        %v401 = vld [vmem:[#allocation3 + $0x180] sm:$0xff]
        %v402 = vld [vmem:[#allocation3 + $0x188] sm:$0xff]
        %v403 = vld [vmem:[#allocation3 + $0x190] sm:$0xff]
        %v404 = vld [vmem:[#allocation3 + $0x198] sm:$0xff]
        %v405 = vld [vmem:[#allocation3 + $0x1a0] sm:$0xff]
        %v406 = vld [vmem:[#allocation3 + $0x1a8] sm:$0xff]
        %v407 = vld [vmem:[#allocation3 + $0x1b0] sm:$0xff]
        %v408 = vld [vmem:[#allocation3 + $0x1b8] sm:$0xff]
        %v409 = vld [vmem:[#allocation3 + $0x1c0] sm:$0xff]
        %v410 = vld [vmem:[#allocation3 + $0x1c8] sm:$0xff]
        %v411 = vld [vmem:[#allocation3 + $0x1d0] sm:$0xff]
        %v412 = vld [vmem:[#allocation3 + $0x1d8] sm:$0xff]
        %v413 = vld [vmem:[#allocation3 + $0x1e0] sm:$0xff]
        %v414 = vld [vmem:[#allocation3 + $0x1e8] sm:$0xff]
        %v415 = vld [vmem:[#allocation3 + $0x1f0] sm:$0xff]
        %v416 = vld [vmem:[#allocation3 + $0x1f8] sm:$0xff]
        %v417 = vld [vmem:[#allocation3 + $0x200] sm:$0xff]
        %v418 = vld [vmem:[#allocation3 + $0x208] sm:$0xff]
        %v419 = vld [vmem:[#allocation3 + $0x210] sm:$0xff]
        %v420 = vld [vmem:[#allocation3 + $0x218] sm:$0xff]
        %v421 = vld [vmem:[#allocation3 + $0x220] sm:$0xff]
        %v422 = vld [vmem:[#allocation3 + $0x228] sm:$0xff]
        %v423 = vld [vmem:[#allocation3 + $0x230] sm:$0xff]
        %v424 = vld [vmem:[#allocation3 + $0x238] sm:$0xff]
        %v425 = vld [vmem:[#allocation3 + $0x240] sm:$0xff]
        %v426 = vld [vmem:[#allocation3 + $0x248] sm:$0xff]
        %v427 = vld [vmem:[#allocation3 + $0x250] sm:$0xff]
        %v428 = vld [vmem:[#allocation3 + $0x258] sm:$0xff]
        %v429 = vld [vmem:[#allocation3 + $0x260] sm:$0xff]
        %v430 = vld [vmem:[#allocation3 + $0x268] sm:$0xff]
        %v431 = vld [vmem:[#allocation3 + $0x270] sm:$0xff]
        %v432 = vld [vmem:[#allocation3 + $0x278] sm:$0xff]
        %v433 = vld [vmem:[#allocation3 + $0x280] sm:$0xff]
        %v434 = vld [vmem:[#allocation3 + $0x288] sm:$0xff]
        %v435 = vld [vmem:[#allocation3 + $0x290] sm:$0xff]
        %v436 = vld [vmem:[#allocation3 + $0x298] sm:$0xff]
        %v437 = vld [vmem:[#allocation3 + $0x2a0] sm:$0xff]
        %v438 = vld [vmem:[#allocation3 + $0x2a8] sm:$0xff]
        %v439 = vld [vmem:[#allocation3 + $0x2b0] sm:$0xff]
        %v440 = vld [vmem:[#allocation3 + $0x2b8] sm:$0xff]
        %v441 = vld [vmem:[#allocation3 + $0x2c0] sm:$0xff]
        %v442 = vld [vmem:[#allocation3 + $0x2c8] sm:$0xff]
        %v443 = vld [vmem:[#allocation3 + $0x2d0] sm:$0xff]
        %v444 = vld [vmem:[#allocation3 + $0x2d8] sm:$0xff]
        %v445 = vld [vmem:[#allocation3 + $0x2e0] sm:$0xff]
        %v446 = vld [vmem:[#allocation3 + $0x2e8] sm:$0xff]
        %v447 = vld [vmem:[#allocation3 + $0x2f0] sm:$0xff]
        %v448 = vld [vmem:[#allocation3 + $0x2f8] sm:$0xff]
        %v449 = vld [vmem:[#allocation3 + $0x300] sm:$0xff]
        %v450 = vld [vmem:[#allocation3 + $0x308] sm:$0xff]
        %v451 = vld [vmem:[#allocation3 + $0x310] sm:$0xff]
        %v452 = vld [vmem:[#allocation3 + $0x318] sm:$0xff]
        %v453 = vld [vmem:[#allocation3 + $0x320] sm:$0xff]
        %v454 = vld [vmem:[#allocation3 + $0x328] sm:$0xff]
        %v455 = vld [vmem:[#allocation3 + $0x330] sm:$0xff]
        %v456 = vld [vmem:[#allocation3 + $0x338] sm:$0xff]
        %v457 = vld [vmem:[#allocation3 + $0x340] sm:$0xff]
        %v458 = vld [vmem:[#allocation3 + $0x348] sm:$0xff]
        %v459 = vld [vmem:[#allocation3 + $0x350] sm:$0xff]
        %v460 = vld [vmem:[#allocation3 + $0x358] sm:$0xff]
        %v461 = vld [vmem:[#allocation3 + $0x360] sm:$0xff]
        %v462 = vld [vmem:[#allocation3 + $0x368] sm:$0xff]
        %v463 = vld [vmem:[#allocation3 + $0x370] sm:$0xff]
        %v464 = vld [vmem:[#allocation3 + $0x378] sm:$0xff]
        %v465 = vld [vmem:[#allocation3 + $0x380] sm:$0xff]
        %v466 = vld [vmem:[#allocation3 + $0x388] sm:$0xff]
        %v467 = vld [vmem:[#allocation3 + $0x390] sm:$0xff]
        %v468 = vld [vmem:[#allocation3 + $0x398] sm:$0xff]
        %v469 = vld [vmem:[#allocation3 + $0x3a0] sm:$0xff]
        %v470 = vld [vmem:[#allocation3 + $0x3a8] sm:$0xff]
        %v471 = vld [vmem:[#allocation3 + $0x3b0] sm:$0xff]
        %v472 = vld [vmem:[#allocation3 + $0x3b8] sm:$0xff]
        %v473 = vld [vmem:[#allocation3 + $0x3c0] sm:$0xff]
        %v474 = vld [vmem:[#allocation3 + $0x3c8] sm:$0xff]
        %v475 = vld [vmem:[#allocation3 + $0x3d0] sm:$0xff]
        %v476 = vld [vmem:[#allocation3 + $0x3d8] sm:$0xff]
        %v477 = vld [vmem:[#allocation3 + $0x3e0] sm:$0xff]
        %v478 = vld [vmem:[#allocation3 + $0x3e8] sm:$0xff]
        %v479 = vld [vmem:[#allocation3 + $0x3f0] sm:$0xff]
        %v480 = vld [vmem:[#allocation3 + $0x3f8] sm:$0xff]
        %v481 = vld [vmem:[#allocation3 + $0x400] sm:$0xff]
        %v482 = vld [vmem:[#allocation3 + $0x408] sm:$0xff]
        %v483 = vld [vmem:[#allocation3 + $0x410] sm:$0xff]
        %v484 = vld [vmem:[#allocation3 + $0x418] sm:$0xff]
        %v485 = vld [vmem:[#allocation3 + $0x420] sm:$0xff]
        %v486 = vld [vmem:[#allocation3 + $0x428] sm:$0xff]
        %v487 = vld [vmem:[#allocation3 + $0x430] sm:$0xff]
        %v488 = vld [vmem:[#allocation3 + $0x438] sm:$0xff]
        %v489 = vld [vmem:[#allocation3 + $0x440] sm:$0xff]
        %v490 = vld [vmem:[#allocation3 + $0x448] sm:$0xff]
        %v491 = vld [vmem:[#allocation3 + $0x450] sm:$0xff]
        %v492 = vld [vmem:[#allocation3 + $0x458] sm:$0xff]
        %v493 = vld [vmem:[#allocation3 + $0x460] sm:$0xff]
        %v494 = vld [vmem:[#allocation3 + $0x468] sm:$0xff]
        %v495 = vld [vmem:[#allocation3 + $0x470] sm:$0xff]
        %v496 = vld [vmem:[#allocation3 + $0x478] sm:$0xff]
        %vm497 = vcmask 523264
        %v499 = vsel %vm497, %v347, 0
        %v502 = vsel %vm497, %v352, 0
        %504 = vmatprep.subr.mxu0 %v354
        %505 = vmatpush1.msra.mxu0 %v353
        %506 = vmatprep.subr.mxu0 %v356
        %507 = vmatpush1.msra.mxu0 %v355
        %508 = vmatprep.subr.mxu0 %v358
        %509 = vmatpush1.msra.mxu0 %v357
        %510 = vmatprep.subr.mxu0 %v360
        %511 = vmatpush1.msra.mxu0 %v359
        %512 = vmatprep.subr.mxu0 %v362
        %513 = vmatpush1.msra.mxu0 %v361
        %514 = vmatprep.subr.mxu0 %v364
        %515 = vmatpush1.msra.mxu0 %v363
        %516 = vmatprep.subr.mxu0 %v366
        %517 = vmatpush1.msra.mxu0 %v365
        %518 = vmatprep.subr.mxu0 %v368
        %519 = vmatpush1.msra.mxu0 %v367
        %520 = vmatprep.subr.mxu0 %v370
        %521 = vmatpush1.msra.mxu0 %v369
        %522 = vmatprep.subr.mxu0 %v372
        %523 = vmatpush1.msra.mxu0 %v371
        %524 = vmatprep.subr.mxu0 %v374
        %525 = vmatpush1.msra.mxu0 %v373
        %526 = vmatprep.subr.mxu0 %v376
        %527 = vmatpush1.msra.mxu0 %v375
        %528 = vmatprep.subr.mxu0 %v378
        %529 = vmatpush1.msra.mxu0 %v377
        %530 = vmatprep.subr.mxu0 %v380
        %531 = vmatpush1.msra.mxu0 %v379
        %532 = vmatprep.subr.mxu0 %v382
        %533 = vmatpush1.msra.mxu0 %v381
        %534 = vmatprep.subr.mxu0 %v384
        %535 = vmatpush1.msra.mxu0 %v383
        %536 = vmatprep.subr.mxu0 %v386
        %537 = vmatpush1.msra.mxu0 %v385
        %538 = vmatprep.subr.mxu0 %v388
        %539 = vmatpush1.msra.mxu0 %v387
        %540 = vmatprep.subr.mxu0 %v390
        %541 = vmatpush1.msra.mxu0 %v389
        %542 = vmatprep.subr.mxu0 %v392
        %543 = vmatpush1.msra.mxu0 %v391
        %544 = vmatprep.subr.mxu0 %v394
        %545 = vmatpush1.msra.mxu0 %v393
        %546 = vmatprep.subr.mxu0 %v396
        %547 = vmatpush1.msra.mxu0 %v395
        %548 = vmatprep.subr.mxu0 %v398
        %549 = vmatpush1.msra.mxu0 %v397
        %550 = vmatprep.subr.mxu0 %v400
        %551 = vmatpush1.msra.mxu0 %v399
        %552 = vmatprep.subr.mxu0 %v402
        %553 = vmatpush1.msra.mxu0 %v401
        %554 = vmatprep.subr.mxu0 %v404
        %555 = vmatpush1.msra.mxu0 %v403
        %556 = vmatprep.subr.mxu0 %v406
        %557 = vmatpush1.msra.mxu0 %v405
        %558 = vmatprep.subr.mxu0 %v408
        %559 = vmatpush1.msra.mxu0 %v407
        %560 = vmatprep.subr.mxu0 %v410
        %561 = vmatpush1.msra.mxu0 %v409
        %562 = vmatprep.subr.mxu0 %v412
        %563 = vmatpush1.msra.mxu0 %v411
        %564 = vmatprep.subr.mxu0 %v414
        %565 = vmatpush1.msra.mxu0 %v413
        %566 = vmatprep.subr.mxu0 %v416
        %567 = vmatpush1.msra.mxu0 %v415
        %568 = vmatprep.mubr.f32.mxu0 %v344
        %569 = vmatmul.mubr.f32.gmra.mrb[0].mxu0 %v343
        %v570 = vpop.f32.mrb[0].mxu0
        %v571 = vadd.f32 0.0, %v570
        %v572 = vpop.f32.mrb[0].mxu0
        %v573 = vadd.f32 0.0, %v572
        %574 = vmatprep.mubr.f32.mxu0 %v349
        %575 = vmatmul.mubr.f32.gmra.mrb[0].mxu0 %v348
        %v576 = vpop.f32.mrb[0].mxu0
        %v577 = vadd.f32 0.0, %v576
        %v578 = vpop.f32.mrb[0].mxu0
        %v579 = vadd.f32 0.0, %v578
        %580 = vdwg.mxu0
        %581 = vmatprep.subr.mxu0 %v418
        %582 = vmatpush1.msra.mxu0 %v417
        %583 = vmatprep.subr.mxu0 %v420
        %584 = vmatpush1.msra.mxu0 %v419
        %585 = vmatprep.subr.mxu0 %v422
        %586 = vmatpush1.msra.mxu0 %v421
        %587 = vmatprep.subr.mxu0 %v424
        %588 = vmatpush1.msra.mxu0 %v423
        %589 = vmatprep.subr.mxu0 %v426
        %590 = vmatpush1.msra.mxu0 %v425
        %591 = vmatprep.subr.mxu0 %v428
        %592 = vmatpush1.msra.mxu0 %v427
        %593 = vmatprep.subr.mxu0 %v430
        %594 = vmatpush1.msra.mxu0 %v429
        %595 = vmatprep.subr.mxu0 %v432
        %596 = vmatpush1.msra.mxu0 %v431
        %597 = vmatprep.subr.mxu0 %v434
        %598 = vmatpush1.msra.mxu0 %v433
        %599 = vmatprep.subr.mxu0 %v436
        %600 = vmatpush1.msra.mxu0 %v435
        %601 = vmatprep.subr.mxu0 %v438
        %602 = vmatpush1.msra.mxu0 %v437
        %603 = vmatprep.subr.mxu0 %v440
        %604 = vmatpush1.msra.mxu0 %v439
        %605 = vmatprep.subr.mxu0 %v442
        %606 = vmatpush1.msra.mxu0 %v441
        %607 = vmatprep.subr.mxu0 %v444
        %608 = vmatpush1.msra.mxu0 %v443
        %609 = vmatprep.subr.mxu0 %v446
        %610 = vmatpush1.msra.mxu0 %v445
        %611 = vmatprep.subr.mxu0 %v448
        %612 = vmatpush1.msra.mxu0 %v447
        %613 = vmatprep.subr.mxu0 %v450
        %614 = vmatpush1.msra.mxu0 %v449
        %615 = vmatprep.subr.mxu0 %v452
        %616 = vmatpush1.msra.mxu0 %v451
        %617 = vmatprep.subr.mxu0 %v454
        %618 = vmatpush1.msra.mxu0 %v453
        %619 = vmatprep.subr.mxu0 %v456
        %620 = vmatpush1.msra.mxu0 %v455
        %621 = vmatprep.subr.mxu0 %v458
        %622 = vmatpush1.msra.mxu0 %v457
        %623 = vmatprep.subr.mxu0 %v460
        %624 = vmatpush1.msra.mxu0 %v459
        %625 = vmatprep.subr.mxu0 %v462
        %626 = vmatpush1.msra.mxu0 %v461
        %627 = vmatprep.subr.mxu0 %v464
        %628 = vmatpush1.msra.mxu0 %v463
        %629 = vmatprep.subr.mxu0 %v466
        %630 = vmatpush1.msra.mxu0 %v465
        %631 = vmatprep.subr.mxu0 %v468
        %632 = vmatpush1.msra.mxu0 %v467
        %633 = vmatprep.subr.mxu0 %v470
        %634 = vmatpush1.msra.mxu0 %v469
        %635 = vmatprep.subr.mxu0 %v472
        %636 = vmatpush1.msra.mxu0 %v471
        %637 = vmatprep.subr.mxu0 %v474
        %638 = vmatpush1.msra.mxu0 %v473
        %639 = vmatprep.subr.mxu0 %v476
        %640 = vmatpush1.msra.mxu0 %v475
        %641 = vmatprep.subr.mxu0 %v478
        %642 = vmatpush1.msra.mxu0 %v477
        %643 = vmatprep.subr.mxu0 %v480
        %644 = vmatpush1.msra.mxu0 %v479
        %645 = vmatprep.mubr.f32.mxu0 %v346
        %646 = vmatmul.mubr.f32.gmra.mrb[0].mxu0 %v345
        %v647 = vpop.f32.mrb[0].mxu0
        %v648 = vadd.f32 %v571, %v647
        %v649 = vpop.f32.mrb[0].mxu0
        %v650 = vadd.f32 %v573, %v649
        %651 = vmatprep.mubr.f32.mxu0 %v351
        %652 = vmatmul.mubr.f32.gmra.mrb[0].mxu0 %v350
        %v653 = vpop.f32.mrb[0].mxu0
        %v654 = vadd.f32 %v577, %v653
        %v655 = vpop.f32.mrb[0].mxu0
        %v656 = vadd.f32 %v579, %v655
        %657 = vdwg.mxu0
        %658 = vmatprep.subr.mxu0 %v482
        %659 = vmatpush1.msra.mxu0 %v481
        %660 = vmatprep.subr.mxu0 %v484
        %661 = vmatpush1.msra.mxu0 %v483
        %662 = vmatprep.subr.mxu0 %v486
        %663 = vmatpush1.msra.mxu0 %v485
        %664 = vmatprep.subr.mxu0 %v488
        %665 = vmatpush1.msra.mxu0 %v487
        %666 = vmatprep.subr.mxu0 %v490
        %667 = vmatpush1.msra.mxu0 %v489
        %668 = vmatprep.subr.mxu0 %v492
        %669 = vmatpush1.msra.mxu0 %v491
        %670 = vmatprep.subr.mxu0 %v494
        %671 = vmatpush1.msra.mxu0 %v493
        %672 = vmatprep.subr.mxu0 %v496
        %673 = vmatpush1.msra.mxu0 %v495
        %674 = vmatprep.subr.mxu0 0.0
        %675 = vmatpush1.msra.mxu0 0.0
        %676 = vmatprep.subr.mxu0 0.0
        %677 = vmatpush1.msra.mxu0 0.0
        %678 = vmatprep.subr.mxu0 0.0
        %679 = vmatpush1.msra.mxu0 0.0
        %680 = vmatprep.subr.mxu0 0.0
        %681 = vmatpush1.msra.mxu0 0.0
        %682 = vmatprep.subr.mxu0 0.0
        %683 = vmatpush1.msra.mxu0 0.0
        %684 = vmatprep.subr.mxu0 0.0
        %685 = vmatpush1.msra.mxu0 0.0
        %686 = vmatprep.subr.mxu0 0.0
        %687 = vmatpush1.msra.mxu0 0.0
        %688 = vmatprep.subr.mxu0 0.0
        %689 = vmatpush1.msra.mxu0 0.0
        %690 = vmatprep.subr.mxu0 0.0
        %691 = vmatpush1.msra.mxu0 0.0
        %692 = vmatprep.subr.mxu0 0.0
        %693 = vmatpush1.msra.mxu0 0.0
        %694 = vmatprep.subr.mxu0 0.0
        %695 = vmatpush1.msra.mxu0 0.0
        %696 = vmatprep.subr.mxu0 0.0
        %697 = vmatpush1.msra.mxu0 0.0
        %698 = vmatprep.subr.mxu0 0.0
        %699 = vmatpush1.msra.mxu0 0.0
        %700 = vmatprep.subr.mxu0 0.0
        %701 = vmatpush1.msra.mxu0 0.0
        %702 = vmatprep.subr.mxu0 0.0
        %703 = vmatpush1.msra.mxu0 0.0
        %704 = vmatprep.subr.mxu0 0.0
        %705 = vmatpush1.msra.mxu0 0.0
        %706 = vmatprep.subr.mxu0 0.0
        %707 = vmatpush1.msra.mxu0 0.0
        %708 = vmatprep.subr.mxu0 0.0
        %709 = vmatpush1.msra.mxu0 0.0
        %710 = vmatprep.subr.mxu0 0.0
        %711 = vmatpush1.msra.mxu0 0.0
        %712 = vmatprep.subr.mxu0 0.0
        %713 = vmatpush1.msra.mxu0 0.0
        %714 = vmatprep.subr.mxu0 0.0
        %715 = vmatpush1.msra.mxu0 0.0
        %716 = vmatprep.subr.mxu0 0.0
        %717 = vmatpush1.msra.mxu0 0.0
        %718 = vmatprep.subr.mxu0 0.0
        %719 = vmatpush1.msra.mxu0 0.0
        %720 = vmatprep.subr.mxu0 0.0
        %721 = vmatpush1.msra.mxu0 0.0
        %722 = vmatprep.mubr.f32.mxu0 0.0
        %723 = vmatmul.mubr.f32.gmra.mrb[0].mxu0 %v499
        %v724 = vpop.f32.mrb[0].mxu0
        %v725 = vadd.f32 %v648, %v724
        %v726 = vpop.f32.mrb[0].mxu0
        %v727 = vadd.f32 %v650, %v726
        %728 = vmatprep.mubr.f32.mxu0 0.0
        %729 = vmatmul.mubr.f32.gmra.mrb[0].mxu0 %v502
        %v730 = vpop.f32.mrb[0].mxu0
        %v731 = vadd.f32 %v654, %v730
        %v732 = vpop.f32.mrb[0].mxu0
        %v733 = vadd.f32 %v656, %v732
        %734 = vdwg.mxu0
        %v735 = vadd.f32 %v339, %v725
        %v736 = vadd.f32 %v340, %v727
        %v737 = vadd.f32 %v341, %v731
        %v738 = vadd.f32 %v342, %v733
        %739 = vst [vmem:[#allocation2] sm:$0xff] %v735
        %740 = vst [vmem:[#allocation2 + $0x8] sm:$0xff] %v736
        %741 = vst [vmem:[#allocation2 + $0x10] sm:$0xff] %v737
        %742 = vst [vmem:[#allocation2 + $0x18] sm:$0xff] %v738
        // Predicated region
        $region45: #{custom_fe_forward.5} parent=31 // pred_check
          %p743 = pneg %p331
        $region46: #{custom_fe_forward.5} parent=31 // pred_check_branch
          %745 = sbr.rel (%p743) target = $region48
        $region47: #{custom_fe_forward.5} parent=31 // pred_region
          %v746 = vld [vmem:[#allocation2] sm:$0xff]
          %v747 = vld [vmem:[#allocation2 + $0x8] sm:$0xff]
          %v748 = vld [vmem:[#allocation2 + $0x10] sm:$0xff]
          %v749 = vld [vmem:[#allocation2 + $0x18] sm:$0xff]
          %v750 = vld [vmem:[#allocation5] sm:$0x3]
          %v752 = vlaneseq
          %v753 = vshrl.u32 %v752, 7
          %v754 = vsub.s32 0, %v753
          %v755 = vrot.slane %v750, %v754
          %v756 = vlaneseq
          %v757 = vshrl.u32 %v756, 7
          %v758 = vsub.s32 1, %v757
          %v759 = vrot.slane %v750, %v758
          %v762 = vadd.f32 %v746, %v755
          %v763 = vadd.f32 %v747, %v759
          %v764 = vadd.f32 %v748, %v755
          %v765 = vadd.f32 %v749, %v759
          %766 = vst [vmem:[%s316] sm:$0xff] %v762
          %767 = vst [vmem:[%s316 + $0x8] sm:$0xff] %v763
          %768 = vst [vmem:[%s316 + $0x10] sm:$0xff] %v764
          %769 = vst [vmem:[%s316 + $0x18] sm:$0xff] %v765
          %v770 = vmax.f32 %v762, 0.0
          %v771 = vmax.f32 %v763, 0.0
          %v772 = vmax.f32 %v764, 0.0
          %v773 = vmax.f32 %v765, 0.0
          %774 = vst [vmem:[%s328] sm:$0xff] %v770
          %775 = vst [vmem:[%s328 + $0x8] sm:$0xff] %v771
          %776 = vst [vmem:[%s328 + $0x10] sm:$0xff] %v772
          %777 = vst [vmem:[%s328 + $0x18] sm:$0xff] %v773
        $region48: #{custom_fe_forward.5} parent=31 // pred_fallthru
          _
        %s778 = smul.u32 2, %s23
        %s779 = smul.u32 2, %s24
        %p780 = scmp.lt.s32.totalorder %s778, 3
        %s781 = scalar_select %p780, %s778, 3
        %p782 = scmp.lt.s32.totalorder %s779, 1
        %s783 = scalar_select %p782, %s779, 1
        %s784 = smul.addr %s781, 2
        %s785 = sadd.s32 %s783, %s784
        %s786 = smul.addr %s785, 8
        %s787 = scalar_lea.vmem %s3, %s786
        %s788 = smul.u32 2, %s23
        %s789 = smul.u32 2, %s24
        %p790 = scmp.lt.s32.totalorder %s788, 3
        %s791 = scalar_select %p790, %s788, 3
        %p792 = scmp.lt.s32.totalorder %s789, 1
        %s793 = scalar_select %p792, %s789, 1
        %s794 = smul.addr %s791, 2
        %s795 = sadd.s32 %s793, %s794
        %s796 = smul.addr %s795, 8
        %s797 = scalar_lea.vmem %s4, %s796
        // Predicated region
        $region49: #{custom_fe_forward.5} parent=31 // pred_check
          %p798 = pneg %p139
        $region50: #{custom_fe_forward.5} parent=31 // pred_check_branch
          %800 = sbr.rel (%p798) target = $region52
        $region51: #{custom_fe_forward.5} parent=31 // pred_region
          %s801 = smul.u32 2, %s23
          %s802 = smul.u32 2, %s24
        $region52: #{custom_fe_forward.5} parent=31 // pred_fallthru
          _
        // Predicated region
        $region53: #{custom_fe_forward.5} parent=31 // pred_check
          %p803 = pneg %p167
        $region54: #{custom_fe_forward.5} parent=31 // pred_check_branch
          %805 = sbr.rel (%p803) target = $region56
        $region55: #{custom_fe_forward.5} parent=31 // pred_region
          %s806 = smul.u32 2, %s23
          %s807 = smul.u32 2, %s24
        $region56: #{custom_fe_forward.5} parent=31 // pred_fallthru
          _
      $region32: #{custom_fe_forward.5} parent=5 // pred_fallthru
        _
      %p808 = scmp.le.s32.totalorder 2, %s13
      // Predicated region
      $region57: #{custom_fe_forward.5} parent=5 // pred_check
        %p809 = pneg %p808
      $region58: #{custom_fe_forward.5} parent=5 // pred_check_branch
        %811 = sbr.rel (%p809) target = $region60
      $region59: #{custom_fe_forward.5} parent=5 // pred_region
        %s812 = ssub.s32 %s13, 2
        // Predicated region
        $region61: #{custom_fe_forward.5} parent=59 // pred_check
          %p813 = pneg %p145
        $region62: #{custom_fe_forward.5} parent=59 // pred_check_branch
          %815 = sbr.rel (%p813) target = $region64
        $region63: #{custom_fe_forward.5} parent=59 // pred_region
          %s816 = smul.u32 2, %s26
          %s817 = smul.u32 2, %s27
          %p818 = scmp.lt.s32.totalorder %s816, 3
          %s819 = scalar_select %p818, %s816, 3
          %p820 = scmp.lt.s32.totalorder %s817, 1
          %s821 = scalar_select %p820, %s817, 1
          %s822 = smul.addr %s819, 2
          %s823 = sadd.s32 %s821, %s822
          %s824 = smul.addr %s823, 8
          %s825 = scalar_lea.vmem %s3, %s824
        $region64: #{custom_fe_forward.5} parent=59 // pred_fallthru
          _
        // Predicated region
        $region65: #{custom_fe_forward.5} parent=59 // pred_check
          %p826 = pneg %p173
        $region66: #{custom_fe_forward.5} parent=59 // pred_check_branch
          %828 = sbr.rel (%p826) target = $region68
        $region67: #{custom_fe_forward.5} parent=59 // pred_region
          %s829 = smul.u32 2, %s26
          %s830 = smul.u32 2, %s27
          %p831 = scmp.lt.s32.totalorder %s829, 3
          %s832 = scalar_select %p831, %s829, 3
          %p833 = scmp.lt.s32.totalorder %s830, 1
          %s834 = scalar_select %p833, %s830, 1
          %s835 = smul.addr %s832, 2
          %s836 = sadd.s32 %s834, %s835
          %s837 = smul.addr %s836, 8
          %s838 = scalar_lea.vmem %s4, %s837
        $region68: #{custom_fe_forward.5} parent=59 // pred_fallthru
          _
      $region60: #{custom_fe_forward.5} parent=5 // pred_fallthru
        _
    $region6: #{custom_fe_forward.5} parent=1 // loop_footer
      %s17 = sadd.s32 1, %s13
    $region7: #{custom_fe_forward.5} parent=1 // loop_footer_branch
      %12 = sbr.rel target = $region3
    $region8: #{custom_fe_forward.5} parent=1 // loop_exit
      _
    %839 = vsyncpa [#allocation4], 1
    %s840 = scalar_lea.sflag [#allocation4], 1
    %841 = vsyncpa %s840, 1
    %842 = vsyncpa [#allocation6], 1

// kernel: custom_fe_forward.6
$region0: #{custom_fe_forward.6}
  #allocation0 [shape = 'u32[]', space=smem, size = 0x4, offset = 0x4, fixed_abs, tag = 'smem constant byte address 0x4 - core index']
  #allocation1 [shape = 'u32[144,128]{1,0:T(1,128)}', space=vmem, size = 0x12000, scoped, tag = 'internal scratch']
  #allocation2 [shape = 'f32[8,256]{1,0:T(8,128)}', space=vmem, size = 0x2000, scoped, tag = 'scratch operand']
  %s0 = inlined_call_operand.vmem [shape: f32[8,2304], index: 0, kind: input, shape index: {}]
  %s1 = inlined_call_operand.vmem [shape: f32[2304,512], index: 1, kind: input, shape index: {}]
  %s2 = inlined_call_operand.vmem [shape: f32[1,512], index: 2, kind: input, shape index: {}]
  %s3 = inlined_call_operand.vmem [shape: f32[8,512], index: 3, kind: output, shape index: {0}]
  %s4 = inlined_call_operand.vmem [shape: f32[8,512], index: 4, kind: output, shape index: {1}]
  %5 = xla_tuple %s3, %s4
  %s6 = sld [smem:[#allocation0]]
  $region84: #{custom_fe_forward.6} parent=0
    _
  %s8 = ssub.s32 1, %s6
  %s9 = scalar_select 0, %s8, %s6
  $region1: #{custom_fe_forward.6} parent=0
    #allocation3 [shape = 'u8[2359296]{0}', space=vmem, size = 0x240000, scoped, tag = 'input window, operand 1']
    loop: start=0, step=1, limit=6
    $region2: #{custom_fe_forward.6} parent=1 // loop_pre_header
      _
    $region3: #{custom_fe_forward.6} parent=1 // loop_header
      %s11 = sphi 0, %s15
      %p12 = scmp.ge.s32.totalorder %s11, 6
      %s18 = sphi 0, %s37
      %s19 = sphi 0, %s33
      %s20 = sphi 0, %s29
      %s21 = sphi 0, %s18
      %s22 = sphi 0, %s19
      %s23 = sphi 0, %s20
      %s24 = sphi 0, %s21
      %s25 = sphi 0, %s22
      %s26 = sphi 0, %s23
      %s42 = sphi 0, %s44
      %s45 = sphi 0, %s42
      %s46 = sphi 0, %s45
      %s62 = sphi 0, %s46
      %s70 = sphi 0, %s72
      %s73 = sphi 0, %s70
      %s74 = sphi 0, %s73
      %s90 = sphi 0, %s74
      %s96 = sphi 0, %s98
      %s99 = sphi 0, %s96
      %s100 = sphi 0, %s99
      %s116 = sphi 0, %s100
      %s124 = sphi 0, %s126
      %s127 = sphi 0, %s124
      %s128 = sphi 0, %s127
      %s144 = sphi 0, %s128
      %s152 = sphi 0, %s154
      %s155 = sphi 0, %s152
      %s156 = sphi 0, %s155
      %s172 = sphi 0, %s156
    $region4: #{custom_fe_forward.6} parent=1 // loop_header_branch
      %14 = sbr.rel (%p12) target = $region8
    $region5: #{custom_fe_forward.6} parent=1 // loop_body
      %s16 = ssub.s32 %s11, 1
      %s17 = ssub.s32 %s11, 2
      %s27 = sadd.s32 1, %s20
      %p28 = scmp.ge.s32.totalorder %s27, 2
      %s29 = scalar_select %p28, 0, %s27
      %s30 = sadd.s32 1, %s19
      %s31 = scalar_select %p28, %s30, %s19
      %p32 = scmp.ge.s32.totalorder %s31, 2
      %s33 = scalar_select %p32, 0, %s31
      %s34 = sadd.s32 1, %s18
      %s35 = scalar_select %p32, %s34, %s18
      %p36 = scmp.ge.s32.totalorder %s35, 1
      %s37 = scalar_select %p36, 0, %s35
      %s38 = ssub.s32 %s18, %s37
      %s39 = ssub.s32 %s20, %s29
      %s40 = sor.u32 %s38, %s39
      %p41 = scmp.eq.s32.totalorder %s40, 0
      %s43 = sadd.s32 %s42, 1
      %s44 = scalar_select %p41, %s42, %s43
      %p47 = pneg %p41
      %p48 = scmp.eq.s32.totalorder %s11, 3
      %p49 = por %p47, %p48
      %p50 = scmp.ne.s32.totalorder %s42, %s45
      %p51 = scmp.eq.s32.totalorder %s11, 0
      %p52 = por %p50, %p51
      %p53 = scmp.ne.s32.totalorder %s42, %s45
      %p54 = scmp.eq.s32.totalorder %s16, 3
      %p55 = por %p53, %p54
      %p56 = scmp.ne.s32.totalorder %s45, %s46
      %p57 = scmp.eq.s32.totalorder %s16, 0
      %p58 = por %p56, %p57
      %p59 = scmp.ne.s32.totalorder %s45, %s46
      %p60 = scmp.eq.s32.totalorder %s17, 3
      %p61 = por %p59, %p60
      %p63 = scmp.ne.s32.totalorder %s46, %s62
      %p64 = scmp.eq.s32.totalorder %s17, 0
      %p65 = por %p63, %p64
      %s66 = ssub.s32 %s20, %s29
      %s67 = ssub.s32 %s19, %s33
      %s68 = sor.u32 %s66, %s67
      %p69 = scmp.eq.s32.totalorder %s68, 0
      %s71 = sadd.s32 %s70, 1
      %s72 = scalar_select %p69, %s70, %s71
      %p75 = pneg %p69
      %p76 = scmp.eq.s32.totalorder %s11, 3
      %p77 = por %p75, %p76
      %p78 = scmp.ne.s32.totalorder %s70, %s73
      %p79 = scmp.eq.s32.totalorder %s11, 0
      %p80 = por %p78, %p79
      %p81 = scmp.ne.s32.totalorder %s70, %s73
      %p82 = scmp.eq.s32.totalorder %s16, 3
      %p83 = por %p81, %p82
      %p84 = scmp.ne.s32.totalorder %s73, %s74
      %p85 = scmp.eq.s32.totalorder %s16, 0
      %p86 = por %p84, %p85
      %p87 = scmp.ne.s32.totalorder %s73, %s74
      %p88 = scmp.eq.s32.totalorder %s17, 3
      %p89 = por %p87, %p88
      %p91 = scmp.ne.s32.totalorder %s74, %s90
      %p92 = scmp.eq.s32.totalorder %s17, 0
      %p93 = por %p91, %p92
      %s94 = ssub.s32 %s19, %s33
      %p95 = scmp.eq.s32.totalorder %s94, 0
      %s97 = sadd.s32 %s96, 1
      %s98 = scalar_select %p95, %s96, %s97
      %p101 = pneg %p95
      %p102 = scmp.eq.s32.totalorder %s11, 3
      %p103 = por %p101, %p102
      %p104 = scmp.ne.s32.totalorder %s96, %s99
      %p105 = scmp.eq.s32.totalorder %s11, 0
      %p106 = por %p104, %p105
      %p107 = scmp.ne.s32.totalorder %s96, %s99
      %p108 = scmp.eq.s32.totalorder %s16, 3
      %p109 = por %p107, %p108
      %p110 = scmp.ne.s32.totalorder %s99, %s100
      %p111 = scmp.eq.s32.totalorder %s16, 0
      %p112 = por %p110, %p111
      %p113 = scmp.ne.s32.totalorder %s99, %s100
      %p114 = scmp.eq.s32.totalorder %s17, 3
      %p115 = por %p113, %p114
      %p117 = scmp.ne.s32.totalorder %s100, %s116
      %p118 = scmp.eq.s32.totalorder %s17, 0
      %p119 = por %p117, %p118
      %s120 = ssub.s32 %s18, %s37
      %s121 = ssub.s32 %s19, %s33
      %s122 = sor.u32 %s120, %s121
      %p123 = scmp.eq.s32.totalorder %s122, 0
      %s125 = sadd.s32 %s124, 1
      %s126 = scalar_select %p123, %s124, %s125
      %p129 = pneg %p123
      %p130 = scmp.eq.s32.totalorder %s11, 3
      %p131 = por %p129, %p130
      %p132 = scmp.ne.s32.totalorder %s124, %s127
      %p133 = scmp.eq.s32.totalorder %s11, 0
      %p134 = por %p132, %p133
      %p135 = scmp.ne.s32.totalorder %s124, %s127
      %p136 = scmp.eq.s32.totalorder %s16, 3
      %p137 = por %p135, %p136
      %p138 = scmp.ne.s32.totalorder %s127, %s128
      %p139 = scmp.eq.s32.totalorder %s16, 0
      %p140 = por %p138, %p139
      %p141 = scmp.ne.s32.totalorder %s127, %s128
      %p142 = scmp.eq.s32.totalorder %s17, 3
      %p143 = por %p141, %p142
      %p145 = scmp.ne.s32.totalorder %s128, %s144
      %p146 = scmp.eq.s32.totalorder %s17, 0
      %p147 = por %p145, %p146
      %s148 = ssub.s32 %s18, %s37
      %s149 = ssub.s32 %s19, %s33
      %s150 = sor.u32 %s148, %s149
      %p151 = scmp.eq.s32.totalorder %s150, 0
      %s153 = sadd.s32 %s152, 1
      %s154 = scalar_select %p151, %s152, %s153
      %p157 = pneg %p151
      %p158 = scmp.eq.s32.totalorder %s11, 3
      %p159 = por %p157, %p158
      %p160 = scmp.ne.s32.totalorder %s152, %s155
      %p161 = scmp.eq.s32.totalorder %s11, 0
      %p162 = por %p160, %p161
      %p163 = scmp.ne.s32.totalorder %s152, %s155
      %p164 = scmp.eq.s32.totalorder %s16, 3
      %p165 = por %p163, %p164
      %p166 = scmp.ne.s32.totalorder %s155, %s156
      %p167 = scmp.eq.s32.totalorder %s16, 0
      %p168 = por %p166, %p167
      %p169 = scmp.ne.s32.totalorder %s155, %s156
      %p170 = scmp.eq.s32.totalorder %s17, 3
      %p171 = por %p169, %p170
      %p173 = scmp.ne.s32.totalorder %s156, %s172
      %p174 = scmp.eq.s32.totalorder %s17, 0
      %p175 = por %p173, %p174
      %p176 = scmp.le.s32.totalorder 1, %s11
      %p177 = scmp.lt.s32.totalorder %s11, 5
      %p178 = pnand %p176, %p177
      %p179 = pneg %p178
      // Predicated region
      $region9: #{custom_fe_forward.6} parent=5 // pred_check
        _
      $region10: #{custom_fe_forward.6} parent=5 // pred_check_branch
        %181 = sbr.rel (%p178) target = $region12
      $region11: #{custom_fe_forward.6} parent=5 // pred_region
        %s182 = ssub.s32 %s11, 1
      $region12: #{custom_fe_forward.6} parent=5 // pred_fallthru
        _
      %p183 = scmp.lt.s32.totalorder %s11, 4
      // Predicated region
      $region13: #{custom_fe_forward.6} parent=5 // pred_check
        %p184 = pneg %p183
      $region14: #{custom_fe_forward.6} parent=5 // pred_check_branch
        %186 = sbr.rel (%p184) target = $region16
      $region15: #{custom_fe_forward.6} parent=5 // pred_region
        // Predicated region
        $region17: #{custom_fe_forward.6} parent=15 // pred_check
          %p187 = pneg %p52
        $region18: #{custom_fe_forward.6} parent=15 // pred_check_branch
          %189 = sbr.rel (%p187) target = $region20
        $region19: #{custom_fe_forward.6} parent=15 // pred_region
          %s190 = smul.u32 9, %s20
          %p191 = scmp.lt.s32.totalorder %s18, 0
          %s192 = scalar_select %p191, %s18, 0
          %p193 = scmp.lt.s32.totalorder %s190, 17
          %s194 = scalar_select %p193, %s190, 17
          %s195 = smul.addr %s192, 18
          %s196 = sadd.s32 %s194, %s195
          %s197 = smul.addr %s196, 8
          %s198 = scalar_lea.vmem %s0, %s197
          %s199 = smul.u32 9, %s20
        $region20: #{custom_fe_forward.6} parent=15 // pred_fallthru
          _
        // Predicated region
        $region21: #{custom_fe_forward.6} parent=15 // pred_check
          %p200 = pneg %p80
        $region22: #{custom_fe_forward.6} parent=15 // pred_check_branch
          %202 = sbr.rel (%p200) target = $region24
        $region23: #{custom_fe_forward.6} parent=15 // pred_region
          %s203 = sand.u32 %s70, 1
          %s204 = sand.u32 %s70, 1
          %s205 = smul.addr %s204, 2304
          %s206 = scalar_lea.vmem [#allocation3], %s205
          %s207 = smul.u32 144, %s20
          %s208 = smul.u32 2, %s19
          %s209 = smul.addr %s207, 4
          %s210 = sadd.s32 %s208, %s209
          %s211 = smul.addr %s210, 8
          %s212 = scalar_lea.vmem %s1, %s211
          // Predicated region
          $region25: #{custom_fe_forward.6} parent=23 // pred_check
            _
          $region26: #{custom_fe_forward.6} parent=23 // pred_check_branch
            %214 = sbr.rel (0) target = $region28
          $region27: #{custom_fe_forward.6} parent=23 // pred_region
            // Predicated region
            $region29: #{custom_fe_forward.6} parent=27 // pred_check
              _
            $region30: #{custom_fe_forward.6} parent=27 // pred_check_branch
              %216 = sbr.rel (0) target = $region32
            $region31: #{custom_fe_forward.6} parent=27 // pred_region
              loop: start=0, step=1, limit=1
              $region33: #{custom_fe_forward.6} parent=31 // loop_pre_header
                _
              $region34: #{custom_fe_forward.6} parent=31 // loop_header
                %s218 = sphi 0, %s222
                %p219 = scmp.ge.s32.totalorder %s218, 1
                %s223 = sphi %s212, %s212
                %s224 = sphi %s206, %s206
              $region35: #{custom_fe_forward.6} parent=31 // loop_header_branch
                %221 = sbr.rel (%p219) target = $region39
              $region36: #{custom_fe_forward.6} parent=31 // loop_body
                %v225 = vld [vmem:[%s223] sm:$0xff]
                %226 = vst [vmem:[%s224] sm:$0xff] %v225
                %v227 = vld [vmem:[%s223 + $0x8] sm:$0xff]
                %228 = vst [vmem:[%s224 + $0x8] sm:$0xff] %v227
                %v229 = vld [vmem:[%s223 + $0x20] sm:$0xff]
                %230 = vst [vmem:[%s224 + $0x10] sm:$0xff] %v229
                %v231 = vld [vmem:[%s223 + $0x28] sm:$0xff]
                %232 = vst [vmem:[%s224 + $0x18] sm:$0xff] %v231
                %v233 = vld [vmem:[%s223 + $0x40] sm:$0xff]
                %234 = vst [vmem:[%s224 + $0x20] sm:$0xff] %v233
                %v235 = vld [vmem:[%s223 + $0x48] sm:$0xff]
                %236 = vst [vmem:[%s224 + $0x28] sm:$0xff] %v235
                %v237 = vld [vmem:[%s223 + $0x60] sm:$0xff]
                %238 = vst [vmem:[%s224 + $0x30] sm:$0xff] %v237
                %v239 = vld [vmem:[%s223 + $0x68] sm:$0xff]
                %240 = vst [vmem:[%s224 + $0x38] sm:$0xff] %v239
                %v241 = vld [vmem:[%s223 + $0x80] sm:$0xff]
                %242 = vst [vmem:[%s224 + $0x40] sm:$0xff] %v241
                %v243 = vld [vmem:[%s223 + $0x88] sm:$0xff]
                %244 = vst [vmem:[%s224 + $0x48] sm:$0xff] %v243
                %v245 = vld [vmem:[%s223 + $0xa0] sm:$0xff]
                %246 = vst [vmem:[%s224 + $0x50] sm:$0xff] %v245
                %v247 = vld [vmem:[%s223 + $0xa8] sm:$0xff]
                %248 = vst [vmem:[%s224 + $0x58] sm:$0xff] %v247
                %v249 = vld [vmem:[%s223 + $0xc0] sm:$0xff]
                %250 = vst [vmem:[%s224 + $0x60] sm:$0xff] %v249
                %v251 = vld [vmem:[%s223 + $0xc8] sm:$0xff]
                %252 = vst [vmem:[%s224 + $0x68] sm:$0xff] %v251
                %v253 = vld [vmem:[%s223 + $0xe0] sm:$0xff]
                %254 = vst [vmem:[%s224 + $0x70] sm:$0xff] %v253
                %v255 = vld [vmem:[%s223 + $0xe8] sm:$0xff]
                %256 = vst [vmem:[%s224 + $0x78] sm:$0xff] %v255
                %v257 = vld [vmem:[%s223 + $0x100] sm:$0xff]
                %258 = vst [vmem:[%s224 + $0x80] sm:$0xff] %v257
                %v259 = vld [vmem:[%s223 + $0x108] sm:$0xff]
                %260 = vst [vmem:[%s224 + $0x88] sm:$0xff] %v259
                %v261 = vld [vmem:[%s223 + $0x120] sm:$0xff]
                %262 = vst [vmem:[%s224 + $0x90] sm:$0xff] %v261
                %v263 = vld [vmem:[%s223 + $0x128] sm:$0xff]
                %264 = vst [vmem:[%s224 + $0x98] sm:$0xff] %v263
                %v265 = vld [vmem:[%s223 + $0x140] sm:$0xff]
                %266 = vst [vmem:[%s224 + $0xa0] sm:$0xff] %v265
                %v267 = vld [vmem:[%s223 + $0x148] sm:$0xff]
                %268 = vst [vmem:[%s224 + $0xa8] sm:$0xff] %v267
                %v269 = vld [vmem:[%s223 + $0x160] sm:$0xff]
                %270 = vst [vmem:[%s224 + $0xb0] sm:$0xff] %v269
                %v271 = vld [vmem:[%s223 + $0x168] sm:$0xff]
                %272 = vst [vmem:[%s224 + $0xb8] sm:$0xff] %v271
                %v273 = vld [vmem:[%s223 + $0x180] sm:$0xff]
                %274 = vst [vmem:[%s224 + $0xc0] sm:$0xff] %v273
                %v275 = vld [vmem:[%s223 + $0x188] sm:$0xff]
                %276 = vst [vmem:[%s224 + $0xc8] sm:$0xff] %v275
                %v277 = vld [vmem:[%s223 + $0x1a0] sm:$0xff]
                %278 = vst [vmem:[%s224 + $0xd0] sm:$0xff] %v277
                %v279 = vld [vmem:[%s223 + $0x1a8] sm:$0xff]
                %280 = vst [vmem:[%s224 + $0xd8] sm:$0xff] %v279
                %v281 = vld [vmem:[%s223 + $0x1c0] sm:$0xff]
                %282 = vst [vmem:[%s224 + $0xe0] sm:$0xff] %v281
                %v283 = vld [vmem:[%s223 + $0x1c8] sm:$0xff]
                %284 = vst [vmem:[%s224 + $0xe8] sm:$0xff] %v283
                %v285 = vld [vmem:[%s223 + $0x1e0] sm:$0xff]
                %286 = vst [vmem:[%s224 + $0xf0] sm:$0xff] %v285
                %v287 = vld [vmem:[%s223 + $0x1e8] sm:$0xff]
                %288 = vst [vmem:[%s224 + $0xf8] sm:$0xff] %v287
                %v289 = vld [vmem:[%s223 + $0x200] sm:$0xff]
                %290 = vst [vmem:[%s224 + $0x100] sm:$0xff] %v289
                %v291 = vld [vmem:[%s223 + $0x208] sm:$0xff]
                %292 = vst [vmem:[%s224 + $0x108] sm:$0xff] %v291
                %v293 = vld [vmem:[%s223 + $0x220] sm:$0xff]
                %294 = vst [vmem:[%s224 + $0x110] sm:$0xff] %v293
                %v295 = vld [vmem:[%s223 + $0x228] sm:$0xff]
                %296 = vst [vmem:[%s224 + $0x118] sm:$0xff] %v295
                %v297 = vld [vmem:[%s223 + $0x240] sm:$0xff]
                %298 = vst [vmem:[%s224 + $0x120] sm:$0xff] %v297
                %v299 = vld [vmem:[%s223 + $0x248] sm:$0xff]
                %300 = vst [vmem:[%s224 + $0x128] sm:$0xff] %v299
                %v301 = vld [vmem:[%s223 + $0x260] sm:$0xff]
                %302 = vst [vmem:[%s224 + $0x130] sm:$0xff] %v301
                %v303 = vld [vmem:[%s223 + $0x268] sm:$0xff]
                %304 = vst [vmem:[%s224 + $0x138] sm:$0xff] %v303
                %v305 = vld [vmem:[%s223 + $0x280] sm:$0xff]
                %306 = vst [vmem:[%s224 + $0x140] sm:$0xff] %v305
                %v307 = vld [vmem:[%s223 + $0x288] sm:$0xff]
                %308 = vst [vmem:[%s224 + $0x148] sm:$0xff] %v307
                %v309 = vld [vmem:[%s223 + $0x2a0] sm:$0xff]
                %310 = vst [vmem:[%s224 + $0x150] sm:$0xff] %v309
                %v311 = vld [vmem:[%s223 + $0x2a8] sm:$0xff]
                %312 = vst [vmem:[%s224 + $0x158] sm:$0xff] %v311
                %v313 = vld [vmem:[%s223 + $0x2c0] sm:$0xff]
                %314 = vst [vmem:[%s224 + $0x160] sm:$0xff] %v313
                %v315 = vld [vmem:[%s223 + $0x2c8] sm:$0xff]
                %316 = vst [vmem:[%s224 + $0x168] sm:$0xff] %v315
                %v317 = vld [vmem:[%s223 + $0x2e0] sm:$0xff]
                %318 = vst [vmem:[%s224 + $0x170] sm:$0xff] %v317
                %v319 = vld [vmem:[%s223 + $0x2e8] sm:$0xff]
                %320 = vst [vmem:[%s224 + $0x178] sm:$0xff] %v319
                %v321 = vld [vmem:[%s223 + $0x300] sm:$0xff]
                %322 = vst [vmem:[%s224 + $0x180] sm:$0xff] %v321
                %v323 = vld [vmem:[%s223 + $0x308] sm:$0xff]
                %324 = vst [vmem:[%s224 + $0x188] sm:$0xff] %v323
                %v325 = vld [vmem:[%s223 + $0x320] sm:$0xff]
                %326 = vst [vmem:[%s224 + $0x190] sm:$0xff] %v325
                %v327 = vld [vmem:[%s223 + $0x328] sm:$0xff]
                %328 = vst [vmem:[%s224 + $0x198] sm:$0xff] %v327
                %v329 = vld [vmem:[%s223 + $0x340] sm:$0xff]
                %330 = vst [vmem:[%s224 + $0x1a0] sm:$0xff] %v329
                %v331 = vld [vmem:[%s223 + $0x348] sm:$0xff]
                %332 = vst [vmem:[%s224 + $0x1a8] sm:$0xff] %v331
                %v333 = vld [vmem:[%s223 + $0x360] sm:$0xff]
                %334 = vst [vmem:[%s224 + $0x1b0] sm:$0xff] %v333
                %v335 = vld [vmem:[%s223 + $0x368] sm:$0xff]
                %336 = vst [vmem:[%s224 + $0x1b8] sm:$0xff] %v335
                %v337 = vld [vmem:[%s223 + $0x380] sm:$0xff]
                %338 = vst [vmem:[%s224 + $0x1c0] sm:$0xff] %v337
                %v339 = vld [vmem:[%s223 + $0x388] sm:$0xff]
                %340 = vst [vmem:[%s224 + $0x1c8] sm:$0xff] %v339
                %v341 = vld [vmem:[%s223 + $0x3a0] sm:$0xff]
                %342 = vst [vmem:[%s224 + $0x1d0] sm:$0xff] %v341
                %v343 = vld [vmem:[%s223 + $0x3a8] sm:$0xff]
                %344 = vst [vmem:[%s224 + $0x1d8] sm:$0xff] %v343
                %v345 = vld [vmem:[%s223 + $0x3c0] sm:$0xff]
                %346 = vst [vmem:[%s224 + $0x1e0] sm:$0xff] %v345
                %v347 = vld [vmem:[%s223 + $0x3c8] sm:$0xff]
                %348 = vst [vmem:[%s224 + $0x1e8] sm:$0xff] %v347
                %v349 = vld [vmem:[%s223 + $0x3e0] sm:$0xff]
                %350 = vst [vmem:[%s224 + $0x1f0] sm:$0xff] %v349
                %v351 = vld [vmem:[%s223 + $0x3e8] sm:$0xff]
                %352 = vst [vmem:[%s224 + $0x1f8] sm:$0xff] %v351
                %v353 = vld [vmem:[%s223 + $0x400] sm:$0xff]
                %354 = vst [vmem:[%s224 + $0x200] sm:$0xff] %v353
                %v355 = vld [vmem:[%s223 + $0x408] sm:$0xff]
                %356 = vst [vmem:[%s224 + $0x208] sm:$0xff] %v355
                %v357 = vld [vmem:[%s223 + $0x420] sm:$0xff]
                %358 = vst [vmem:[%s224 + $0x210] sm:$0xff] %v357
                %v359 = vld [vmem:[%s223 + $0x428] sm:$0xff]
                %360 = vst [vmem:[%s224 + $0x218] sm:$0xff] %v359
                %v361 = vld [vmem:[%s223 + $0x440] sm:$0xff]
                %362 = vst [vmem:[%s224 + $0x220] sm:$0xff] %v361
                %v363 = vld [vmem:[%s223 + $0x448] sm:$0xff]
                %364 = vst [vmem:[%s224 + $0x228] sm:$0xff] %v363
                %v365 = vld [vmem:[%s223 + $0x460] sm:$0xff]
                %366 = vst [vmem:[%s224 + $0x230] sm:$0xff] %v365
                %v367 = vld [vmem:[%s223 + $0x468] sm:$0xff]
                %368 = vst [vmem:[%s224 + $0x238] sm:$0xff] %v367
                %v369 = vld [vmem:[%s223 + $0x480] sm:$0xff]
                %370 = vst [vmem:[%s224 + $0x240] sm:$0xff] %v369
                %v371 = vld [vmem:[%s223 + $0x488] sm:$0xff]
                %372 = vst [vmem:[%s224 + $0x248] sm:$0xff] %v371
                %v373 = vld [vmem:[%s223 + $0x4a0] sm:$0xff]
                %374 = vst [vmem:[%s224 + $0x250] sm:$0xff] %v373
                %v375 = vld [vmem:[%s223 + $0x4a8] sm:$0xff]
                %376 = vst [vmem:[%s224 + $0x258] sm:$0xff] %v375
                %v377 = vld [vmem:[%s223 + $0x4c0] sm:$0xff]
                %378 = vst [vmem:[%s224 + $0x260] sm:$0xff] %v377
                %v379 = vld [vmem:[%s223 + $0x4c8] sm:$0xff]
                %380 = vst [vmem:[%s224 + $0x268] sm:$0xff] %v379
                %v381 = vld [vmem:[%s223 + $0x4e0] sm:$0xff]
                %382 = vst [vmem:[%s224 + $0x270] sm:$0xff] %v381
                %v383 = vld [vmem:[%s223 + $0x4e8] sm:$0xff]
                %384 = vst [vmem:[%s224 + $0x278] sm:$0xff] %v383
                %v385 = vld [vmem:[%s223 + $0x500] sm:$0xff]
                %386 = vst [vmem:[%s224 + $0x280] sm:$0xff] %v385
                %v387 = vld [vmem:[%s223 + $0x508] sm:$0xff]
                %388 = vst [vmem:[%s224 + $0x288] sm:$0xff] %v387
                %v389 = vld [vmem:[%s223 + $0x520] sm:$0xff]
                %390 = vst [vmem:[%s224 + $0x290] sm:$0xff] %v389
                %v391 = vld [vmem:[%s223 + $0x528] sm:$0xff]
                %392 = vst [vmem:[%s224 + $0x298] sm:$0xff] %v391
                %v393 = vld [vmem:[%s223 + $0x540] sm:$0xff]
                %394 = vst [vmem:[%s224 + $0x2a0] sm:$0xff] %v393
                %v395 = vld [vmem:[%s223 + $0x548] sm:$0xff]
                %396 = vst [vmem:[%s224 + $0x2a8] sm:$0xff] %v395
                %v397 = vld [vmem:[%s223 + $0x560] sm:$0xff]
                %398 = vst [vmem:[%s224 + $0x2b0] sm:$0xff] %v397
                %v399 = vld [vmem:[%s223 + $0x568] sm:$0xff]
                %400 = vst [vmem:[%s224 + $0x2b8] sm:$0xff] %v399
                %v401 = vld [vmem:[%s223 + $0x580] sm:$0xff]
                %402 = vst [vmem:[%s224 + $0x2c0] sm:$0xff] %v401
                %v403 = vld [vmem:[%s223 + $0x588] sm:$0xff]
                %404 = vst [vmem:[%s224 + $0x2c8] sm:$0xff] %v403
                %v405 = vld [vmem:[%s223 + $0x5a0] sm:$0xff]
                %406 = vst [vmem:[%s224 + $0x2d0] sm:$0xff] %v405
                %v407 = vld [vmem:[%s223 + $0x5a8] sm:$0xff]
                %408 = vst [vmem:[%s224 + $0x2d8] sm:$0xff] %v407
                %v409 = vld [vmem:[%s223 + $0x5c0] sm:$0xff]
                %410 = vst [vmem:[%s224 + $0x2e0] sm:$0xff] %v409
                %v411 = vld [vmem:[%s223 + $0x5c8] sm:$0xff]
                %412 = vst [vmem:[%s224 + $0x2e8] sm:$0xff] %v411
                %v413 = vld [vmem:[%s223 + $0x5e0] sm:$0xff]
                %414 = vst [vmem:[%s224 + $0x2f0] sm:$0xff] %v413
                %v415 = vld [vmem:[%s223 + $0x5e8] sm:$0xff]
                %416 = vst [vmem:[%s224 + $0x2f8] sm:$0xff] %v415
                %v417 = vld [vmem:[%s223 + $0x600] sm:$0xff]
                %418 = vst [vmem:[%s224 + $0x300] sm:$0xff] %v417
                %v419 = vld [vmem:[%s223 + $0x608] sm:$0xff]
                %420 = vst [vmem:[%s224 + $0x308] sm:$0xff] %v419
                %v421 = vld [vmem:[%s223 + $0x620] sm:$0xff]
                %422 = vst [vmem:[%s224 + $0x310] sm:$0xff] %v421
                %v423 = vld [vmem:[%s223 + $0x628] sm:$0xff]
                %424 = vst [vmem:[%s224 + $0x318] sm:$0xff] %v423
                %v425 = vld [vmem:[%s223 + $0x640] sm:$0xff]
                %426 = vst [vmem:[%s224 + $0x320] sm:$0xff] %v425
                %v427 = vld [vmem:[%s223 + $0x648] sm:$0xff]
                %428 = vst [vmem:[%s224 + $0x328] sm:$0xff] %v427
                %v429 = vld [vmem:[%s223 + $0x660] sm:$0xff]
                %430 = vst [vmem:[%s224 + $0x330] sm:$0xff] %v429
                %v431 = vld [vmem:[%s223 + $0x668] sm:$0xff]
                %432 = vst [vmem:[%s224 + $0x338] sm:$0xff] %v431
                %v433 = vld [vmem:[%s223 + $0x680] sm:$0xff]
                %434 = vst [vmem:[%s224 + $0x340] sm:$0xff] %v433
                %v435 = vld [vmem:[%s223 + $0x688] sm:$0xff]
                %436 = vst [vmem:[%s224 + $0x348] sm:$0xff] %v435
                %v437 = vld [vmem:[%s223 + $0x6a0] sm:$0xff]
                %438 = vst [vmem:[%s224 + $0x350] sm:$0xff] %v437
                %v439 = vld [vmem:[%s223 + $0x6a8] sm:$0xff]
                %440 = vst [vmem:[%s224 + $0x358] sm:$0xff] %v439
                %v441 = vld [vmem:[%s223 + $0x6c0] sm:$0xff]
                %442 = vst [vmem:[%s224 + $0x360] sm:$0xff] %v441
                %v443 = vld [vmem:[%s223 + $0x6c8] sm:$0xff]
                %444 = vst [vmem:[%s224 + $0x368] sm:$0xff] %v443
                %v445 = vld [vmem:[%s223 + $0x6e0] sm:$0xff]
                %446 = vst [vmem:[%s224 + $0x370] sm:$0xff] %v445
                %v447 = vld [vmem:[%s223 + $0x6e8] sm:$0xff]
                %448 = vst [vmem:[%s224 + $0x378] sm:$0xff] %v447
                %v449 = vld [vmem:[%s223 + $0x700] sm:$0xff]
                %450 = vst [vmem:[%s224 + $0x380] sm:$0xff] %v449
                %v451 = vld [vmem:[%s223 + $0x708] sm:$0xff]
                %452 = vst [vmem:[%s224 + $0x388] sm:$0xff] %v451
                %v453 = vld [vmem:[%s223 + $0x720] sm:$0xff]
                %454 = vst [vmem:[%s224 + $0x390] sm:$0xff] %v453
                %v455 = vld [vmem:[%s223 + $0x728] sm:$0xff]
                %456 = vst [vmem:[%s224 + $0x398] sm:$0xff] %v455
                %v457 = vld [vmem:[%s223 + $0x740] sm:$0xff]
                %458 = vst [vmem:[%s224 + $0x3a0] sm:$0xff] %v457
                %v459 = vld [vmem:[%s223 + $0x748] sm:$0xff]
                %460 = vst [vmem:[%s224 + $0x3a8] sm:$0xff] %v459
                %v461 = vld [vmem:[%s223 + $0x760] sm:$0xff]
                %462 = vst [vmem:[%s224 + $0x3b0] sm:$0xff] %v461
                %v463 = vld [vmem:[%s223 + $0x768] sm:$0xff]
                %464 = vst [vmem:[%s224 + $0x3b8] sm:$0xff] %v463
                %v465 = vld [vmem:[%s223 + $0x780] sm:$0xff]
                %466 = vst [vmem:[%s224 + $0x3c0] sm:$0xff] %v465
                %v467 = vld [vmem:[%s223 + $0x788] sm:$0xff]
                %468 = vst [vmem:[%s224 + $0x3c8] sm:$0xff] %v467
                %v469 = vld [vmem:[%s223 + $0x7a0] sm:$0xff]
                %470 = vst [vmem:[%s224 + $0x3d0] sm:$0xff] %v469
                %v471 = vld [vmem:[%s223 + $0x7a8] sm:$0xff]
                %472 = vst [vmem:[%s224 + $0x3d8] sm:$0xff] %v471
                %v473 = vld [vmem:[%s223 + $0x7c0] sm:$0xff]
                %474 = vst [vmem:[%s224 + $0x3e0] sm:$0xff] %v473
                %v475 = vld [vmem:[%s223 + $0x7c8] sm:$0xff]
                %476 = vst [vmem:[%s224 + $0x3e8] sm:$0xff] %v475
                %v477 = vld [vmem:[%s223 + $0x7e0] sm:$0xff]
                %478 = vst [vmem:[%s224 + $0x3f0] sm:$0xff] %v477
                %v479 = vld [vmem:[%s223 + $0x7e8] sm:$0xff]
                %480 = vst [vmem:[%s224 + $0x3f8] sm:$0xff] %v479
                %v481 = vld [vmem:[%s223 + $0x800] sm:$0xff]
                %482 = vst [vmem:[%s224 + $0x400] sm:$0xff] %v481
                %v483 = vld [vmem:[%s223 + $0x808] sm:$0xff]
                %484 = vst [vmem:[%s224 + $0x408] sm:$0xff] %v483
                %v485 = vld [vmem:[%s223 + $0x820] sm:$0xff]
                %486 = vst [vmem:[%s224 + $0x410] sm:$0xff] %v485
                %v487 = vld [vmem:[%s223 + $0x828] sm:$0xff]
                %488 = vst [vmem:[%s224 + $0x418] sm:$0xff] %v487
                %v489 = vld [vmem:[%s223 + $0x840] sm:$0xff]
                %490 = vst [vmem:[%s224 + $0x420] sm:$0xff] %v489
                %v491 = vld [vmem:[%s223 + $0x848] sm:$0xff]
                %492 = vst [vmem:[%s224 + $0x428] sm:$0xff] %v491
                %v493 = vld [vmem:[%s223 + $0x860] sm:$0xff]
                %494 = vst [vmem:[%s224 + $0x430] sm:$0xff] %v493
                %v495 = vld [vmem:[%s223 + $0x868] sm:$0xff]
                %496 = vst [vmem:[%s224 + $0x438] sm:$0xff] %v495
                %v497 = vld [vmem:[%s223 + $0x880] sm:$0xff]
                %498 = vst [vmem:[%s224 + $0x440] sm:$0xff] %v497
                %v499 = vld [vmem:[%s223 + $0x888] sm:$0xff]
                %500 = vst [vmem:[%s224 + $0x448] sm:$0xff] %v499
                %v501 = vld [vmem:[%s223 + $0x8a0] sm:$0xff]
                %502 = vst [vmem:[%s224 + $0x450] sm:$0xff] %v501
                %v503 = vld [vmem:[%s223 + $0x8a8] sm:$0xff]
                %504 = vst [vmem:[%s224 + $0x458] sm:$0xff] %v503
                %v505 = vld [vmem:[%s223 + $0x8c0] sm:$0xff]
                %506 = vst [vmem:[%s224 + $0x460] sm:$0xff] %v505
                %v507 = vld [vmem:[%s223 + $0x8c8] sm:$0xff]
                %508 = vst [vmem:[%s224 + $0x468] sm:$0xff] %v507
                %v509 = vld [vmem:[%s223 + $0x8e0] sm:$0xff]
                %510 = vst [vmem:[%s224 + $0x470] sm:$0xff] %v509
                %v511 = vld [vmem:[%s223 + $0x8e8] sm:$0xff]
                %512 = vst [vmem:[%s224 + $0x478] sm:$0xff] %v511
                %v513 = vld [vmem:[%s223 + $0x900] sm:$0xff]
                %514 = vst [vmem:[%s224 + $0x480] sm:$0xff] %v513
                %v515 = vld [vmem:[%s223 + $0x908] sm:$0xff]
                %516 = vst [vmem:[%s224 + $0x488] sm:$0xff] %v515
                %v517 = vld [vmem:[%s223 + $0x920] sm:$0xff]
                %518 = vst [vmem:[%s224 + $0x490] sm:$0xff] %v517
                %v519 = vld [vmem:[%s223 + $0x928] sm:$0xff]
                %520 = vst [vmem:[%s224 + $0x498] sm:$0xff] %v519
                %v521 = vld [vmem:[%s223 + $0x940] sm:$0xff]
                %522 = vst [vmem:[%s224 + $0x4a0] sm:$0xff] %v521
                %v523 = vld [vmem:[%s223 + $0x948] sm:$0xff]
                %524 = vst [vmem:[%s224 + $0x4a8] sm:$0xff] %v523
                %v525 = vld [vmem:[%s223 + $0x960] sm:$0xff]
                %526 = vst [vmem:[%s224 + $0x4b0] sm:$0xff] %v525
                %v527 = vld [vmem:[%s223 + $0x968] sm:$0xff]
                %528 = vst [vmem:[%s224 + $0x4b8] sm:$0xff] %v527
                %v529 = vld [vmem:[%s223 + $0x980] sm:$0xff]
                %530 = vst [vmem:[%s224 + $0x4c0] sm:$0xff] %v529
                %v531 = vld [vmem:[%s223 + $0x988] sm:$0xff]
                %532 = vst [vmem:[%s224 + $0x4c8] sm:$0xff] %v531
                %v533 = vld [vmem:[%s223 + $0x9a0] sm:$0xff]
                %534 = vst [vmem:[%s224 + $0x4d0] sm:$0xff] %v533
                %v535 = vld [vmem:[%s223 + $0x9a8] sm:$0xff]
                %536 = vst [vmem:[%s224 + $0x4d8] sm:$0xff] %v535
                %v537 = vld [vmem:[%s223 + $0x9c0] sm:$0xff]
                %538 = vst [vmem:[%s224 + $0x4e0] sm:$0xff] %v537
                %v539 = vld [vmem:[%s223 + $0x9c8] sm:$0xff]
                %540 = vst [vmem:[%s224 + $0x4e8] sm:$0xff] %v539
                %v541 = vld [vmem:[%s223 + $0x9e0] sm:$0xff]
                %542 = vst [vmem:[%s224 + $0x4f0] sm:$0xff] %v541
                %v543 = vld [vmem:[%s223 + $0x9e8] sm:$0xff]
                %544 = vst [vmem:[%s224 + $0x4f8] sm:$0xff] %v543
                %v545 = vld [vmem:[%s223 + $0xa00] sm:$0xff]
                %546 = vst [vmem:[%s224 + $0x500] sm:$0xff] %v545
                %v547 = vld [vmem:[%s223 + $0xa08] sm:$0xff]
                %548 = vst [vmem:[%s224 + $0x508] sm:$0xff] %v547
                %v549 = vld [vmem:[%s223 + $0xa20] sm:$0xff]
                %550 = vst [vmem:[%s224 + $0x510] sm:$0xff] %v549
                %v551 = vld [vmem:[%s223 + $0xa28] sm:$0xff]
                %552 = vst [vmem:[%s224 + $0x518] sm:$0xff] %v551
                %v553 = vld [vmem:[%s223 + $0xa40] sm:$0xff]
                %554 = vst [vmem:[%s224 + $0x520] sm:$0xff] %v553
                %v555 = vld [vmem:[%s223 + $0xa48] sm:$0xff]
                %556 = vst [vmem:[%s224 + $0x528] sm:$0xff] %v555
                %v557 = vld [vmem:[%s223 + $0xa60] sm:$0xff]
                %558 = vst [vmem:[%s224 + $0x530] sm:$0xff] %v557
                %v559 = vld [vmem:[%s223 + $0xa68] sm:$0xff]
                %560 = vst [vmem:[%s224 + $0x538] sm:$0xff] %v559
                %v561 = vld [vmem:[%s223 + $0xa80] sm:$0xff]
                %562 = vst [vmem:[%s224 + $0x540] sm:$0xff] %v561
                %v563 = vld [vmem:[%s223 + $0xa88] sm:$0xff]
                %564 = vst [vmem:[%s224 + $0x548] sm:$0xff] %v563
                %v565 = vld [vmem:[%s223 + $0xaa0] sm:$0xff]
                %566 = vst [vmem:[%s224 + $0x550] sm:$0xff] %v565
                %v567 = vld [vmem:[%s223 + $0xaa8] sm:$0xff]
                %568 = vst [vmem:[%s224 + $0x558] sm:$0xff] %v567
                %v569 = vld [vmem:[%s223 + $0xac0] sm:$0xff]
                %570 = vst [vmem:[%s224 + $0x560] sm:$0xff] %v569
                %v571 = vld [vmem:[%s223 + $0xac8] sm:$0xff]
                %572 = vst [vmem:[%s224 + $0x568] sm:$0xff] %v571
                %v573 = vld [vmem:[%s223 + $0xae0] sm:$0xff]
                %574 = vst [vmem:[%s224 + $0x570] sm:$0xff] %v573
                %v575 = vld [vmem:[%s223 + $0xae8] sm:$0xff]
                %576 = vst [vmem:[%s224 + $0x578] sm:$0xff] %v575
                %v577 = vld [vmem:[%s223 + $0xb00] sm:$0xff]
                %578 = vst [vmem:[%s224 + $0x580] sm:$0xff] %v577
                %v579 = vld [vmem:[%s223 + $0xb08] sm:$0xff]
                %580 = vst [vmem:[%s224 + $0x588] sm:$0xff] %v579
                %v581 = vld [vmem:[%s223 + $0xb20] sm:$0xff]
                %582 = vst [vmem:[%s224 + $0x590] sm:$0xff] %v581
                %v583 = vld [vmem:[%s223 + $0xb28] sm:$0xff]
                %584 = vst [vmem:[%s224 + $0x598] sm:$0xff] %v583
                %v585 = vld [vmem:[%s223 + $0xb40] sm:$0xff]
                %586 = vst [vmem:[%s224 + $0x5a0] sm:$0xff] %v585
                %v587 = vld [vmem:[%s223 + $0xb48] sm:$0xff]
                %588 = vst [vmem:[%s224 + $0x5a8] sm:$0xff] %v587
                %v589 = vld [vmem:[%s223 + $0xb60] sm:$0xff]
                %590 = vst [vmem:[%s224 + $0x5b0] sm:$0xff] %v589
                %v591 = vld [vmem:[%s223 + $0xb68] sm:$0xff]
                %592 = vst [vmem:[%s224 + $0x5b8] sm:$0xff] %v591
                %v593 = vld [vmem:[%s223 + $0xb80] sm:$0xff]
                %594 = vst [vmem:[%s224 + $0x5c0] sm:$0xff] %v593
                %v595 = vld [vmem:[%s223 + $0xb88] sm:$0xff]
                %596 = vst [vmem:[%s224 + $0x5c8] sm:$0xff] %v595
                %v597 = vld [vmem:[%s223 + $0xba0] sm:$0xff]
                %598 = vst [vmem:[%s224 + $0x5d0] sm:$0xff] %v597
                %v599 = vld [vmem:[%s223 + $0xba8] sm:$0xff]
                %600 = vst [vmem:[%s224 + $0x5d8] sm:$0xff] %v599
                %v601 = vld [vmem:[%s223 + $0xbc0] sm:$0xff]
                %602 = vst [vmem:[%s224 + $0x5e0] sm:$0xff] %v601
                %v603 = vld [vmem:[%s223 + $0xbc8] sm:$0xff]
                %604 = vst [vmem:[%s224 + $0x5e8] sm:$0xff] %v603
                %v605 = vld [vmem:[%s223 + $0xbe0] sm:$0xff]
                %606 = vst [vmem:[%s224 + $0x5f0] sm:$0xff] %v605
                %v607 = vld [vmem:[%s223 + $0xbe8] sm:$0xff]
                %608 = vst [vmem:[%s224 + $0x5f8] sm:$0xff] %v607
                %v609 = vld [vmem:[%s223 + $0xc00] sm:$0xff]
                %610 = vst [vmem:[%s224 + $0x600] sm:$0xff] %v609
                %v611 = vld [vmem:[%s223 + $0xc08] sm:$0xff]
                %612 = vst [vmem:[%s224 + $0x608] sm:$0xff] %v611
                %v613 = vld [vmem:[%s223 + $0xc20] sm:$0xff]
                %614 = vst [vmem:[%s224 + $0x610] sm:$0xff] %v613
                %v615 = vld [vmem:[%s223 + $0xc28] sm:$0xff]
                %616 = vst [vmem:[%s224 + $0x618] sm:$0xff] %v615
                %v617 = vld [vmem:[%s223 + $0xc40] sm:$0xff]
                %618 = vst [vmem:[%s224 + $0x620] sm:$0xff] %v617
                %v619 = vld [vmem:[%s223 + $0xc48] sm:$0xff]
                %620 = vst [vmem:[%s224 + $0x628] sm:$0xff] %v619
                %v621 = vld [vmem:[%s223 + $0xc60] sm:$0xff]
                %622 = vst [vmem:[%s224 + $0x630] sm:$0xff] %v621
                %v623 = vld [vmem:[%s223 + $0xc68] sm:$0xff]
                %624 = vst [vmem:[%s224 + $0x638] sm:$0xff] %v623
                %v625 = vld [vmem:[%s223 + $0xc80] sm:$0xff]
                %626 = vst [vmem:[%s224 + $0x640] sm:$0xff] %v625
                %v627 = vld [vmem:[%s223 + $0xc88] sm:$0xff]
                %628 = vst [vmem:[%s224 + $0x648] sm:$0xff] %v627
                %v629 = vld [vmem:[%s223 + $0xca0] sm:$0xff]
                %630 = vst [vmem:[%s224 + $0x650] sm:$0xff] %v629
                %v631 = vld [vmem:[%s223 + $0xca8] sm:$0xff]
                %632 = vst [vmem:[%s224 + $0x658] sm:$0xff] %v631
                %v633 = vld [vmem:[%s223 + $0xcc0] sm:$0xff]
                %634 = vst [vmem:[%s224 + $0x660] sm:$0xff] %v633
                %v635 = vld [vmem:[%s223 + $0xcc8] sm:$0xff]
                %636 = vst [vmem:[%s224 + $0x668] sm:$0xff] %v635
                %v637 = vld [vmem:[%s223 + $0xce0] sm:$0xff]
                %638 = vst [vmem:[%s224 + $0x670] sm:$0xff] %v637
                %v639 = vld [vmem:[%s223 + $0xce8] sm:$0xff]
                %640 = vst [vmem:[%s224 + $0x678] sm:$0xff] %v639
                %v641 = vld [vmem:[%s223 + $0xd00] sm:$0xff]
                %642 = vst [vmem:[%s224 + $0x680] sm:$0xff] %v641
                %v643 = vld [vmem:[%s223 + $0xd08] sm:$0xff]
                %644 = vst [vmem:[%s224 + $0x688] sm:$0xff] %v643
                %v645 = vld [vmem:[%s223 + $0xd20] sm:$0xff]
                %646 = vst [vmem:[%s224 + $0x690] sm:$0xff] %v645
                %v647 = vld [vmem:[%s223 + $0xd28] sm:$0xff]
                %648 = vst [vmem:[%s224 + $0x698] sm:$0xff] %v647
                %v649 = vld [vmem:[%s223 + $0xd40] sm:$0xff]
                %650 = vst [vmem:[%s224 + $0x6a0] sm:$0xff] %v649
                %v651 = vld [vmem:[%s223 + $0xd48] sm:$0xff]
                %652 = vst [vmem:[%s224 + $0x6a8] sm:$0xff] %v651
                %v653 = vld [vmem:[%s223 + $0xd60] sm:$0xff]
                %654 = vst [vmem:[%s224 + $0x6b0] sm:$0xff] %v653
                %v655 = vld [vmem:[%s223 + $0xd68] sm:$0xff]
                %656 = vst [vmem:[%s224 + $0x6b8] sm:$0xff] %v655
                %v657 = vld [vmem:[%s223 + $0xd80] sm:$0xff]
                %658 = vst [vmem:[%s224 + $0x6c0] sm:$0xff] %v657
                %v659 = vld [vmem:[%s223 + $0xd88] sm:$0xff]
                %660 = vst [vmem:[%s224 + $0x6c8] sm:$0xff] %v659
                %v661 = vld [vmem:[%s223 + $0xda0] sm:$0xff]
                %662 = vst [vmem:[%s224 + $0x6d0] sm:$0xff] %v661
                %v663 = vld [vmem:[%s223 + $0xda8] sm:$0xff]
                %664 = vst [vmem:[%s224 + $0x6d8] sm:$0xff] %v663
                %v665 = vld [vmem:[%s223 + $0xdc0] sm:$0xff]
                %666 = vst [vmem:[%s224 + $0x6e0] sm:$0xff] %v665
                %v667 = vld [vmem:[%s223 + $0xdc8] sm:$0xff]
                %668 = vst [vmem:[%s224 + $0x6e8] sm:$0xff] %v667
                %v669 = vld [vmem:[%s223 + $0xde0] sm:$0xff]
                %670 = vst [vmem:[%s224 + $0x6f0] sm:$0xff] %v669
                %v671 = vld [vmem:[%s223 + $0xde8] sm:$0xff]
                %672 = vst [vmem:[%s224 + $0x6f8] sm:$0xff] %v671
                %v673 = vld [vmem:[%s223 + $0xe00] sm:$0xff]
                %674 = vst [vmem:[%s224 + $0x700] sm:$0xff] %v673
                %v675 = vld [vmem:[%s223 + $0xe08] sm:$0xff]
                %676 = vst [vmem:[%s224 + $0x708] sm:$0xff] %v675
                %v677 = vld [vmem:[%s223 + $0xe20] sm:$0xff]
                %678 = vst [vmem:[%s224 + $0x710] sm:$0xff] %v677
                %v679 = vld [vmem:[%s223 + $0xe28] sm:$0xff]
                %680 = vst [vmem:[%s224 + $0x718] sm:$0xff] %v679
                %v681 = vld [vmem:[%s223 + $0xe40] sm:$0xff]
                %682 = vst [vmem:[%s224 + $0x720] sm:$0xff] %v681
                %v683 = vld [vmem:[%s223 + $0xe48] sm:$0xff]
                %684 = vst [vmem:[%s224 + $0x728] sm:$0xff] %v683
                %v685 = vld [vmem:[%s223 + $0xe60] sm:$0xff]
                %686 = vst [vmem:[%s224 + $0x730] sm:$0xff] %v685
                %v687 = vld [vmem:[%s223 + $0xe68] sm:$0xff]
                %688 = vst [vmem:[%s224 + $0x738] sm:$0xff] %v687
                %v689 = vld [vmem:[%s223 + $0xe80] sm:$0xff]
                %690 = vst [vmem:[%s224 + $0x740] sm:$0xff] %v689
                %v691 = vld [vmem:[%s223 + $0xe88] sm:$0xff]
                %692 = vst [vmem:[%s224 + $0x748] sm:$0xff] %v691
                %v693 = vld [vmem:[%s223 + $0xea0] sm:$0xff]
                %694 = vst [vmem:[%s224 + $0x750] sm:$0xff] %v693
                %v695 = vld [vmem:[%s223 + $0xea8] sm:$0xff]
                %696 = vst [vmem:[%s224 + $0x758] sm:$0xff] %v695
                %v697 = vld [vmem:[%s223 + $0xec0] sm:$0xff]
                %698 = vst [vmem:[%s224 + $0x760] sm:$0xff] %v697
                %v699 = vld [vmem:[%s223 + $0xec8] sm:$0xff]
                %700 = vst [vmem:[%s224 + $0x768] sm:$0xff] %v699
                %v701 = vld [vmem:[%s223 + $0xee0] sm:$0xff]
                %702 = vst [vmem:[%s224 + $0x770] sm:$0xff] %v701
                %v703 = vld [vmem:[%s223 + $0xee8] sm:$0xff]
                %704 = vst [vmem:[%s224 + $0x778] sm:$0xff] %v703
                %v705 = vld [vmem:[%s223 + $0xf00] sm:$0xff]
                %706 = vst [vmem:[%s224 + $0x780] sm:$0xff] %v705
                %v707 = vld [vmem:[%s223 + $0xf08] sm:$0xff]
                %708 = vst [vmem:[%s224 + $0x788] sm:$0xff] %v707
                %v709 = vld [vmem:[%s223 + $0xf20] sm:$0xff]
                %710 = vst [vmem:[%s224 + $0x790] sm:$0xff] %v709
                %v711 = vld [vmem:[%s223 + $0xf28] sm:$0xff]
                %712 = vst [vmem:[%s224 + $0x798] sm:$0xff] %v711
                %v713 = vld [vmem:[%s223 + $0xf40] sm:$0xff]
                %714 = vst [vmem:[%s224 + $0x7a0] sm:$0xff] %v713
                %v715 = vld [vmem:[%s223 + $0xf48] sm:$0xff]
                %716 = vst [vmem:[%s224 + $0x7a8] sm:$0xff] %v715
                %v717 = vld [vmem:[%s223 + $0xf60] sm:$0xff]
                %718 = vst [vmem:[%s224 + $0x7b0] sm:$0xff] %v717
                %v719 = vld [vmem:[%s223 + $0xf68] sm:$0xff]
                %720 = vst [vmem:[%s224 + $0x7b8] sm:$0xff] %v719
                %v721 = vld [vmem:[%s223 + $0xf80] sm:$0xff]
                %722 = vst [vmem:[%s224 + $0x7c0] sm:$0xff] %v721
                %v723 = vld [vmem:[%s223 + $0xf88] sm:$0xff]
                %724 = vst [vmem:[%s224 + $0x7c8] sm:$0xff] %v723
                %v725 = vld [vmem:[%s223 + $0xfa0] sm:$0xff]
                %726 = vst [vmem:[%s224 + $0x7d0] sm:$0xff] %v725
                %v727 = vld [vmem:[%s223 + $0xfa8] sm:$0xff]
                %728 = vst [vmem:[%s224 + $0x7d8] sm:$0xff] %v727
                %v729 = vld [vmem:[%s223 + $0xfc0] sm:$0xff]
                %730 = vst [vmem:[%s224 + $0x7e0] sm:$0xff] %v729
                %v731 = vld [vmem:[%s223 + $0xfc8] sm:$0xff]
                %732 = vst [vmem:[%s224 + $0x7e8] sm:$0xff] %v731
                %v733 = vld [vmem:[%s223 + $0xfe0] sm:$0xff]
                %734 = vst [vmem:[%s224 + $0x7f0] sm:$0xff] %v733
                %v735 = vld [vmem:[%s223 + $0xfe8] sm:$0xff]
                %736 = vst [vmem:[%s224 + $0x7f8] sm:$0xff] %v735
                %v737 = vld [vmem:[%s223 + $0x1000] sm:$0xff]
                %738 = vst [vmem:[%s224 + $0x800] sm:$0xff] %v737
                %v739 = vld [vmem:[%s223 + $0x1008] sm:$0xff]
                %740 = vst [vmem:[%s224 + $0x808] sm:$0xff] %v739
                %v741 = vld [vmem:[%s223 + $0x1020] sm:$0xff]
                %742 = vst [vmem:[%s224 + $0x810] sm:$0xff] %v741
                %v743 = vld [vmem:[%s223 + $0x1028] sm:$0xff]
                %744 = vst [vmem:[%s224 + $0x818] sm:$0xff] %v743
                %v745 = vld [vmem:[%s223 + $0x1040] sm:$0xff]
                %746 = vst [vmem:[%s224 + $0x820] sm:$0xff] %v745
                %v747 = vld [vmem:[%s223 + $0x1048] sm:$0xff]
                %748 = vst [vmem:[%s224 + $0x828] sm:$0xff] %v747
                %v749 = vld [vmem:[%s223 + $0x1060] sm:$0xff]
                %750 = vst [vmem:[%s224 + $0x830] sm:$0xff] %v749
                %v751 = vld [vmem:[%s223 + $0x1068] sm:$0xff]
                %752 = vst [vmem:[%s224 + $0x838] sm:$0xff] %v751
                %v753 = vld [vmem:[%s223 + $0x1080] sm:$0xff]
                %754 = vst [vmem:[%s224 + $0x840] sm:$0xff] %v753
                %v755 = vld [vmem:[%s223 + $0x1088] sm:$0xff]
                %756 = vst [vmem:[%s224 + $0x848] sm:$0xff] %v755
                %v757 = vld [vmem:[%s223 + $0x10a0] sm:$0xff]
                %758 = vst [vmem:[%s224 + $0x850] sm:$0xff] %v757
                %v759 = vld [vmem:[%s223 + $0x10a8] sm:$0xff]
                %760 = vst [vmem:[%s224 + $0x858] sm:$0xff] %v759
                %v761 = vld [vmem:[%s223 + $0x10c0] sm:$0xff]
                %762 = vst [vmem:[%s224 + $0x860] sm:$0xff] %v761
                %v763 = vld [vmem:[%s223 + $0x10c8] sm:$0xff]
                %764 = vst [vmem:[%s224 + $0x868] sm:$0xff] %v763
                %v765 = vld [vmem:[%s223 + $0x10e0] sm:$0xff]
                %766 = vst [vmem:[%s224 + $0x870] sm:$0xff] %v765
                %v767 = vld [vmem:[%s223 + $0x10e8] sm:$0xff]
                %768 = vst [vmem:[%s224 + $0x878] sm:$0xff] %v767
                %v769 = vld [vmem:[%s223 + $0x1100] sm:$0xff]
                %770 = vst [vmem:[%s224 + $0x880] sm:$0xff] %v769
                %v771 = vld [vmem:[%s223 + $0x1108] sm:$0xff]
                %772 = vst [vmem:[%s224 + $0x888] sm:$0xff] %v771
                %v773 = vld [vmem:[%s223 + $0x1120] sm:$0xff]
                %774 = vst [vmem:[%s224 + $0x890] sm:$0xff] %v773
                %v775 = vld [vmem:[%s223 + $0x1128] sm:$0xff]
                %776 = vst [vmem:[%s224 + $0x898] sm:$0xff] %v775
                %v777 = vld [vmem:[%s223 + $0x1140] sm:$0xff]
                %778 = vst [vmem:[%s224 + $0x8a0] sm:$0xff] %v777
                %v779 = vld [vmem:[%s223 + $0x1148] sm:$0xff]
                %780 = vst [vmem:[%s224 + $0x8a8] sm:$0xff] %v779
                %v781 = vld [vmem:[%s223 + $0x1160] sm:$0xff]
                %782 = vst [vmem:[%s224 + $0x8b0] sm:$0xff] %v781
                %v783 = vld [vmem:[%s223 + $0x1168] sm:$0xff]
                %784 = vst [vmem:[%s224 + $0x8b8] sm:$0xff] %v783
                %v785 = vld [vmem:[%s223 + $0x1180] sm:$0xff]
                %786 = vst [vmem:[%s224 + $0x8c0] sm:$0xff] %v785
                %v787 = vld [vmem:[%s223 + $0x1188] sm:$0xff]
                %788 = vst [vmem:[%s224 + $0x8c8] sm:$0xff] %v787
                %v789 = vld [vmem:[%s223 + $0x11a0] sm:$0xff]
                %790 = vst [vmem:[%s224 + $0x8d0] sm:$0xff] %v789
                %v791 = vld [vmem:[%s223 + $0x11a8] sm:$0xff]
                %792 = vst [vmem:[%s224 + $0x8d8] sm:$0xff] %v791
                %v793 = vld [vmem:[%s223 + $0x11c0] sm:$0xff]
                %794 = vst [vmem:[%s224 + $0x8e0] sm:$0xff] %v793
                %v795 = vld [vmem:[%s223 + $0x11c8] sm:$0xff]
                %796 = vst [vmem:[%s224 + $0x8e8] sm:$0xff] %v795
                %v797 = vld [vmem:[%s223 + $0x11e0] sm:$0xff]
                %798 = vst [vmem:[%s224 + $0x8f0] sm:$0xff] %v797
                %v799 = vld [vmem:[%s223 + $0x11e8] sm:$0xff]
                %800 = vst [vmem:[%s224 + $0x8f8] sm:$0xff] %v799
              $region37: #{custom_fe_forward.6} parent=31 // loop_footer
                %s222 = sadd.s32 1, %s218
              $region38: #{custom_fe_forward.6} parent=31 // loop_footer_branch
                %217 = sbr.rel target = $region34
              $region39: #{custom_fe_forward.6} parent=31 // loop_exit
                _
            $region32: #{custom_fe_forward.6} parent=27 // pred_fallthru
              _
            // Predicated region
            $region40: #{custom_fe_forward.6} parent=27 // pred_check
              _
            $region41: #{custom_fe_forward.6} parent=27 // pred_check_branch
              %802 = sbr.rel target = $region43
            $region42: #{custom_fe_forward.6} parent=27 // pred_region
              _
            $region43: #{custom_fe_forward.6} parent=27 // pred_fallthru
              _
          $region28: #{custom_fe_forward.6} parent=23 // pred_fallthru
            _
          %803 = vnop
        $region24: #{custom_fe_forward.6} parent=15 // pred_fallthru
          _
        // Predicated region
        $region44: #{custom_fe_forward.6} parent=15 // pred_check
          %p804 = pneg %p106
        $region45: #{custom_fe_forward.6} parent=15 // pred_check_branch
          %806 = sbr.rel (%p804) target = $region47
        $region46: #{custom_fe_forward.6} parent=15 // pred_region
          %s807 = smul.u32 2, %s19
          %p808 = scmp.lt.s32.totalorder %s807, 3
          %s809 = scalar_select %p808, %s807, 3
          %s810 = scalar_lea.vmem %s2, %s809
          %s811 = smul.u32 2, %s19
        $region47: #{custom_fe_forward.6} parent=15 // pred_fallthru
          _
      $region16: #{custom_fe_forward.6} parent=5 // pred_fallthru
        _
      %p812 = scmp.le.s32.totalorder 1, %s11
      %p813 = scmp.lt.s32.totalorder %s11, 5
      %p814 = pnand %p812, %p813
      %p815 = pneg %p814
      // Predicated region
      $region48: #{custom_fe_forward.6} parent=5 // pred_check
        _
      $region49: #{custom_fe_forward.6} parent=5 // pred_check_branch
        %817 = sbr.rel (%p814) target = $region51
      $region50: #{custom_fe_forward.6} parent=5 // pred_region
        %s818 = ssub.s32 %s11, 1
        %s819 = sand.u32 %s73, 1
        %s820 = sand.u32 %s73, 1
        %s821 = smul.addr %s820, 2304
        %s822 = scalar_lea.vmem [#allocation3], %s821
        // Predicated region
        $region52: #{custom_fe_forward.6} parent=50 // pred_check
          %p823 = pneg %p86
        $region53: #{custom_fe_forward.6} parent=50 // pred_check_branch
          %825 = sbr.rel (%p823) target = $region55
        $region54: #{custom_fe_forward.6} parent=50 // pred_region
          _
        $region55: #{custom_fe_forward.6} parent=50 // pred_fallthru
          _
        %s826 = smul.u32 9, %s23
        %p827 = scmp.lt.s32.totalorder %s21, 0
        %s828 = scalar_select %p827, %s21, 0
        %p829 = scmp.lt.s32.totalorder %s826, 17
        %s830 = scalar_select %p829, %s826, 17
        %s831 = smul.addr %s828, 18
        %s832 = sadd.s32 %s830, %s831
        %s833 = smul.addr %s832, 8
        %s834 = scalar_lea.vmem %s0, %s833
        %p835 = pneg %p58
        %p836 = pneg %p55
        %s837 = sand.u32 %s73, 1
        %s838 = sand.u32 %s73, 1
        %s839 = smul.addr %s838, 2304
        %s840 = scalar_lea.vmem [#allocation3], %s839
        %p841 = pneg %p86
        %p842 = pneg %p83
        %s843 = smul.u32 2, %s22
        %p844 = scmp.lt.s32.totalorder %s843, 3
        %s845 = scalar_select %p844, %s843, 3
        %s846 = scalar_lea.vmem %s2, %s845
        %p847 = pneg %p112
        %p848 = pneg %p109
        %p849 = pneg %p140
        %p850 = pneg %p137
        %s851 = smul.u32 2, %s22
        %p852 = scmp.lt.s32.totalorder %s21, 0
        %s853 = scalar_select %p852, %s21, 0
        %p854 = scmp.lt.s32.totalorder %s851, 3
        %s855 = scalar_select %p854, %s851, 3
        %s856 = smul.addr %s853, 4
        %s857 = sadd.s32 %s855, %s856
        %s858 = smul.addr %s857, 8
        %s859 = scalar_lea.vmem %s3, %s858
        %p860 = pneg %p168
        %p861 = pneg %p165
        %s862 = smul.u32 2, %s22
        %p863 = scmp.lt.s32.totalorder %s21, 0
        %s864 = scalar_select %p863, %s21, 0
        %p865 = scmp.lt.s32.totalorder %s862, 3
        %s866 = scalar_select %p865, %s862, 3
        %s867 = smul.addr %s864, 4
        %s868 = sadd.s32 %s866, %s867
        %s869 = smul.addr %s868, 8
        %s870 = scalar_lea.vmem %s4, %s869
        %s871 = smul.u32 9, %s23
        %p872 = scmp.lt.s32.totalorder %s21, 0
        %s873 = scalar_select %p872, %s21, 0
        %p874 = scmp.lt.s32.totalorder %s871, 17
        %s875 = scalar_select %p874, %s871, 17
        %s876 = smul.addr %s873, 18
        %s877 = sadd.s32 %s875, %s876
        %s878 = smul.addr %s877, 8
        %s879 = scalar_lea.vmem %s0, %s878
        %s880 = smul.u32 9, %s23
        %s881 = smul.u32 144, %s23
        %s882 = smul.u32 2, %s22
        %s883 = smul.u32 2, %s22
        %p884 = scmp.lt.s32.totalorder %s883, 3
        %s885 = scalar_select %p884, %s883, 3
        %s886 = scalar_lea.vmem %s2, %s885
        %s887 = smul.u32 2, %s22
        %s888 = smul.u32 2, %s22
        %p889 = scmp.lt.s32.totalorder %s21, 0
        %s890 = scalar_select %p889, %s21, 0
        %p891 = scmp.lt.s32.totalorder %s888, 3
        %s892 = scalar_select %p891, %s888, 3
        %s893 = smul.addr %s890, 4
        %s894 = sadd.s32 %s892, %s893
        %s895 = smul.addr %s894, 8
        %s896 = scalar_lea.vmem %s3, %s895
        %s897 = smul.u32 2, %s22
        %s898 = smul.u32 2, %s22
        %p899 = scmp.lt.s32.totalorder %s21, 0
        %s900 = scalar_select %p899, %s21, 0
        %p901 = scmp.lt.s32.totalorder %s898, 3
        %s902 = scalar_select %p901, %s898, 3
        %s903 = smul.addr %s900, 4
        %s904 = sadd.s32 %s902, %s903
        %s905 = smul.addr %s904, 8
        %s906 = scalar_lea.vmem %s4, %s905
        %s907 = smul.u32 2, %s22
        %p908 = scmp.eq.s32.totalorder %s23, 0
        // Predicated region
        $region56: #{custom_fe_forward.6} parent=50 // pred_check
          %p909 = pneg %p908
        $region57: #{custom_fe_forward.6} parent=50 // pred_check_branch
          %911 = sbr.rel (%p909) target = $region59
        $region58: #{custom_fe_forward.6} parent=50 // pred_region
          %912 = vst [vmem:[#allocation2] sm:$0xff] 0.0
          %913 = vst [vmem:[#allocation2 + $0x8] sm:$0xff] 0.0
        $region59: #{custom_fe_forward.6} parent=50 // pred_fallthru
          _
        %v914 = vld [vmem:[#allocation2] sm:$0xff]
        %v915 = vld [vmem:[#allocation2 + $0x8] sm:$0xff]
        %v916 = vld [vmem:[%s879] sm:$0xff]
        %v917 = vld [vmem:[%s879 + $0x8] sm:$0xff]
        %v918 = vld [vmem:[%s879 + $0x10] sm:$0xff]
        %v919 = vld [vmem:[%s879 + $0x18] sm:$0xff]
        %v920 = vld [vmem:[%s879 + $0x20] sm:$0xff]
        %v921 = vld [vmem:[%s879 + $0x28] sm:$0xff]
        %v922 = vld [vmem:[%s879 + $0x30] sm:$0xff]
        %v923 = vld [vmem:[%s879 + $0x38] sm:$0xff]
        %v924 = vld [vmem:[%s879 + $0x40] sm:$0xff]
        %v925 = vld [vmem:[%s822] sm:$0xff]
        %v926 = vld [vmem:[%s822 + $0x8] sm:$0xff]
        %v927 = vld [vmem:[%s822 + $0x10] sm:$0xff]
        %v928 = vld [vmem:[%s822 + $0x18] sm:$0xff]
        %v929 = vld [vmem:[%s822 + $0x20] sm:$0xff]
        %v930 = vld [vmem:[%s822 + $0x28] sm:$0xff]
        %v931 = vld [vmem:[%s822 + $0x30] sm:$0xff]
        %v932 = vld [vmem:[%s822 + $0x38] sm:$0xff]
        %v933 = vld [vmem:[%s822 + $0x40] sm:$0xff]
        %v934 = vld [vmem:[%s822 + $0x48] sm:$0xff]
        %v935 = vld [vmem:[%s822 + $0x50] sm:$0xff]
        %v936 = vld [vmem:[%s822 + $0x58] sm:$0xff]
        %v937 = vld [vmem:[%s822 + $0x60] sm:$0xff]
        %v938 = vld [vmem:[%s822 + $0x68] sm:$0xff]
        %v939 = vld [vmem:[%s822 + $0x70] sm:$0xff]
        %v940 = vld [vmem:[%s822 + $0x78] sm:$0xff]
        %v941 = vld [vmem:[%s822 + $0x80] sm:$0xff]
        %v942 = vld [vmem:[%s822 + $0x88] sm:$0xff]
        %v943 = vld [vmem:[%s822 + $0x90] sm:$0xff]
        %v944 = vld [vmem:[%s822 + $0x98] sm:$0xff]
        %v945 = vld [vmem:[%s822 + $0xa0] sm:$0xff]
        %v946 = vld [vmem:[%s822 + $0xa8] sm:$0xff]
        %v947 = vld [vmem:[%s822 + $0xb0] sm:$0xff]
        %v948 = vld [vmem:[%s822 + $0xb8] sm:$0xff]
        %v949 = vld [vmem:[%s822 + $0xc0] sm:$0xff]
        %v950 = vld [vmem:[%s822 + $0xc8] sm:$0xff]
        %v951 = vld [vmem:[%s822 + $0xd0] sm:$0xff]
        %v952 = vld [vmem:[%s822 + $0xd8] sm:$0xff]
        %v953 = vld [vmem:[%s822 + $0xe0] sm:$0xff]
        %v954 = vld [vmem:[%s822 + $0xe8] sm:$0xff]
        %v955 = vld [vmem:[%s822 + $0xf0] sm:$0xff]
        %v956 = vld [vmem:[%s822 + $0xf8] sm:$0xff]
        %v957 = vld [vmem:[%s822 + $0x100] sm:$0xff]
        %v958 = vld [vmem:[%s822 + $0x108] sm:$0xff]
        %v959 = vld [vmem:[%s822 + $0x110] sm:$0xff]
        %v960 = vld [vmem:[%s822 + $0x118] sm:$0xff]
        %v961 = vld [vmem:[%s822 + $0x120] sm:$0xff]
        %v962 = vld [vmem:[%s822 + $0x128] sm:$0xff]
        %v963 = vld [vmem:[%s822 + $0x130] sm:$0xff]
        %v964 = vld [vmem:[%s822 + $0x138] sm:$0xff]
        %v965 = vld [vmem:[%s822 + $0x140] sm:$0xff]
        %v966 = vld [vmem:[%s822 + $0x148] sm:$0xff]
        %v967 = vld [vmem:[%s822 + $0x150] sm:$0xff]
        %v968 = vld [vmem:[%s822 + $0x158] sm:$0xff]
        %v969 = vld [vmem:[%s822 + $0x160] sm:$0xff]
        %v970 = vld [vmem:[%s822 + $0x168] sm:$0xff]
        %v971 = vld [vmem:[%s822 + $0x170] sm:$0xff]
        %v972 = vld [vmem:[%s822 + $0x178] sm:$0xff]
        %v973 = vld [vmem:[%s822 + $0x180] sm:$0xff]
        %v974 = vld [vmem:[%s822 + $0x188] sm:$0xff]
        %v975 = vld [vmem:[%s822 + $0x190] sm:$0xff]
        %v976 = vld [vmem:[%s822 + $0x198] sm:$0xff]
        %v977 = vld [vmem:[%s822 + $0x1a0] sm:$0xff]
        %v978 = vld [vmem:[%s822 + $0x1a8] sm:$0xff]
        %v979 = vld [vmem:[%s822 + $0x1b0] sm:$0xff]
        %v980 = vld [vmem:[%s822 + $0x1b8] sm:$0xff]
        %v981 = vld [vmem:[%s822 + $0x1c0] sm:$0xff]
        %v982 = vld [vmem:[%s822 + $0x1c8] sm:$0xff]
        %v983 = vld [vmem:[%s822 + $0x1d0] sm:$0xff]
        %v984 = vld [vmem:[%s822 + $0x1d8] sm:$0xff]
        %v985 = vld [vmem:[%s822 + $0x1e0] sm:$0xff]
        %v986 = vld [vmem:[%s822 + $0x1e8] sm:$0xff]
        %v987 = vld [vmem:[%s822 + $0x1f0] sm:$0xff]
        %v988 = vld [vmem:[%s822 + $0x1f8] sm:$0xff]
        %v989 = vld [vmem:[%s822 + $0x200] sm:$0xff]
        %v990 = vld [vmem:[%s822 + $0x208] sm:$0xff]
        %v991 = vld [vmem:[%s822 + $0x210] sm:$0xff]
        %v992 = vld [vmem:[%s822 + $0x218] sm:$0xff]
        %v993 = vld [vmem:[%s822 + $0x220] sm:$0xff]
        %v994 = vld [vmem:[%s822 + $0x228] sm:$0xff]
        %v995 = vld [vmem:[%s822 + $0x230] sm:$0xff]
        %v996 = vld [vmem:[%s822 + $0x238] sm:$0xff]
        %v997 = vld [vmem:[%s822 + $0x240] sm:$0xff]
        %v998 = vld [vmem:[%s822 + $0x248] sm:$0xff]
        %v999 = vld [vmem:[%s822 + $0x250] sm:$0xff]
        %v1000 = vld [vmem:[%s822 + $0x258] sm:$0xff]
        %v1001 = vld [vmem:[%s822 + $0x260] sm:$0xff]
        %v1002 = vld [vmem:[%s822 + $0x268] sm:$0xff]
        %v1003 = vld [vmem:[%s822 + $0x270] sm:$0xff]
        %v1004 = vld [vmem:[%s822 + $0x278] sm:$0xff]
        %v1005 = vld [vmem:[%s822 + $0x280] sm:$0xff]
        %v1006 = vld [vmem:[%s822 + $0x288] sm:$0xff]
        %v1007 = vld [vmem:[%s822 + $0x290] sm:$0xff]
        %v1008 = vld [vmem:[%s822 + $0x298] sm:$0xff]
        %v1009 = vld [vmem:[%s822 + $0x2a0] sm:$0xff]
        %v1010 = vld [vmem:[%s822 + $0x2a8] sm:$0xff]
        %v1011 = vld [vmem:[%s822 + $0x2b0] sm:$0xff]
        %v1012 = vld [vmem:[%s822 + $0x2b8] sm:$0xff]
        %v1013 = vld [vmem:[%s822 + $0x2c0] sm:$0xff]
        %v1014 = vld [vmem:[%s822 + $0x2c8] sm:$0xff]
        %v1015 = vld [vmem:[%s822 + $0x2d0] sm:$0xff]
        %v1016 = vld [vmem:[%s822 + $0x2d8] sm:$0xff]
        %v1017 = vld [vmem:[%s822 + $0x2e0] sm:$0xff]
        %v1018 = vld [vmem:[%s822 + $0x2e8] sm:$0xff]
        %v1019 = vld [vmem:[%s822 + $0x2f0] sm:$0xff]
        %v1020 = vld [vmem:[%s822 + $0x2f8] sm:$0xff]
        %v1021 = vld [vmem:[%s822 + $0x300] sm:$0xff]
        %v1022 = vld [vmem:[%s822 + $0x308] sm:$0xff]
        %v1023 = vld [vmem:[%s822 + $0x310] sm:$0xff]
        %v1024 = vld [vmem:[%s822 + $0x318] sm:$0xff]
        %v1025 = vld [vmem:[%s822 + $0x320] sm:$0xff]
        %v1026 = vld [vmem:[%s822 + $0x328] sm:$0xff]
        %v1027 = vld [vmem:[%s822 + $0x330] sm:$0xff]
        %v1028 = vld [vmem:[%s822 + $0x338] sm:$0xff]
        %v1029 = vld [vmem:[%s822 + $0x340] sm:$0xff]
        %v1030 = vld [vmem:[%s822 + $0x348] sm:$0xff]
        %v1031 = vld [vmem:[%s822 + $0x350] sm:$0xff]
        %v1032 = vld [vmem:[%s822 + $0x358] sm:$0xff]
        %v1033 = vld [vmem:[%s822 + $0x360] sm:$0xff]
        %v1034 = vld [vmem:[%s822 + $0x368] sm:$0xff]
        %v1035 = vld [vmem:[%s822 + $0x370] sm:$0xff]
        %v1036 = vld [vmem:[%s822 + $0x378] sm:$0xff]
        %v1037 = vld [vmem:[%s822 + $0x380] sm:$0xff]
        %v1038 = vld [vmem:[%s822 + $0x388] sm:$0xff]
        %v1039 = vld [vmem:[%s822 + $0x390] sm:$0xff]
        %v1040 = vld [vmem:[%s822 + $0x398] sm:$0xff]
        %v1041 = vld [vmem:[%s822 + $0x3a0] sm:$0xff]
        %v1042 = vld [vmem:[%s822 + $0x3a8] sm:$0xff]
        %v1043 = vld [vmem:[%s822 + $0x3b0] sm:$0xff]
        %v1044 = vld [vmem:[%s822 + $0x3b8] sm:$0xff]
        %v1045 = vld [vmem:[%s822 + $0x3c0] sm:$0xff]
        %v1046 = vld [vmem:[%s822 + $0x3c8] sm:$0xff]
        %v1047 = vld [vmem:[%s822 + $0x3d0] sm:$0xff]
        %v1048 = vld [vmem:[%s822 + $0x3d8] sm:$0xff]
        %v1049 = vld [vmem:[%s822 + $0x3e0] sm:$0xff]
        %v1050 = vld [vmem:[%s822 + $0x3e8] sm:$0xff]
        %v1051 = vld [vmem:[%s822 + $0x3f0] sm:$0xff]
        %v1052 = vld [vmem:[%s822 + $0x3f8] sm:$0xff]
        %v1053 = vld [vmem:[%s822 + $0x400] sm:$0xff]
        %v1054 = vld [vmem:[%s822 + $0x408] sm:$0xff]
        %v1055 = vld [vmem:[%s822 + $0x410] sm:$0xff]
        %v1056 = vld [vmem:[%s822 + $0x418] sm:$0xff]
        %v1057 = vld [vmem:[%s822 + $0x420] sm:$0xff]
        %v1058 = vld [vmem:[%s822 + $0x428] sm:$0xff]
        %v1059 = vld [vmem:[%s822 + $0x430] sm:$0xff]
        %v1060 = vld [vmem:[%s822 + $0x438] sm:$0xff]
        %v1061 = vld [vmem:[%s822 + $0x440] sm:$0xff]
        %v1062 = vld [vmem:[%s822 + $0x448] sm:$0xff]
        %v1063 = vld [vmem:[%s822 + $0x450] sm:$0xff]
        %v1064 = vld [vmem:[%s822 + $0x458] sm:$0xff]
        %v1065 = vld [vmem:[%s822 + $0x460] sm:$0xff]
        %v1066 = vld [vmem:[%s822 + $0x468] sm:$0xff]
        %v1067 = vld [vmem:[%s822 + $0x470] sm:$0xff]
        %v1068 = vld [vmem:[%s822 + $0x478] sm:$0xff]
        %v1069 = vld [vmem:[%s822 + $0x480] sm:$0xff]
        %v1070 = vld [vmem:[%s822 + $0x488] sm:$0xff]
        %v1071 = vld [vmem:[%s822 + $0x490] sm:$0xff]
        %v1072 = vld [vmem:[%s822 + $0x498] sm:$0xff]
        %v1073 = vld [vmem:[%s822 + $0x4a0] sm:$0xff]
        %v1074 = vld [vmem:[%s822 + $0x4a8] sm:$0xff]
        %v1075 = vld [vmem:[%s822 + $0x4b0] sm:$0xff]
        %v1076 = vld [vmem:[%s822 + $0x4b8] sm:$0xff]
        %v1077 = vld [vmem:[%s822 + $0x4c0] sm:$0xff]
        %v1078 = vld [vmem:[%s822 + $0x4c8] sm:$0xff]
        %v1079 = vld [vmem:[%s822 + $0x4d0] sm:$0xff]
        %v1080 = vld [vmem:[%s822 + $0x4d8] sm:$0xff]
        %v1081 = vld [vmem:[%s822 + $0x4e0] sm:$0xff]
        %v1082 = vld [vmem:[%s822 + $0x4e8] sm:$0xff]
        %v1083 = vld [vmem:[%s822 + $0x4f0] sm:$0xff]
        %v1084 = vld [vmem:[%s822 + $0x4f8] sm:$0xff]
        %v1085 = vld [vmem:[%s822 + $0x500] sm:$0xff]
        %v1086 = vld [vmem:[%s822 + $0x508] sm:$0xff]
        %v1087 = vld [vmem:[%s822 + $0x510] sm:$0xff]
        %v1088 = vld [vmem:[%s822 + $0x518] sm:$0xff]
        %v1089 = vld [vmem:[%s822 + $0x520] sm:$0xff]
        %v1090 = vld [vmem:[%s822 + $0x528] sm:$0xff]
        %v1091 = vld [vmem:[%s822 + $0x530] sm:$0xff]
        %v1092 = vld [vmem:[%s822 + $0x538] sm:$0xff]
        %v1093 = vld [vmem:[%s822 + $0x540] sm:$0xff]
        %v1094 = vld [vmem:[%s822 + $0x548] sm:$0xff]
        %v1095 = vld [vmem:[%s822 + $0x550] sm:$0xff]
        %v1096 = vld [vmem:[%s822 + $0x558] sm:$0xff]
        %v1097 = vld [vmem:[%s822 + $0x560] sm:$0xff]
        %v1098 = vld [vmem:[%s822 + $0x568] sm:$0xff]
        %v1099 = vld [vmem:[%s822 + $0x570] sm:$0xff]
        %v1100 = vld [vmem:[%s822 + $0x578] sm:$0xff]
        %v1101 = vld [vmem:[%s822 + $0x580] sm:$0xff]
        %v1102 = vld [vmem:[%s822 + $0x588] sm:$0xff]
        %v1103 = vld [vmem:[%s822 + $0x590] sm:$0xff]
        %v1104 = vld [vmem:[%s822 + $0x598] sm:$0xff]
        %v1105 = vld [vmem:[%s822 + $0x5a0] sm:$0xff]
        %v1106 = vld [vmem:[%s822 + $0x5a8] sm:$0xff]
        %v1107 = vld [vmem:[%s822 + $0x5b0] sm:$0xff]
        %v1108 = vld [vmem:[%s822 + $0x5b8] sm:$0xff]
        %v1109 = vld [vmem:[%s822 + $0x5c0] sm:$0xff]
        %v1110 = vld [vmem:[%s822 + $0x5c8] sm:$0xff]
        %v1111 = vld [vmem:[%s822 + $0x5d0] sm:$0xff]
        %v1112 = vld [vmem:[%s822 + $0x5d8] sm:$0xff]
        %v1113 = vld [vmem:[%s822 + $0x5e0] sm:$0xff]
        %v1114 = vld [vmem:[%s822 + $0x5e8] sm:$0xff]
        %v1115 = vld [vmem:[%s822 + $0x5f0] sm:$0xff]
        %v1116 = vld [vmem:[%s822 + $0x5f8] sm:$0xff]
        %v1117 = vld [vmem:[%s822 + $0x600] sm:$0xff]
        %v1118 = vld [vmem:[%s822 + $0x608] sm:$0xff]
        %v1119 = vld [vmem:[%s822 + $0x610] sm:$0xff]
        %v1120 = vld [vmem:[%s822 + $0x618] sm:$0xff]
        %v1121 = vld [vmem:[%s822 + $0x620] sm:$0xff]
        %v1122 = vld [vmem:[%s822 + $0x628] sm:$0xff]
        %v1123 = vld [vmem:[%s822 + $0x630] sm:$0xff]
        %v1124 = vld [vmem:[%s822 + $0x638] sm:$0xff]
        %v1125 = vld [vmem:[%s822 + $0x640] sm:$0xff]
        %v1126 = vld [vmem:[%s822 + $0x648] sm:$0xff]
        %v1127 = vld [vmem:[%s822 + $0x650] sm:$0xff]
        %v1128 = vld [vmem:[%s822 + $0x658] sm:$0xff]
        %v1129 = vld [vmem:[%s822 + $0x660] sm:$0xff]
        %v1130 = vld [vmem:[%s822 + $0x668] sm:$0xff]
        %v1131 = vld [vmem:[%s822 + $0x670] sm:$0xff]
        %v1132 = vld [vmem:[%s822 + $0x678] sm:$0xff]
        %v1133 = vld [vmem:[%s822 + $0x680] sm:$0xff]
        %v1134 = vld [vmem:[%s822 + $0x688] sm:$0xff]
        %v1135 = vld [vmem:[%s822 + $0x690] sm:$0xff]
        %v1136 = vld [vmem:[%s822 + $0x698] sm:$0xff]
        %v1137 = vld [vmem:[%s822 + $0x6a0] sm:$0xff]
        %v1138 = vld [vmem:[%s822 + $0x6a8] sm:$0xff]
        %v1139 = vld [vmem:[%s822 + $0x6b0] sm:$0xff]
        %v1140 = vld [vmem:[%s822 + $0x6b8] sm:$0xff]
        %v1141 = vld [vmem:[%s822 + $0x6c0] sm:$0xff]
        %v1142 = vld [vmem:[%s822 + $0x6c8] sm:$0xff]
        %v1143 = vld [vmem:[%s822 + $0x6d0] sm:$0xff]
        %v1144 = vld [vmem:[%s822 + $0x6d8] sm:$0xff]
        %v1145 = vld [vmem:[%s822 + $0x6e0] sm:$0xff]
        %v1146 = vld [vmem:[%s822 + $0x6e8] sm:$0xff]
        %v1147 = vld [vmem:[%s822 + $0x6f0] sm:$0xff]
        %v1148 = vld [vmem:[%s822 + $0x6f8] sm:$0xff]
        %v1149 = vld [vmem:[%s822 + $0x700] sm:$0xff]
        %v1150 = vld [vmem:[%s822 + $0x708] sm:$0xff]
        %v1151 = vld [vmem:[%s822 + $0x710] sm:$0xff]
        %v1152 = vld [vmem:[%s822 + $0x718] sm:$0xff]
        %v1153 = vld [vmem:[%s822 + $0x720] sm:$0xff]
        %v1154 = vld [vmem:[%s822 + $0x728] sm:$0xff]
        %v1155 = vld [vmem:[%s822 + $0x730] sm:$0xff]
        %v1156 = vld [vmem:[%s822 + $0x738] sm:$0xff]
        %v1157 = vld [vmem:[%s822 + $0x740] sm:$0xff]
        %v1158 = vld [vmem:[%s822 + $0x748] sm:$0xff]
        %v1159 = vld [vmem:[%s822 + $0x750] sm:$0xff]
        %v1160 = vld [vmem:[%s822 + $0x758] sm:$0xff]
        %v1161 = vld [vmem:[%s822 + $0x760] sm:$0xff]
        %v1162 = vld [vmem:[%s822 + $0x768] sm:$0xff]
        %v1163 = vld [vmem:[%s822 + $0x770] sm:$0xff]
        %v1164 = vld [vmem:[%s822 + $0x778] sm:$0xff]
        %v1165 = vld [vmem:[%s822 + $0x780] sm:$0xff]
        %v1166 = vld [vmem:[%s822 + $0x788] sm:$0xff]
        %v1167 = vld [vmem:[%s822 + $0x790] sm:$0xff]
        %v1168 = vld [vmem:[%s822 + $0x798] sm:$0xff]
        %v1169 = vld [vmem:[%s822 + $0x7a0] sm:$0xff]
        %v1170 = vld [vmem:[%s822 + $0x7a8] sm:$0xff]
        %v1171 = vld [vmem:[%s822 + $0x7b0] sm:$0xff]
        %v1172 = vld [vmem:[%s822 + $0x7b8] sm:$0xff]
        %v1173 = vld [vmem:[%s822 + $0x7c0] sm:$0xff]
        %v1174 = vld [vmem:[%s822 + $0x7c8] sm:$0xff]
        %v1175 = vld [vmem:[%s822 + $0x7d0] sm:$0xff]
        %v1176 = vld [vmem:[%s822 + $0x7d8] sm:$0xff]
        %v1177 = vld [vmem:[%s822 + $0x7e0] sm:$0xff]
        %v1178 = vld [vmem:[%s822 + $0x7e8] sm:$0xff]
        %v1179 = vld [vmem:[%s822 + $0x7f0] sm:$0xff]
        %v1180 = vld [vmem:[%s822 + $0x7f8] sm:$0xff]
        %v1181 = vld [vmem:[%s822 + $0x800] sm:$0xff]
        %v1182 = vld [vmem:[%s822 + $0x808] sm:$0xff]
        %v1183 = vld [vmem:[%s822 + $0x810] sm:$0xff]
        %v1184 = vld [vmem:[%s822 + $0x818] sm:$0xff]
        %v1185 = vld [vmem:[%s822 + $0x820] sm:$0xff]
        %v1186 = vld [vmem:[%s822 + $0x828] sm:$0xff]
        %v1187 = vld [vmem:[%s822 + $0x830] sm:$0xff]
        %v1188 = vld [vmem:[%s822 + $0x838] sm:$0xff]
        %v1189 = vld [vmem:[%s822 + $0x840] sm:$0xff]
        %v1190 = vld [vmem:[%s822 + $0x848] sm:$0xff]
        %v1191 = vld [vmem:[%s822 + $0x850] sm:$0xff]
        %v1192 = vld [vmem:[%s822 + $0x858] sm:$0xff]
        %v1193 = vld [vmem:[%s822 + $0x860] sm:$0xff]
        %v1194 = vld [vmem:[%s822 + $0x868] sm:$0xff]
        %v1195 = vld [vmem:[%s822 + $0x870] sm:$0xff]
        %v1196 = vld [vmem:[%s822 + $0x878] sm:$0xff]
        %v1197 = vld [vmem:[%s822 + $0x880] sm:$0xff]
        %v1198 = vld [vmem:[%s822 + $0x888] sm:$0xff]
        %v1199 = vld [vmem:[%s822 + $0x890] sm:$0xff]
        %v1200 = vld [vmem:[%s822 + $0x898] sm:$0xff]
        %v1201 = vld [vmem:[%s822 + $0x8a0] sm:$0xff]
        %v1202 = vld [vmem:[%s822 + $0x8a8] sm:$0xff]
        %v1203 = vld [vmem:[%s822 + $0x8b0] sm:$0xff]
        %v1204 = vld [vmem:[%s822 + $0x8b8] sm:$0xff]
        %v1205 = vld [vmem:[%s822 + $0x8c0] sm:$0xff]
        %v1206 = vld [vmem:[%s822 + $0x8c8] sm:$0xff]
        %v1207 = vld [vmem:[%s822 + $0x8d0] sm:$0xff]
        %v1208 = vld [vmem:[%s822 + $0x8d8] sm:$0xff]
        %v1209 = vld [vmem:[%s822 + $0x8e0] sm:$0xff]
        %v1210 = vld [vmem:[%s822 + $0x8e8] sm:$0xff]
        %v1211 = vld [vmem:[%s822 + $0x8f0] sm:$0xff]
        %v1212 = vld [vmem:[%s822 + $0x8f8] sm:$0xff]
        %1213 = vmatprep.subr.mxu0 %v926
        %1214 = vmatpush1.msra.mxu0 %v925
        %1215 = vmatprep.subr.mxu0 %v928
        %1216 = vmatpush1.msra.mxu0 %v927
        %1217 = vmatprep.subr.mxu0 %v930
        %1218 = vmatpush1.msra.mxu0 %v929
        %1219 = vmatprep.subr.mxu0 %v932
        %1220 = vmatpush1.msra.mxu0 %v931
        %1221 = vmatprep.subr.mxu0 %v934
        %1222 = vmatpush1.msra.mxu0 %v933
        %1223 = vmatprep.subr.mxu0 %v936
        %1224 = vmatpush1.msra.mxu0 %v935
        %1225 = vmatprep.subr.mxu0 %v938
        %1226 = vmatpush1.msra.mxu0 %v937
        %1227 = vmatprep.subr.mxu0 %v940
        %1228 = vmatpush1.msra.mxu0 %v939
        %1229 = vmatprep.subr.mxu0 %v942
        %1230 = vmatpush1.msra.mxu0 %v941
        %1231 = vmatprep.subr.mxu0 %v944
        %1232 = vmatpush1.msra.mxu0 %v943
        %1233 = vmatprep.subr.mxu0 %v946
        %1234 = vmatpush1.msra.mxu0 %v945
        %1235 = vmatprep.subr.mxu0 %v948
        %1236 = vmatpush1.msra.mxu0 %v947
        %1237 = vmatprep.subr.mxu0 %v950
        %1238 = vmatpush1.msra.mxu0 %v949
        %1239 = vmatprep.subr.mxu0 %v952
        %1240 = vmatpush1.msra.mxu0 %v951
        %1241 = vmatprep.subr.mxu0 %v954
        %1242 = vmatpush1.msra.mxu0 %v953
        %1243 = vmatprep.subr.mxu0 %v956
        %1244 = vmatpush1.msra.mxu0 %v955
        %1245 = vmatprep.subr.mxu0 %v958
        %1246 = vmatpush1.msra.mxu0 %v957
        %1247 = vmatprep.subr.mxu0 %v960
        %1248 = vmatpush1.msra.mxu0 %v959
        %1249 = vmatprep.subr.mxu0 %v962
        %1250 = vmatpush1.msra.mxu0 %v961
        %1251 = vmatprep.subr.mxu0 %v964
        %1252 = vmatpush1.msra.mxu0 %v963
        %1253 = vmatprep.subr.mxu0 %v966
        %1254 = vmatpush1.msra.mxu0 %v965
        %1255 = vmatprep.subr.mxu0 %v968
        %1256 = vmatpush1.msra.mxu0 %v967
        %1257 = vmatprep.subr.mxu0 %v970
        %1258 = vmatpush1.msra.mxu0 %v969
        %1259 = vmatprep.subr.mxu0 %v972
        %1260 = vmatpush1.msra.mxu0 %v971
        %1261 = vmatprep.subr.mxu0 %v974
        %1262 = vmatpush1.msra.mxu0 %v973
        %1263 = vmatprep.subr.mxu0 %v976
        %1264 = vmatpush1.msra.mxu0 %v975
        %1265 = vmatprep.subr.mxu0 %v978
        %1266 = vmatpush1.msra.mxu0 %v977
        %1267 = vmatprep.subr.mxu0 %v980
        %1268 = vmatpush1.msra.mxu0 %v979
        %1269 = vmatprep.subr.mxu0 %v982
        %1270 = vmatpush1.msra.mxu0 %v981
        %1271 = vmatprep.subr.mxu0 %v984
        %1272 = vmatpush1.msra.mxu0 %v983
        %1273 = vmatprep.subr.mxu0 %v986
        %1274 = vmatpush1.msra.mxu0 %v985
        %1275 = vmatprep.subr.mxu0 %v988
        %1276 = vmatpush1.msra.mxu0 %v987
        %1277 = vmatprep.mubr.f32.mxu0 %v917
        %1278 = vmatmul.mubr.f32.gmra.mrb[0].mxu0 %v916
        %v1279 = vpop.f32.mrb[0].mxu0
        %v1280 = vadd.f32 0.0, %v1279
        %v1281 = vpop.f32.mrb[0].mxu0
        %v1282 = vadd.f32 0.0, %v1281
        %1283 = vdwg.mxu0
        %1284 = vmatprep.subr.mxu0 %v990
        %1285 = vmatpush1.msra.mxu0 %v989
        %1286 = vmatprep.subr.mxu0 %v992
        %1287 = vmatpush1.msra.mxu0 %v991
        %1288 = vmatprep.subr.mxu0 %v994
        %1289 = vmatpush1.msra.mxu0 %v993
        %1290 = vmatprep.subr.mxu0 %v996
        %1291 = vmatpush1.msra.mxu0 %v995
        %1292 = vmatprep.subr.mxu0 %v998
        %1293 = vmatpush1.msra.mxu0 %v997
        %1294 = vmatprep.subr.mxu0 %v1000
        %1295 = vmatpush1.msra.mxu0 %v999
        %1296 = vmatprep.subr.mxu0 %v1002
        %1297 = vmatpush1.msra.mxu0 %v1001
        %1298 = vmatprep.subr.mxu0 %v1004
        %1299 = vmatpush1.msra.mxu0 %v1003
        %1300 = vmatprep.subr.mxu0 %v1006
        %1301 = vmatpush1.msra.mxu0 %v1005
        %1302 = vmatprep.subr.mxu0 %v1008
        %1303 = vmatpush1.msra.mxu0 %v1007
        %1304 = vmatprep.subr.mxu0 %v1010
        %1305 = vmatpush1.msra.mxu0 %v1009
        %1306 = vmatprep.subr.mxu0 %v1012
        %1307 = vmatpush1.msra.mxu0 %v1011
        %1308 = vmatprep.subr.mxu0 %v1014
        %1309 = vmatpush1.msra.mxu0 %v1013
        %1310 = vmatprep.subr.mxu0 %v1016
        %1311 = vmatpush1.msra.mxu0 %v1015
        %1312 = vmatprep.subr.mxu0 %v1018
        %1313 = vmatpush1.msra.mxu0 %v1017
        %1314 = vmatprep.subr.mxu0 %v1020
        %1315 = vmatpush1.msra.mxu0 %v1019
        %1316 = vmatprep.subr.mxu0 %v1022
        %1317 = vmatpush1.msra.mxu0 %v1021
        %1318 = vmatprep.subr.mxu0 %v1024
        %1319 = vmatpush1.msra.mxu0 %v1023
        %1320 = vmatprep.subr.mxu0 %v1026
        %1321 = vmatpush1.msra.mxu0 %v1025
        %1322 = vmatprep.subr.mxu0 %v1028
        %1323 = vmatpush1.msra.mxu0 %v1027
        %1324 = vmatprep.subr.mxu0 %v1030
        %1325 = vmatpush1.msra.mxu0 %v1029
        %1326 = vmatprep.subr.mxu0 %v1032
        %1327 = vmatpush1.msra.mxu0 %v1031
        %1328 = vmatprep.subr.mxu0 %v1034
        %1329 = vmatpush1.msra.mxu0 %v1033
        %1330 = vmatprep.subr.mxu0 %v1036
        %1331 = vmatpush1.msra.mxu0 %v1035
        %1332 = vmatprep.subr.mxu0 %v1038
        %1333 = vmatpush1.msra.mxu0 %v1037
        %1334 = vmatprep.subr.mxu0 %v1040
        %1335 = vmatpush1.msra.mxu0 %v1039
        %1336 = vmatprep.subr.mxu0 %v1042
        %1337 = vmatpush1.msra.mxu0 %v1041
        %1338 = vmatprep.subr.mxu0 %v1044
        %1339 = vmatpush1.msra.mxu0 %v1043
        %1340 = vmatprep.subr.mxu0 %v1046
        %1341 = vmatpush1.msra.mxu0 %v1045
        %1342 = vmatprep.subr.mxu0 %v1048
        %1343 = vmatpush1.msra.mxu0 %v1047
        %1344 = vmatprep.subr.mxu0 %v1050
        %1345 = vmatpush1.msra.mxu0 %v1049
        %1346 = vmatprep.subr.mxu0 %v1052
        %1347 = vmatpush1.msra.mxu0 %v1051
        %1348 = vmatprep.mubr.f32.mxu0 %v919
        %1349 = vmatmul.mubr.f32.gmra.mrb[0].mxu0 %v918
        %v1350 = vpop.f32.mrb[0].mxu0
        %v1351 = vadd.f32 %v1280, %v1350
        %v1352 = vpop.f32.mrb[0].mxu0
        %v1353 = vadd.f32 %v1282, %v1352
        %1354 = vdwg.mxu0
        %1355 = vmatprep.subr.mxu0 %v1054
        %1356 = vmatpush1.msra.mxu0 %v1053
        %1357 = vmatprep.subr.mxu0 %v1056
        %1358 = vmatpush1.msra.mxu0 %v1055
        %1359 = vmatprep.subr.mxu0 %v1058
        %1360 = vmatpush1.msra.mxu0 %v1057
        %1361 = vmatprep.subr.mxu0 %v1060
        %1362 = vmatpush1.msra.mxu0 %v1059
        %1363 = vmatprep.subr.mxu0 %v1062
        %1364 = vmatpush1.msra.mxu0 %v1061
        %1365 = vmatprep.subr.mxu0 %v1064
        %1366 = vmatpush1.msra.mxu0 %v1063
        %1367 = vmatprep.subr.mxu0 %v1066
        %1368 = vmatpush1.msra.mxu0 %v1065
        %1369 = vmatprep.subr.mxu0 %v1068
        %1370 = vmatpush1.msra.mxu0 %v1067
        %1371 = vmatprep.subr.mxu0 %v1070
        %1372 = vmatpush1.msra.mxu0 %v1069
        %1373 = vmatprep.subr.mxu0 %v1072
        %1374 = vmatpush1.msra.mxu0 %v1071
        %1375 = vmatprep.subr.mxu0 %v1074
        %1376 = vmatpush1.msra.mxu0 %v1073
        %1377 = vmatprep.subr.mxu0 %v1076
        %1378 = vmatpush1.msra.mxu0 %v1075
        %1379 = vmatprep.subr.mxu0 %v1078
        %1380 = vmatpush1.msra.mxu0 %v1077
        %1381 = vmatprep.subr.mxu0 %v1080
        %1382 = vmatpush1.msra.mxu0 %v1079
        %1383 = vmatprep.subr.mxu0 %v1082
        %1384 = vmatpush1.msra.mxu0 %v1081
        %1385 = vmatprep.subr.mxu0 %v1084
        %1386 = vmatpush1.msra.mxu0 %v1083
        %1387 = vmatprep.subr.mxu0 %v1086
        %1388 = vmatpush1.msra.mxu0 %v1085
        %1389 = vmatprep.subr.mxu0 %v1088
        %1390 = vmatpush1.msra.mxu0 %v1087
        %1391 = vmatprep.subr.mxu0 %v1090
        %1392 = vmatpush1.msra.mxu0 %v1089
        %1393 = vmatprep.subr.mxu0 %v1092
        %1394 = vmatpush1.msra.mxu0 %v1091
        %1395 = vmatprep.subr.mxu0 %v1094
        %1396 = vmatpush1.msra.mxu0 %v1093
        %1397 = vmatprep.subr.mxu0 %v1096
        %1398 = vmatpush1.msra.mxu0 %v1095
        %1399 = vmatprep.subr.mxu0 %v1098
        %1400 = vmatpush1.msra.mxu0 %v1097
        %1401 = vmatprep.subr.mxu0 %v1100
        %1402 = vmatpush1.msra.mxu0 %v1099
        %1403 = vmatprep.subr.mxu0 %v1102
        %1404 = vmatpush1.msra.mxu0 %v1101
        %1405 = vmatprep.subr.mxu0 %v1104
        %1406 = vmatpush1.msra.mxu0 %v1103
        %1407 = vmatprep.subr.mxu0 %v1106
        %1408 = vmatpush1.msra.mxu0 %v1105
        %1409 = vmatprep.subr.mxu0 %v1108
        %1410 = vmatpush1.msra.mxu0 %v1107
        %1411 = vmatprep.subr.mxu0 %v1110
        %1412 = vmatpush1.msra.mxu0 %v1109
        %1413 = vmatprep.subr.mxu0 %v1112
        %1414 = vmatpush1.msra.mxu0 %v1111
        %1415 = vmatprep.subr.mxu0 %v1114
        %1416 = vmatpush1.msra.mxu0 %v1113
        %1417 = vmatprep.subr.mxu0 %v1116
        %1418 = vmatpush1.msra.mxu0 %v1115
        %1419 = vmatprep.mubr.f32.mxu0 %v921
        %1420 = vmatmul.mubr.f32.gmra.mrb[0].mxu0 %v920
        %v1421 = vpop.f32.mrb[0].mxu0
        %v1422 = vadd.f32 %v1351, %v1421
        %v1423 = vpop.f32.mrb[0].mxu0
        %v1424 = vadd.f32 %v1353, %v1423
        %1425 = vdwg.mxu0
        %1426 = vmatprep.subr.mxu0 %v1118
        %1427 = vmatpush1.msra.mxu0 %v1117
        %1428 = vmatprep.subr.mxu0 %v1120
        %1429 = vmatpush1.msra.mxu0 %v1119
        %1430 = vmatprep.subr.mxu0 %v1122
        %1431 = vmatpush1.msra.mxu0 %v1121
        %1432 = vmatprep.subr.mxu0 %v1124
        %1433 = vmatpush1.msra.mxu0 %v1123
        %1434 = vmatprep.subr.mxu0 %v1126
        %1435 = vmatpush1.msra.mxu0 %v1125
        %1436 = vmatprep.subr.mxu0 %v1128
        %1437 = vmatpush1.msra.mxu0 %v1127
        %1438 = vmatprep.subr.mxu0 %v1130
        %1439 = vmatpush1.msra.mxu0 %v1129
        %1440 = vmatprep.subr.mxu0 %v1132
        %1441 = vmatpush1.msra.mxu0 %v1131
        %1442 = vmatprep.subr.mxu0 %v1134
        %1443 = vmatpush1.msra.mxu0 %v1133
        %1444 = vmatprep.subr.mxu0 %v1136
        %1445 = vmatpush1.msra.mxu0 %v1135
        %1446 = vmatprep.subr.mxu0 %v1138
        %1447 = vmatpush1.msra.mxu0 %v1137
        %1448 = vmatprep.subr.mxu0 %v1140
        %1449 = vmatpush1.msra.mxu0 %v1139
        %1450 = vmatprep.subr.mxu0 %v1142
        %1451 = vmatpush1.msra.mxu0 %v1141
        %1452 = vmatprep.subr.mxu0 %v1144
        %1453 = vmatpush1.msra.mxu0 %v1143
        %1454 = vmatprep.subr.mxu0 %v1146
        %1455 = vmatpush1.msra.mxu0 %v1145
        %1456 = vmatprep.subr.mxu0 %v1148
        %1457 = vmatpush1.msra.mxu0 %v1147
        %1458 = vmatprep.subr.mxu0 %v1150
        %1459 = vmatpush1.msra.mxu0 %v1149
        %1460 = vmatprep.subr.mxu0 %v1152
        %1461 = vmatpush1.msra.mxu0 %v1151
        %1462 = vmatprep.subr.mxu0 %v1154
        %1463 = vmatpush1.msra.mxu0 %v1153
        %1464 = vmatprep.subr.mxu0 %v1156
        %1465 = vmatpush1.msra.mxu0 %v1155
        %1466 = vmatprep.subr.mxu0 %v1158
        %1467 = vmatpush1.msra.mxu0 %v1157
        %1468 = vmatprep.subr.mxu0 %v1160
        %1469 = vmatpush1.msra.mxu0 %v1159
        %1470 = vmatprep.subr.mxu0 %v1162
        %1471 = vmatpush1.msra.mxu0 %v1161
        %1472 = vmatprep.subr.mxu0 %v1164
        %1473 = vmatpush1.msra.mxu0 %v1163
        %1474 = vmatprep.subr.mxu0 %v1166
        %1475 = vmatpush1.msra.mxu0 %v1165
        %1476 = vmatprep.subr.mxu0 %v1168
        %1477 = vmatpush1.msra.mxu0 %v1167
        %1478 = vmatprep.subr.mxu0 %v1170
        %1479 = vmatpush1.msra.mxu0 %v1169
        %1480 = vmatprep.subr.mxu0 %v1172
        %1481 = vmatpush1.msra.mxu0 %v1171
        %1482 = vmatprep.subr.mxu0 %v1174
        %1483 = vmatpush1.msra.mxu0 %v1173
        %1484 = vmatprep.subr.mxu0 %v1176
        %1485 = vmatpush1.msra.mxu0 %v1175
        %1486 = vmatprep.subr.mxu0 %v1178
        %1487 = vmatpush1.msra.mxu0 %v1177
        %1488 = vmatprep.subr.mxu0 %v1180
        %1489 = vmatpush1.msra.mxu0 %v1179
        %1490 = vmatprep.mubr.f32.mxu0 %v923
        %1491 = vmatmul.mubr.f32.gmra.mrb[0].mxu0 %v922
        %v1492 = vpop.f32.mrb[0].mxu0
        %v1493 = vadd.f32 %v1422, %v1492
        %v1494 = vpop.f32.mrb[0].mxu0
        %v1495 = vadd.f32 %v1424, %v1494
        %1496 = vdwg.mxu0
        %1497 = vmatprep.subr.mxu0 %v1182
        %1498 = vmatpush1.msra.mxu0 %v1181
        %1499 = vmatprep.subr.mxu0 %v1184
        %1500 = vmatpush1.msra.mxu0 %v1183
        %1501 = vmatprep.subr.mxu0 %v1186
        %1502 = vmatpush1.msra.mxu0 %v1185
        %1503 = vmatprep.subr.mxu0 %v1188
        %1504 = vmatpush1.msra.mxu0 %v1187
        %1505 = vmatprep.subr.mxu0 %v1190
        %1506 = vmatpush1.msra.mxu0 %v1189
        %1507 = vmatprep.subr.mxu0 %v1192
        %1508 = vmatpush1.msra.mxu0 %v1191
        %1509 = vmatprep.subr.mxu0 %v1194
        %1510 = vmatpush1.msra.mxu0 %v1193
        %1511 = vmatprep.subr.mxu0 %v1196
        %1512 = vmatpush1.msra.mxu0 %v1195
        %1513 = vmatprep.subr.mxu0 %v1198
        %1514 = vmatpush1.msra.mxu0 %v1197
        %1515 = vmatprep.subr.mxu0 %v1200
        %1516 = vmatpush1.msra.mxu0 %v1199
        %1517 = vmatprep.subr.mxu0 %v1202
        %1518 = vmatpush1.msra.mxu0 %v1201
        %1519 = vmatprep.subr.mxu0 %v1204
        %1520 = vmatpush1.msra.mxu0 %v1203
        %1521 = vmatprep.subr.mxu0 %v1206
        %1522 = vmatpush1.msra.mxu0 %v1205
        %1523 = vmatprep.subr.mxu0 %v1208
        %1524 = vmatpush1.msra.mxu0 %v1207
        %1525 = vmatprep.subr.mxu0 %v1210
        %1526 = vmatpush1.msra.mxu0 %v1209
        %1527 = vmatprep.subr.mxu0 %v1212
        %1528 = vmatpush1.msra.mxu0 %v1211
        %1529 = vmatprep.subr.mxu0 0.0
        %1530 = vmatpush1.msra.mxu0 0.0
        %1531 = vmatprep.subr.mxu0 0.0
        %1532 = vmatpush1.msra.mxu0 0.0
        %1533 = vmatprep.subr.mxu0 0.0
        %1534 = vmatpush1.msra.mxu0 0.0
        %1535 = vmatprep.subr.mxu0 0.0
        %1536 = vmatpush1.msra.mxu0 0.0
        %1537 = vmatprep.subr.mxu0 0.0
        %1538 = vmatpush1.msra.mxu0 0.0
        %1539 = vmatprep.subr.mxu0 0.0
        %1540 = vmatpush1.msra.mxu0 0.0
        %1541 = vmatprep.subr.mxu0 0.0
        %1542 = vmatpush1.msra.mxu0 0.0
        %1543 = vmatprep.subr.mxu0 0.0
        %1544 = vmatpush1.msra.mxu0 0.0
        %1545 = vmatprep.subr.mxu0 0.0
        %1546 = vmatpush1.msra.mxu0 0.0
        %1547 = vmatprep.subr.mxu0 0.0
        %1548 = vmatpush1.msra.mxu0 0.0
        %1549 = vmatprep.subr.mxu0 0.0
        %1550 = vmatpush1.msra.mxu0 0.0
        %1551 = vmatprep.subr.mxu0 0.0
        %1552 = vmatpush1.msra.mxu0 0.0
        %1553 = vmatprep.subr.mxu0 0.0
        %1554 = vmatpush1.msra.mxu0 0.0
        %1555 = vmatprep.subr.mxu0 0.0
        %1556 = vmatpush1.msra.mxu0 0.0
        %1557 = vmatprep.subr.mxu0 0.0
        %1558 = vmatpush1.msra.mxu0 0.0
        %1559 = vmatprep.subr.mxu0 0.0
        %1560 = vmatpush1.msra.mxu0 0.0
        %1561 = vmatprep.mubr.f32.mxu0 0.0
        %1562 = vmatmul.mubr.f32.gmra.mrb[0].mxu0 %v924
        %v1563 = vpop.f32.mrb[0].mxu0
        %v1564 = vadd.f32 %v1493, %v1563
        %v1565 = vpop.f32.mrb[0].mxu0
        %v1566 = vadd.f32 %v1495, %v1565
        %1567 = vdwg.mxu0
        %v1568 = vadd.f32 %v914, %v1564
        %v1569 = vadd.f32 %v915, %v1566
        %1570 = vst [vmem:[#allocation2] sm:$0xff] %v1568
        %1571 = vst [vmem:[#allocation2 + $0x8] sm:$0xff] %v1569
        %p1572 = scmp.eq.s32.totalorder %s23, 1
        // Predicated region
        $region60: #{custom_fe_forward.6} parent=50 // pred_check
          %p1573 = pneg %p1572
        $region61: #{custom_fe_forward.6} parent=50 // pred_check_branch
          %1575 = sbr.rel (%p1573) target = $region63
        $region62: #{custom_fe_forward.6} parent=50 // pred_region
          %v1576 = vld [vmem:[#allocation2] sm:$0xff]
          %v1577 = vld [vmem:[#allocation2 + $0x8] sm:$0xff]
          %v1578 = vld [vmem:[%s886] sm:$0x3]
          %v1580 = vlaneseq
          %v1581 = vshrl.u32 %v1580, 7
          %v1582 = vsub.s32 0, %v1581
          %v1583 = vrot.slane %v1578, %v1582
          %v1584 = vlaneseq
          %v1585 = vshrl.u32 %v1584, 7
          %v1586 = vsub.s32 1, %v1585
          %v1587 = vrot.slane %v1578, %v1586
          %v1590 = vadd.f32 %v1576, %v1583
          %v1591 = vadd.f32 %v1577, %v1587
          %1592 = vst [vmem:[%s896] sm:$0xff] %v1590
          %1593 = vst [vmem:[%s896 + $0x8] sm:$0xff] %v1591
          %v1594 = vmax.f32 %v1590, 0.0
          %v1595 = vmax.f32 %v1591, 0.0
          %1596 = vst [vmem:[%s906] sm:$0xff] %v1594
          %1597 = vst [vmem:[%s906 + $0x8] sm:$0xff] %v1595
        $region63: #{custom_fe_forward.6} parent=50 // pred_fallthru
          _
        %s1598 = smul.u32 2, %s22
        %p1599 = scmp.lt.s32.totalorder %s21, 0
        %s1600 = scalar_select %p1599, %s21, 0
        %p1601 = scmp.lt.s32.totalorder %s1598, 3
        %s1602 = scalar_select %p1601, %s1598, 3
        %s1603 = smul.addr %s1600, 4
        %s1604 = sadd.s32 %s1602, %s1603
        %s1605 = smul.addr %s1604, 8
        %s1606 = scalar_lea.vmem %s3, %s1605
        %s1607 = smul.u32 2, %s22
        %p1608 = scmp.lt.s32.totalorder %s21, 0
        %s1609 = scalar_select %p1608, %s21, 0
        %p1610 = scmp.lt.s32.totalorder %s1607, 3
        %s1611 = scalar_select %p1610, %s1607, 3
        %s1612 = smul.addr %s1609, 4
        %s1613 = sadd.s32 %s1611, %s1612
        %s1614 = smul.addr %s1613, 8
        %s1615 = scalar_lea.vmem %s4, %s1614
        // Predicated region
        $region64: #{custom_fe_forward.6} parent=50 // pred_check
          %p1616 = pneg %p137
        $region65: #{custom_fe_forward.6} parent=50 // pred_check_branch
          %1618 = sbr.rel (%p1616) target = $region67
        $region66: #{custom_fe_forward.6} parent=50 // pred_region
          %s1619 = smul.u32 2, %s22
        $region67: #{custom_fe_forward.6} parent=50 // pred_fallthru
          _
        // Predicated region
        $region68: #{custom_fe_forward.6} parent=50 // pred_check
          %p1620 = pneg %p165
        $region69: #{custom_fe_forward.6} parent=50 // pred_check_branch
          %1622 = sbr.rel (%p1620) target = $region71
        $region70: #{custom_fe_forward.6} parent=50 // pred_region
          %s1623 = smul.u32 2, %s22
        $region71: #{custom_fe_forward.6} parent=50 // pred_fallthru
          _
      $region51: #{custom_fe_forward.6} parent=5 // pred_fallthru
        _
      %p1624 = scmp.le.s32.totalorder 2, %s11
      // Predicated region
      $region72: #{custom_fe_forward.6} parent=5 // pred_check
        %p1625 = pneg %p1624
      $region73: #{custom_fe_forward.6} parent=5 // pred_check_branch
        %1627 = sbr.rel (%p1625) target = $region75
      $region74: #{custom_fe_forward.6} parent=5 // pred_region
        %s1628 = ssub.s32 %s11, 2
        // Predicated region
        $region76: #{custom_fe_forward.6} parent=74 // pred_check
          %p1629 = pneg %p143
        $region77: #{custom_fe_forward.6} parent=74 // pred_check_branch
          %1631 = sbr.rel (%p1629) target = $region79
        $region78: #{custom_fe_forward.6} parent=74 // pred_region
          %s1632 = smul.u32 2, %s25
          %p1633 = scmp.lt.s32.totalorder %s24, 0
          %s1634 = scalar_select %p1633, %s24, 0
          %p1635 = scmp.lt.s32.totalorder %s1632, 3
          %s1636 = scalar_select %p1635, %s1632, 3
          %s1637 = smul.addr %s1634, 4
          %s1638 = sadd.s32 %s1636, %s1637
          %s1639 = smul.addr %s1638, 8
          %s1640 = scalar_lea.vmem %s3, %s1639
        $region79: #{custom_fe_forward.6} parent=74 // pred_fallthru
          _
        // Predicated region
        $region80: #{custom_fe_forward.6} parent=74 // pred_check
          %p1641 = pneg %p171
        $region81: #{custom_fe_forward.6} parent=74 // pred_check_branch
          %1643 = sbr.rel (%p1641) target = $region83
        $region82: #{custom_fe_forward.6} parent=74 // pred_region
          %s1644 = smul.u32 2, %s25
          %p1645 = scmp.lt.s32.totalorder %s24, 0
          %s1646 = scalar_select %p1645, %s24, 0
          %p1647 = scmp.lt.s32.totalorder %s1644, 3
          %s1648 = scalar_select %p1647, %s1644, 3
          %s1649 = smul.addr %s1646, 4
          %s1650 = sadd.s32 %s1648, %s1649
          %s1651 = smul.addr %s1650, 8
          %s1652 = scalar_lea.vmem %s4, %s1651
        $region83: #{custom_fe_forward.6} parent=74 // pred_fallthru
          _
      $region75: #{custom_fe_forward.6} parent=5 // pred_fallthru
        _
    $region6: #{custom_fe_forward.6} parent=1 // loop_footer
      %s15 = sadd.s32 1, %s11
    $region7: #{custom_fe_forward.6} parent=1 // loop_footer_branch
      %10 = sbr.rel target = $region3
    $region8: #{custom_fe_forward.6} parent=1 // loop_exit
      _

// kernel: custom_fe_forward.7
$region0: #{custom_fe_forward.7}
  #allocation0 [shape = 'u32[]', space=smem, size = 0x4, offset = 0x4, fixed_abs, tag = 'smem constant byte address 0x4 - core index']
  #allocation1 [shape = 'u32[144,128]{1,0:T(1,128)}', space=vmem, size = 0x12000, scoped, tag = 'internal scratch']
  #allocation2 [shape = 'f32[8,256]{1,0:T(8,128)}', space=vmem, size = 0x2000, scoped, tag = 'scratch operand']
  %s0 = inlined_call_operand.vmem [shape: f32[8,4608], index: 0, kind: input, shape index: {}]
  %s1 = inlined_call_operand.vmem [shape: f32[4608,512], index: 1, kind: input, shape index: {}]
  %s2 = inlined_call_operand.vmem [shape: f32[1,512], index: 2, kind: input, shape index: {}]
  %s3 = inlined_call_operand.vmem [shape: f32[8,512], index: 3, kind: output, shape index: {}]
  %s4 = sld [smem:[#allocation0]]
  $region76: #{custom_fe_forward.7} parent=0
    _
  %s6 = ssub.s32 1, %s4
  %s7 = scalar_select 0, %s6, %s4
  $region1: #{custom_fe_forward.7} parent=0
    #allocation3 [shape = 'u8[2359296]{0}', space=vmem, size = 0x240000, scoped, tag = 'input window, operand 1']
    loop: start=0, step=1, limit=10
    $region2: #{custom_fe_forward.7} parent=1 // loop_pre_header
      _
    $region3: #{custom_fe_forward.7} parent=1 // loop_header
      %s9 = sphi 0, %s13
      %p10 = scmp.ge.s32.totalorder %s9, 10
      %s16 = sphi 0, %s35
      %s17 = sphi 0, %s31
      %s18 = sphi 0, %s27
      %s19 = sphi 0, %s16
      %s20 = sphi 0, %s17
      %s21 = sphi 0, %s18
      %s22 = sphi 0, %s19
      %s23 = sphi 0, %s20
      %s24 = sphi 0, %s21
      %s40 = sphi 0, %s42
      %s43 = sphi 0, %s40
      %s44 = sphi 0, %s43
      %s60 = sphi 0, %s44
      %s68 = sphi 0, %s70
      %s71 = sphi 0, %s68
      %s72 = sphi 0, %s71
      %s88 = sphi 0, %s72
      %s94 = sphi 0, %s96
      %s97 = sphi 0, %s94
      %s98 = sphi 0, %s97
      %s114 = sphi 0, %s98
      %s122 = sphi 0, %s124
      %s125 = sphi 0, %s122
      %s126 = sphi 0, %s125
      %s142 = sphi 0, %s126
    $region4: #{custom_fe_forward.7} parent=1 // loop_header_branch
      %12 = sbr.rel (%p10) target = $region8
    $region5: #{custom_fe_forward.7} parent=1 // loop_body
      %s14 = ssub.s32 %s9, 1
      %s15 = ssub.s32 %s9, 2
      %s25 = sadd.s32 1, %s18
      %p26 = scmp.ge.s32.totalorder %s25, 4
      %s27 = scalar_select %p26, 0, %s25
      %s28 = sadd.s32 1, %s17
      %s29 = scalar_select %p26, %s28, %s17
      %p30 = scmp.ge.s32.totalorder %s29, 2
      %s31 = scalar_select %p30, 0, %s29
      %s32 = sadd.s32 1, %s16
      %s33 = scalar_select %p30, %s32, %s16
      %p34 = scmp.ge.s32.totalorder %s33, 1
      %s35 = scalar_select %p34, 0, %s33
      %s36 = ssub.s32 %s16, %s35
      %s37 = ssub.s32 %s18, %s27
      %s38 = sor.u32 %s36, %s37
      %p39 = scmp.eq.s32.totalorder %s38, 0
      %s41 = sadd.s32 %s40, 1
      %s42 = scalar_select %p39, %s40, %s41
      %p45 = pneg %p39
      %p46 = scmp.eq.s32.totalorder %s9, 7
      %p47 = por %p45, %p46
      %p48 = scmp.ne.s32.totalorder %s40, %s43
      %p49 = scmp.eq.s32.totalorder %s9, 0
      %p50 = por %p48, %p49
      %p51 = scmp.ne.s32.totalorder %s40, %s43
      %p52 = scmp.eq.s32.totalorder %s14, 7
      %p53 = por %p51, %p52
      %p54 = scmp.ne.s32.totalorder %s43, %s44
      %p55 = scmp.eq.s32.totalorder %s14, 0
      %p56 = por %p54, %p55
      %p57 = scmp.ne.s32.totalorder %s43, %s44
      %p58 = scmp.eq.s32.totalorder %s15, 7
      %p59 = por %p57, %p58
      %p61 = scmp.ne.s32.totalorder %s44, %s60
      %p62 = scmp.eq.s32.totalorder %s15, 0
      %p63 = por %p61, %p62
      %s64 = ssub.s32 %s18, %s27
      %s65 = ssub.s32 %s17, %s31
      %s66 = sor.u32 %s64, %s65
      %p67 = scmp.eq.s32.totalorder %s66, 0
      %s69 = sadd.s32 %s68, 1
      %s70 = scalar_select %p67, %s68, %s69
      %p73 = pneg %p67
      %p74 = scmp.eq.s32.totalorder %s9, 7
      %p75 = por %p73, %p74
      %p76 = scmp.ne.s32.totalorder %s68, %s71
      %p77 = scmp.eq.s32.totalorder %s9, 0
      %p78 = por %p76, %p77
      %p79 = scmp.ne.s32.totalorder %s68, %s71
      %p80 = scmp.eq.s32.totalorder %s14, 7
      %p81 = por %p79, %p80
      %p82 = scmp.ne.s32.totalorder %s71, %s72
      %p83 = scmp.eq.s32.totalorder %s14, 0
      %p84 = por %p82, %p83
      %p85 = scmp.ne.s32.totalorder %s71, %s72
      %p86 = scmp.eq.s32.totalorder %s15, 7
      %p87 = por %p85, %p86
      %p89 = scmp.ne.s32.totalorder %s72, %s88
      %p90 = scmp.eq.s32.totalorder %s15, 0
      %p91 = por %p89, %p90
      %s92 = ssub.s32 %s17, %s31
      %p93 = scmp.eq.s32.totalorder %s92, 0
      %s95 = sadd.s32 %s94, 1
      %s96 = scalar_select %p93, %s94, %s95
      %p99 = pneg %p93
      %p100 = scmp.eq.s32.totalorder %s9, 7
      %p101 = por %p99, %p100
      %p102 = scmp.ne.s32.totalorder %s94, %s97
      %p103 = scmp.eq.s32.totalorder %s9, 0
      %p104 = por %p102, %p103
      %p105 = scmp.ne.s32.totalorder %s94, %s97
      %p106 = scmp.eq.s32.totalorder %s14, 7
      %p107 = por %p105, %p106
      %p108 = scmp.ne.s32.totalorder %s97, %s98
      %p109 = scmp.eq.s32.totalorder %s14, 0
      %p110 = por %p108, %p109
      %p111 = scmp.ne.s32.totalorder %s97, %s98
      %p112 = scmp.eq.s32.totalorder %s15, 7
      %p113 = por %p111, %p112
      %p115 = scmp.ne.s32.totalorder %s98, %s114
      %p116 = scmp.eq.s32.totalorder %s15, 0
      %p117 = por %p115, %p116
      %s118 = ssub.s32 %s16, %s35
      %s119 = ssub.s32 %s17, %s31
      %s120 = sor.u32 %s118, %s119
      %p121 = scmp.eq.s32.totalorder %s120, 0
      %s123 = sadd.s32 %s122, 1
      %s124 = scalar_select %p121, %s122, %s123
      %p127 = pneg %p121
      %p128 = scmp.eq.s32.totalorder %s9, 7
      %p129 = por %p127, %p128
      %p130 = scmp.ne.s32.totalorder %s122, %s125
      %p131 = scmp.eq.s32.totalorder %s9, 0
      %p132 = por %p130, %p131
      %p133 = scmp.ne.s32.totalorder %s122, %s125
      %p134 = scmp.eq.s32.totalorder %s14, 7
      %p135 = por %p133, %p134
      %p136 = scmp.ne.s32.totalorder %s125, %s126
      %p137 = scmp.eq.s32.totalorder %s14, 0
      %p138 = por %p136, %p137
      %p139 = scmp.ne.s32.totalorder %s125, %s126
      %p140 = scmp.eq.s32.totalorder %s15, 7
      %p141 = por %p139, %p140
      %p143 = scmp.ne.s32.totalorder %s126, %s142
      %p144 = scmp.eq.s32.totalorder %s15, 0
      %p145 = por %p143, %p144
      %p146 = scmp.le.s32.totalorder 1, %s9
      %p147 = scmp.lt.s32.totalorder %s9, 9
      %p148 = pnand %p146, %p147
      %p149 = pneg %p148
      // Predicated region
      $region9: #{custom_fe_forward.7} parent=5 // pred_check
        _
      $region10: #{custom_fe_forward.7} parent=5 // pred_check_branch
        %151 = sbr.rel (%p148) target = $region12
      $region11: #{custom_fe_forward.7} parent=5 // pred_region
        %s152 = ssub.s32 %s9, 1
      $region12: #{custom_fe_forward.7} parent=5 // pred_fallthru
        _
      %p153 = scmp.lt.s32.totalorder %s9, 8
      // Predicated region
      $region13: #{custom_fe_forward.7} parent=5 // pred_check
        %p154 = pneg %p153
      $region14: #{custom_fe_forward.7} parent=5 // pred_check_branch
        %156 = sbr.rel (%p154) target = $region16
      $region15: #{custom_fe_forward.7} parent=5 // pred_region
        // Predicated region
        $region17: #{custom_fe_forward.7} parent=15 // pred_check
          %p157 = pneg %p50
        $region18: #{custom_fe_forward.7} parent=15 // pred_check_branch
          %159 = sbr.rel (%p157) target = $region20
        $region19: #{custom_fe_forward.7} parent=15 // pred_region
          %s160 = smul.u32 9, %s18
          %p161 = scmp.lt.s32.totalorder %s16, 0
          %s162 = scalar_select %p161, %s16, 0
          %p163 = scmp.lt.s32.totalorder %s160, 35
          %s164 = scalar_select %p163, %s160, 35
          %s165 = smul.addr %s162, 36
          %s166 = sadd.s32 %s164, %s165
          %s167 = smul.addr %s166, 8
          %s168 = scalar_lea.vmem %s0, %s167
          %s169 = smul.u32 9, %s18
        $region20: #{custom_fe_forward.7} parent=15 // pred_fallthru
          _
        // Predicated region
        $region21: #{custom_fe_forward.7} parent=15 // pred_check
          %p170 = pneg %p78
        $region22: #{custom_fe_forward.7} parent=15 // pred_check_branch
          %172 = sbr.rel (%p170) target = $region24
        $region23: #{custom_fe_forward.7} parent=15 // pred_region
          %s173 = sand.u32 %s68, 1
          %s174 = sand.u32 %s68, 1
          %s175 = smul.addr %s174, 2304
          %s176 = scalar_lea.vmem [#allocation3], %s175
          %s177 = smul.u32 144, %s18
          %s178 = smul.u32 2, %s17
          %s179 = smul.addr %s177, 4
          %s180 = sadd.s32 %s178, %s179
          %s181 = smul.addr %s180, 8
          %s182 = scalar_lea.vmem %s1, %s181
          // Predicated region
          $region25: #{custom_fe_forward.7} parent=23 // pred_check
            _
          $region26: #{custom_fe_forward.7} parent=23 // pred_check_branch
            %184 = sbr.rel (0) target = $region28
          $region27: #{custom_fe_forward.7} parent=23 // pred_region
            // Predicated region
            $region29: #{custom_fe_forward.7} parent=27 // pred_check
              _
            $region30: #{custom_fe_forward.7} parent=27 // pred_check_branch
              %186 = sbr.rel (0) target = $region32
            $region31: #{custom_fe_forward.7} parent=27 // pred_region
              loop: start=0, step=1, limit=1
              $region33: #{custom_fe_forward.7} parent=31 // loop_pre_header
                _
              $region34: #{custom_fe_forward.7} parent=31 // loop_header
                %s188 = sphi 0, %s192
                %p189 = scmp.ge.s32.totalorder %s188, 1
                %s193 = sphi %s182, %s182
                %s194 = sphi %s176, %s176
              $region35: #{custom_fe_forward.7} parent=31 // loop_header_branch
                %191 = sbr.rel (%p189) target = $region39
              $region36: #{custom_fe_forward.7} parent=31 // loop_body
                %v195 = vld [vmem:[%s193] sm:$0xff]
                %196 = vst [vmem:[%s194] sm:$0xff] %v195
                %v197 = vld [vmem:[%s193 + $0x8] sm:$0xff]
                %198 = vst [vmem:[%s194 + $0x8] sm:$0xff] %v197
                %v199 = vld [vmem:[%s193 + $0x20] sm:$0xff]
                %200 = vst [vmem:[%s194 + $0x10] sm:$0xff] %v199
                %v201 = vld [vmem:[%s193 + $0x28] sm:$0xff]
                %202 = vst [vmem:[%s194 + $0x18] sm:$0xff] %v201
                %v203 = vld [vmem:[%s193 + $0x40] sm:$0xff]
                %204 = vst [vmem:[%s194 + $0x20] sm:$0xff] %v203
                %v205 = vld [vmem:[%s193 + $0x48] sm:$0xff]
                %206 = vst [vmem:[%s194 + $0x28] sm:$0xff] %v205
                %v207 = vld [vmem:[%s193 + $0x60] sm:$0xff]
                %208 = vst [vmem:[%s194 + $0x30] sm:$0xff] %v207
                %v209 = vld [vmem:[%s193 + $0x68] sm:$0xff]
                %210 = vst [vmem:[%s194 + $0x38] sm:$0xff] %v209
                %v211 = vld [vmem:[%s193 + $0x80] sm:$0xff]
                %212 = vst [vmem:[%s194 + $0x40] sm:$0xff] %v211
                %v213 = vld [vmem:[%s193 + $0x88] sm:$0xff]
                %214 = vst [vmem:[%s194 + $0x48] sm:$0xff] %v213
                %v215 = vld [vmem:[%s193 + $0xa0] sm:$0xff]
                %216 = vst [vmem:[%s194 + $0x50] sm:$0xff] %v215
                %v217 = vld [vmem:[%s193 + $0xa8] sm:$0xff]
                %218 = vst [vmem:[%s194 + $0x58] sm:$0xff] %v217
                %v219 = vld [vmem:[%s193 + $0xc0] sm:$0xff]
                %220 = vst [vmem:[%s194 + $0x60] sm:$0xff] %v219
                %v221 = vld [vmem:[%s193 + $0xc8] sm:$0xff]
                %222 = vst [vmem:[%s194 + $0x68] sm:$0xff] %v221
                %v223 = vld [vmem:[%s193 + $0xe0] sm:$0xff]
                %224 = vst [vmem:[%s194 + $0x70] sm:$0xff] %v223
                %v225 = vld [vmem:[%s193 + $0xe8] sm:$0xff]
                %226 = vst [vmem:[%s194 + $0x78] sm:$0xff] %v225
                %v227 = vld [vmem:[%s193 + $0x100] sm:$0xff]
                %228 = vst [vmem:[%s194 + $0x80] sm:$0xff] %v227
                %v229 = vld [vmem:[%s193 + $0x108] sm:$0xff]
                %230 = vst [vmem:[%s194 + $0x88] sm:$0xff] %v229
                %v231 = vld [vmem:[%s193 + $0x120] sm:$0xff]
                %232 = vst [vmem:[%s194 + $0x90] sm:$0xff] %v231
                %v233 = vld [vmem:[%s193 + $0x128] sm:$0xff]
                %234 = vst [vmem:[%s194 + $0x98] sm:$0xff] %v233
                %v235 = vld [vmem:[%s193 + $0x140] sm:$0xff]
                %236 = vst [vmem:[%s194 + $0xa0] sm:$0xff] %v235
                %v237 = vld [vmem:[%s193 + $0x148] sm:$0xff]
                %238 = vst [vmem:[%s194 + $0xa8] sm:$0xff] %v237
                %v239 = vld [vmem:[%s193 + $0x160] sm:$0xff]
                %240 = vst [vmem:[%s194 + $0xb0] sm:$0xff] %v239
                %v241 = vld [vmem:[%s193 + $0x168] sm:$0xff]
                %242 = vst [vmem:[%s194 + $0xb8] sm:$0xff] %v241
                %v243 = vld [vmem:[%s193 + $0x180] sm:$0xff]
                %244 = vst [vmem:[%s194 + $0xc0] sm:$0xff] %v243
                %v245 = vld [vmem:[%s193 + $0x188] sm:$0xff]
                %246 = vst [vmem:[%s194 + $0xc8] sm:$0xff] %v245
                %v247 = vld [vmem:[%s193 + $0x1a0] sm:$0xff]
                %248 = vst [vmem:[%s194 + $0xd0] sm:$0xff] %v247
                %v249 = vld [vmem:[%s193 + $0x1a8] sm:$0xff]
                %250 = vst [vmem:[%s194 + $0xd8] sm:$0xff] %v249
                %v251 = vld [vmem:[%s193 + $0x1c0] sm:$0xff]
                %252 = vst [vmem:[%s194 + $0xe0] sm:$0xff] %v251
                %v253 = vld [vmem:[%s193 + $0x1c8] sm:$0xff]
                %254 = vst [vmem:[%s194 + $0xe8] sm:$0xff] %v253
                %v255 = vld [vmem:[%s193 + $0x1e0] sm:$0xff]
                %256 = vst [vmem:[%s194 + $0xf0] sm:$0xff] %v255
                %v257 = vld [vmem:[%s193 + $0x1e8] sm:$0xff]
                %258 = vst [vmem:[%s194 + $0xf8] sm:$0xff] %v257
                %v259 = vld [vmem:[%s193 + $0x200] sm:$0xff]
                %260 = vst [vmem:[%s194 + $0x100] sm:$0xff] %v259
                %v261 = vld [vmem:[%s193 + $0x208] sm:$0xff]
                %262 = vst [vmem:[%s194 + $0x108] sm:$0xff] %v261
                %v263 = vld [vmem:[%s193 + $0x220] sm:$0xff]
                %264 = vst [vmem:[%s194 + $0x110] sm:$0xff] %v263
                %v265 = vld [vmem:[%s193 + $0x228] sm:$0xff]
                %266 = vst [vmem:[%s194 + $0x118] sm:$0xff] %v265
                %v267 = vld [vmem:[%s193 + $0x240] sm:$0xff]
                %268 = vst [vmem:[%s194 + $0x120] sm:$0xff] %v267
                %v269 = vld [vmem:[%s193 + $0x248] sm:$0xff]
                %270 = vst [vmem:[%s194 + $0x128] sm:$0xff] %v269
                %v271 = vld [vmem:[%s193 + $0x260] sm:$0xff]
                %272 = vst [vmem:[%s194 + $0x130] sm:$0xff] %v271
                %v273 = vld [vmem:[%s193 + $0x268] sm:$0xff]
                %274 = vst [vmem:[%s194 + $0x138] sm:$0xff] %v273
                %v275 = vld [vmem:[%s193 + $0x280] sm:$0xff]
                %276 = vst [vmem:[%s194 + $0x140] sm:$0xff] %v275
                %v277 = vld [vmem:[%s193 + $0x288] sm:$0xff]
                %278 = vst [vmem:[%s194 + $0x148] sm:$0xff] %v277
                %v279 = vld [vmem:[%s193 + $0x2a0] sm:$0xff]
                %280 = vst [vmem:[%s194 + $0x150] sm:$0xff] %v279
                %v281 = vld [vmem:[%s193 + $0x2a8] sm:$0xff]
                %282 = vst [vmem:[%s194 + $0x158] sm:$0xff] %v281
                %v283 = vld [vmem:[%s193 + $0x2c0] sm:$0xff]
                %284 = vst [vmem:[%s194 + $0x160] sm:$0xff] %v283
                %v285 = vld [vmem:[%s193 + $0x2c8] sm:$0xff]
                %286 = vst [vmem:[%s194 + $0x168] sm:$0xff] %v285
                %v287 = vld [vmem:[%s193 + $0x2e0] sm:$0xff]
                %288 = vst [vmem:[%s194 + $0x170] sm:$0xff] %v287
                %v289 = vld [vmem:[%s193 + $0x2e8] sm:$0xff]
                %290 = vst [vmem:[%s194 + $0x178] sm:$0xff] %v289
                %v291 = vld [vmem:[%s193 + $0x300] sm:$0xff]
                %292 = vst [vmem:[%s194 + $0x180] sm:$0xff] %v291
                %v293 = vld [vmem:[%s193 + $0x308] sm:$0xff]
                %294 = vst [vmem:[%s194 + $0x188] sm:$0xff] %v293
                %v295 = vld [vmem:[%s193 + $0x320] sm:$0xff]
                %296 = vst [vmem:[%s194 + $0x190] sm:$0xff] %v295
                %v297 = vld [vmem:[%s193 + $0x328] sm:$0xff]
                %298 = vst [vmem:[%s194 + $0x198] sm:$0xff] %v297
                %v299 = vld [vmem:[%s193 + $0x340] sm:$0xff]
                %300 = vst [vmem:[%s194 + $0x1a0] sm:$0xff] %v299
                %v301 = vld [vmem:[%s193 + $0x348] sm:$0xff]
                %302 = vst [vmem:[%s194 + $0x1a8] sm:$0xff] %v301
                %v303 = vld [vmem:[%s193 + $0x360] sm:$0xff]
                %304 = vst [vmem:[%s194 + $0x1b0] sm:$0xff] %v303
                %v305 = vld [vmem:[%s193 + $0x368] sm:$0xff]
                %306 = vst [vmem:[%s194 + $0x1b8] sm:$0xff] %v305
                %v307 = vld [vmem:[%s193 + $0x380] sm:$0xff]
                %308 = vst [vmem:[%s194 + $0x1c0] sm:$0xff] %v307
                %v309 = vld [vmem:[%s193 + $0x388] sm:$0xff]
                %310 = vst [vmem:[%s194 + $0x1c8] sm:$0xff] %v309
                %v311 = vld [vmem:[%s193 + $0x3a0] sm:$0xff]
                %312 = vst [vmem:[%s194 + $0x1d0] sm:$0xff] %v311
                %v313 = vld [vmem:[%s193 + $0x3a8] sm:$0xff]
                %314 = vst [vmem:[%s194 + $0x1d8] sm:$0xff] %v313
                %v315 = vld [vmem:[%s193 + $0x3c0] sm:$0xff]
                %316 = vst [vmem:[%s194 + $0x1e0] sm:$0xff] %v315
                %v317 = vld [vmem:[%s193 + $0x3c8] sm:$0xff]
                %318 = vst [vmem:[%s194 + $0x1e8] sm:$0xff] %v317
                %v319 = vld [vmem:[%s193 + $0x3e0] sm:$0xff]
                %320 = vst [vmem:[%s194 + $0x1f0] sm:$0xff] %v319
                %v321 = vld [vmem:[%s193 + $0x3e8] sm:$0xff]
                %322 = vst [vmem:[%s194 + $0x1f8] sm:$0xff] %v321
                %v323 = vld [vmem:[%s193 + $0x400] sm:$0xff]
                %324 = vst [vmem:[%s194 + $0x200] sm:$0xff] %v323
                %v325 = vld [vmem:[%s193 + $0x408] sm:$0xff]
                %326 = vst [vmem:[%s194 + $0x208] sm:$0xff] %v325
                %v327 = vld [vmem:[%s193 + $0x420] sm:$0xff]
                %328 = vst [vmem:[%s194 + $0x210] sm:$0xff] %v327
                %v329 = vld [vmem:[%s193 + $0x428] sm:$0xff]
                %330 = vst [vmem:[%s194 + $0x218] sm:$0xff] %v329
                %v331 = vld [vmem:[%s193 + $0x440] sm:$0xff]
                %332 = vst [vmem:[%s194 + $0x220] sm:$0xff] %v331
                %v333 = vld [vmem:[%s193 + $0x448] sm:$0xff]
                %334 = vst [vmem:[%s194 + $0x228] sm:$0xff] %v333
                %v335 = vld [vmem:[%s193 + $0x460] sm:$0xff]
                %336 = vst [vmem:[%s194 + $0x230] sm:$0xff] %v335
                %v337 = vld [vmem:[%s193 + $0x468] sm:$0xff]
                %338 = vst [vmem:[%s194 + $0x238] sm:$0xff] %v337
                %v339 = vld [vmem:[%s193 + $0x480] sm:$0xff]
                %340 = vst [vmem:[%s194 + $0x240] sm:$0xff] %v339
                %v341 = vld [vmem:[%s193 + $0x488] sm:$0xff]
                %342 = vst [vmem:[%s194 + $0x248] sm:$0xff] %v341
                %v343 = vld [vmem:[%s193 + $0x4a0] sm:$0xff]
                %344 = vst [vmem:[%s194 + $0x250] sm:$0xff] %v343
                %v345 = vld [vmem:[%s193 + $0x4a8] sm:$0xff]
                %346 = vst [vmem:[%s194 + $0x258] sm:$0xff] %v345
                %v347 = vld [vmem:[%s193 + $0x4c0] sm:$0xff]
                %348 = vst [vmem:[%s194 + $0x260] sm:$0xff] %v347
                %v349 = vld [vmem:[%s193 + $0x4c8] sm:$0xff]
                %350 = vst [vmem:[%s194 + $0x268] sm:$0xff] %v349
                %v351 = vld [vmem:[%s193 + $0x4e0] sm:$0xff]
                %352 = vst [vmem:[%s194 + $0x270] sm:$0xff] %v351
                %v353 = vld [vmem:[%s193 + $0x4e8] sm:$0xff]
                %354 = vst [vmem:[%s194 + $0x278] sm:$0xff] %v353
                %v355 = vld [vmem:[%s193 + $0x500] sm:$0xff]
                %356 = vst [vmem:[%s194 + $0x280] sm:$0xff] %v355
                %v357 = vld [vmem:[%s193 + $0x508] sm:$0xff]
                %358 = vst [vmem:[%s194 + $0x288] sm:$0xff] %v357
                %v359 = vld [vmem:[%s193 + $0x520] sm:$0xff]
                %360 = vst [vmem:[%s194 + $0x290] sm:$0xff] %v359
                %v361 = vld [vmem:[%s193 + $0x528] sm:$0xff]
                %362 = vst [vmem:[%s194 + $0x298] sm:$0xff] %v361
                %v363 = vld [vmem:[%s193 + $0x540] sm:$0xff]
                %364 = vst [vmem:[%s194 + $0x2a0] sm:$0xff] %v363
                %v365 = vld [vmem:[%s193 + $0x548] sm:$0xff]
                %366 = vst [vmem:[%s194 + $0x2a8] sm:$0xff] %v365
                %v367 = vld [vmem:[%s193 + $0x560] sm:$0xff]
                %368 = vst [vmem:[%s194 + $0x2b0] sm:$0xff] %v367
                %v369 = vld [vmem:[%s193 + $0x568] sm:$0xff]
                %370 = vst [vmem:[%s194 + $0x2b8] sm:$0xff] %v369
                %v371 = vld [vmem:[%s193 + $0x580] sm:$0xff]
                %372 = vst [vmem:[%s194 + $0x2c0] sm:$0xff] %v371
                %v373 = vld [vmem:[%s193 + $0x588] sm:$0xff]
                %374 = vst [vmem:[%s194 + $0x2c8] sm:$0xff] %v373
                %v375 = vld [vmem:[%s193 + $0x5a0] sm:$0xff]
                %376 = vst [vmem:[%s194 + $0x2d0] sm:$0xff] %v375
                %v377 = vld [vmem:[%s193 + $0x5a8] sm:$0xff]
                %378 = vst [vmem:[%s194 + $0x2d8] sm:$0xff] %v377
                %v379 = vld [vmem:[%s193 + $0x5c0] sm:$0xff]
                %380 = vst [vmem:[%s194 + $0x2e0] sm:$0xff] %v379
                %v381 = vld [vmem:[%s193 + $0x5c8] sm:$0xff]
                %382 = vst [vmem:[%s194 + $0x2e8] sm:$0xff] %v381
                %v383 = vld [vmem:[%s193 + $0x5e0] sm:$0xff]
                %384 = vst [vmem:[%s194 + $0x2f0] sm:$0xff] %v383
                %v385 = vld [vmem:[%s193 + $0x5e8] sm:$0xff]
                %386 = vst [vmem:[%s194 + $0x2f8] sm:$0xff] %v385
                %v387 = vld [vmem:[%s193 + $0x600] sm:$0xff]
                %388 = vst [vmem:[%s194 + $0x300] sm:$0xff] %v387
                %v389 = vld [vmem:[%s193 + $0x608] sm:$0xff]
                %390 = vst [vmem:[%s194 + $0x308] sm:$0xff] %v389
                %v391 = vld [vmem:[%s193 + $0x620] sm:$0xff]
                %392 = vst [vmem:[%s194 + $0x310] sm:$0xff] %v391
                %v393 = vld [vmem:[%s193 + $0x628] sm:$0xff]
                %394 = vst [vmem:[%s194 + $0x318] sm:$0xff] %v393
                %v395 = vld [vmem:[%s193 + $0x640] sm:$0xff]
                %396 = vst [vmem:[%s194 + $0x320] sm:$0xff] %v395
                %v397 = vld [vmem:[%s193 + $0x648] sm:$0xff]
                %398 = vst [vmem:[%s194 + $0x328] sm:$0xff] %v397
                %v399 = vld [vmem:[%s193 + $0x660] sm:$0xff]
                %400 = vst [vmem:[%s194 + $0x330] sm:$0xff] %v399
                %v401 = vld [vmem:[%s193 + $0x668] sm:$0xff]
                %402 = vst [vmem:[%s194 + $0x338] sm:$0xff] %v401
                %v403 = vld [vmem:[%s193 + $0x680] sm:$0xff]
                %404 = vst [vmem:[%s194 + $0x340] sm:$0xff] %v403
                %v405 = vld [vmem:[%s193 + $0x688] sm:$0xff]
                %406 = vst [vmem:[%s194 + $0x348] sm:$0xff] %v405
                %v407 = vld [vmem:[%s193 + $0x6a0] sm:$0xff]
                %408 = vst [vmem:[%s194 + $0x350] sm:$0xff] %v407
                %v409 = vld [vmem:[%s193 + $0x6a8] sm:$0xff]
                %410 = vst [vmem:[%s194 + $0x358] sm:$0xff] %v409
                %v411 = vld [vmem:[%s193 + $0x6c0] sm:$0xff]
                %412 = vst [vmem:[%s194 + $0x360] sm:$0xff] %v411
                %v413 = vld [vmem:[%s193 + $0x6c8] sm:$0xff]
                %414 = vst [vmem:[%s194 + $0x368] sm:$0xff] %v413
                %v415 = vld [vmem:[%s193 + $0x6e0] sm:$0xff]
                %416 = vst [vmem:[%s194 + $0x370] sm:$0xff] %v415
                %v417 = vld [vmem:[%s193 + $0x6e8] sm:$0xff]
                %418 = vst [vmem:[%s194 + $0x378] sm:$0xff] %v417
                %v419 = vld [vmem:[%s193 + $0x700] sm:$0xff]
                %420 = vst [vmem:[%s194 + $0x380] sm:$0xff] %v419
                %v421 = vld [vmem:[%s193 + $0x708] sm:$0xff]
                %422 = vst [vmem:[%s194 + $0x388] sm:$0xff] %v421
                %v423 = vld [vmem:[%s193 + $0x720] sm:$0xff]
                %424 = vst [vmem:[%s194 + $0x390] sm:$0xff] %v423
                %v425 = vld [vmem:[%s193 + $0x728] sm:$0xff]
                %426 = vst [vmem:[%s194 + $0x398] sm:$0xff] %v425
                %v427 = vld [vmem:[%s193 + $0x740] sm:$0xff]
                %428 = vst [vmem:[%s194 + $0x3a0] sm:$0xff] %v427
                %v429 = vld [vmem:[%s193 + $0x748] sm:$0xff]
                %430 = vst [vmem:[%s194 + $0x3a8] sm:$0xff] %v429
                %v431 = vld [vmem:[%s193 + $0x760] sm:$0xff]
                %432 = vst [vmem:[%s194 + $0x3b0] sm:$0xff] %v431
                %v433 = vld [vmem:[%s193 + $0x768] sm:$0xff]
                %434 = vst [vmem:[%s194 + $0x3b8] sm:$0xff] %v433
                %v435 = vld [vmem:[%s193 + $0x780] sm:$0xff]
                %436 = vst [vmem:[%s194 + $0x3c0] sm:$0xff] %v435
                %v437 = vld [vmem:[%s193 + $0x788] sm:$0xff]
                %438 = vst [vmem:[%s194 + $0x3c8] sm:$0xff] %v437
                %v439 = vld [vmem:[%s193 + $0x7a0] sm:$0xff]
                %440 = vst [vmem:[%s194 + $0x3d0] sm:$0xff] %v439
                %v441 = vld [vmem:[%s193 + $0x7a8] sm:$0xff]
                %442 = vst [vmem:[%s194 + $0x3d8] sm:$0xff] %v441
                %v443 = vld [vmem:[%s193 + $0x7c0] sm:$0xff]
                %444 = vst [vmem:[%s194 + $0x3e0] sm:$0xff] %v443
                %v445 = vld [vmem:[%s193 + $0x7c8] sm:$0xff]
                %446 = vst [vmem:[%s194 + $0x3e8] sm:$0xff] %v445
                %v447 = vld [vmem:[%s193 + $0x7e0] sm:$0xff]
                %448 = vst [vmem:[%s194 + $0x3f0] sm:$0xff] %v447
                %v449 = vld [vmem:[%s193 + $0x7e8] sm:$0xff]
                %450 = vst [vmem:[%s194 + $0x3f8] sm:$0xff] %v449
                %v451 = vld [vmem:[%s193 + $0x800] sm:$0xff]
                %452 = vst [vmem:[%s194 + $0x400] sm:$0xff] %v451
                %v453 = vld [vmem:[%s193 + $0x808] sm:$0xff]
                %454 = vst [vmem:[%s194 + $0x408] sm:$0xff] %v453
                %v455 = vld [vmem:[%s193 + $0x820] sm:$0xff]
                %456 = vst [vmem:[%s194 + $0x410] sm:$0xff] %v455
                %v457 = vld [vmem:[%s193 + $0x828] sm:$0xff]
                %458 = vst [vmem:[%s194 + $0x418] sm:$0xff] %v457
                %v459 = vld [vmem:[%s193 + $0x840] sm:$0xff]
                %460 = vst [vmem:[%s194 + $0x420] sm:$0xff] %v459
                %v461 = vld [vmem:[%s193 + $0x848] sm:$0xff]
                %462 = vst [vmem:[%s194 + $0x428] sm:$0xff] %v461
                %v463 = vld [vmem:[%s193 + $0x860] sm:$0xff]
                %464 = vst [vmem:[%s194 + $0x430] sm:$0xff] %v463
                %v465 = vld [vmem:[%s193 + $0x868] sm:$0xff]
                %466 = vst [vmem:[%s194 + $0x438] sm:$0xff] %v465
                %v467 = vld [vmem:[%s193 + $0x880] sm:$0xff]
                %468 = vst [vmem:[%s194 + $0x440] sm:$0xff] %v467
                %v469 = vld [vmem:[%s193 + $0x888] sm:$0xff]
                %470 = vst [vmem:[%s194 + $0x448] sm:$0xff] %v469
                %v471 = vld [vmem:[%s193 + $0x8a0] sm:$0xff]
                %472 = vst [vmem:[%s194 + $0x450] sm:$0xff] %v471
                %v473 = vld [vmem:[%s193 + $0x8a8] sm:$0xff]
                %474 = vst [vmem:[%s194 + $0x458] sm:$0xff] %v473
                %v475 = vld [vmem:[%s193 + $0x8c0] sm:$0xff]
                %476 = vst [vmem:[%s194 + $0x460] sm:$0xff] %v475
                %v477 = vld [vmem:[%s193 + $0x8c8] sm:$0xff]
                %478 = vst [vmem:[%s194 + $0x468] sm:$0xff] %v477
                %v479 = vld [vmem:[%s193 + $0x8e0] sm:$0xff]
                %480 = vst [vmem:[%s194 + $0x470] sm:$0xff] %v479
                %v481 = vld [vmem:[%s193 + $0x8e8] sm:$0xff]
                %482 = vst [vmem:[%s194 + $0x478] sm:$0xff] %v481
                %v483 = vld [vmem:[%s193 + $0x900] sm:$0xff]
                %484 = vst [vmem:[%s194 + $0x480] sm:$0xff] %v483
                %v485 = vld [vmem:[%s193 + $0x908] sm:$0xff]
                %486 = vst [vmem:[%s194 + $0x488] sm:$0xff] %v485
                %v487 = vld [vmem:[%s193 + $0x920] sm:$0xff]
                %488 = vst [vmem:[%s194 + $0x490] sm:$0xff] %v487
                %v489 = vld [vmem:[%s193 + $0x928] sm:$0xff]
                %490 = vst [vmem:[%s194 + $0x498] sm:$0xff] %v489
                %v491 = vld [vmem:[%s193 + $0x940] sm:$0xff]
                %492 = vst [vmem:[%s194 + $0x4a0] sm:$0xff] %v491
                %v493 = vld [vmem:[%s193 + $0x948] sm:$0xff]
                %494 = vst [vmem:[%s194 + $0x4a8] sm:$0xff] %v493
                %v495 = vld [vmem:[%s193 + $0x960] sm:$0xff]
                %496 = vst [vmem:[%s194 + $0x4b0] sm:$0xff] %v495
                %v497 = vld [vmem:[%s193 + $0x968] sm:$0xff]
                %498 = vst [vmem:[%s194 + $0x4b8] sm:$0xff] %v497
                %v499 = vld [vmem:[%s193 + $0x980] sm:$0xff]
                %500 = vst [vmem:[%s194 + $0x4c0] sm:$0xff] %v499
                %v501 = vld [vmem:[%s193 + $0x988] sm:$0xff]
                %502 = vst [vmem:[%s194 + $0x4c8] sm:$0xff] %v501
                %v503 = vld [vmem:[%s193 + $0x9a0] sm:$0xff]
                %504 = vst [vmem:[%s194 + $0x4d0] sm:$0xff] %v503
                %v505 = vld [vmem:[%s193 + $0x9a8] sm:$0xff]
                %506 = vst [vmem:[%s194 + $0x4d8] sm:$0xff] %v505
                %v507 = vld [vmem:[%s193 + $0x9c0] sm:$0xff]
                %508 = vst [vmem:[%s194 + $0x4e0] sm:$0xff] %v507
                %v509 = vld [vmem:[%s193 + $0x9c8] sm:$0xff]
                %510 = vst [vmem:[%s194 + $0x4e8] sm:$0xff] %v509
                %v511 = vld [vmem:[%s193 + $0x9e0] sm:$0xff]
                %512 = vst [vmem:[%s194 + $0x4f0] sm:$0xff] %v511
                %v513 = vld [vmem:[%s193 + $0x9e8] sm:$0xff]
                %514 = vst [vmem:[%s194 + $0x4f8] sm:$0xff] %v513
                %v515 = vld [vmem:[%s193 + $0xa00] sm:$0xff]
                %516 = vst [vmem:[%s194 + $0x500] sm:$0xff] %v515
                %v517 = vld [vmem:[%s193 + $0xa08] sm:$0xff]
                %518 = vst [vmem:[%s194 + $0x508] sm:$0xff] %v517
                %v519 = vld [vmem:[%s193 + $0xa20] sm:$0xff]
                %520 = vst [vmem:[%s194 + $0x510] sm:$0xff] %v519
                %v521 = vld [vmem:[%s193 + $0xa28] sm:$0xff]
                %522 = vst [vmem:[%s194 + $0x518] sm:$0xff] %v521
                %v523 = vld [vmem:[%s193 + $0xa40] sm:$0xff]
                %524 = vst [vmem:[%s194 + $0x520] sm:$0xff] %v523
                %v525 = vld [vmem:[%s193 + $0xa48] sm:$0xff]
                %526 = vst [vmem:[%s194 + $0x528] sm:$0xff] %v525
                %v527 = vld [vmem:[%s193 + $0xa60] sm:$0xff]
                %528 = vst [vmem:[%s194 + $0x530] sm:$0xff] %v527
                %v529 = vld [vmem:[%s193 + $0xa68] sm:$0xff]
                %530 = vst [vmem:[%s194 + $0x538] sm:$0xff] %v529
                %v531 = vld [vmem:[%s193 + $0xa80] sm:$0xff]
                %532 = vst [vmem:[%s194 + $0x540] sm:$0xff] %v531
                %v533 = vld [vmem:[%s193 + $0xa88] sm:$0xff]
                %534 = vst [vmem:[%s194 + $0x548] sm:$0xff] %v533
                %v535 = vld [vmem:[%s193 + $0xaa0] sm:$0xff]
                %536 = vst [vmem:[%s194 + $0x550] sm:$0xff] %v535
                %v537 = vld [vmem:[%s193 + $0xaa8] sm:$0xff]
                %538 = vst [vmem:[%s194 + $0x558] sm:$0xff] %v537
                %v539 = vld [vmem:[%s193 + $0xac0] sm:$0xff]
                %540 = vst [vmem:[%s194 + $0x560] sm:$0xff] %v539
                %v541 = vld [vmem:[%s193 + $0xac8] sm:$0xff]
                %542 = vst [vmem:[%s194 + $0x568] sm:$0xff] %v541
                %v543 = vld [vmem:[%s193 + $0xae0] sm:$0xff]
                %544 = vst [vmem:[%s194 + $0x570] sm:$0xff] %v543
                %v545 = vld [vmem:[%s193 + $0xae8] sm:$0xff]
                %546 = vst [vmem:[%s194 + $0x578] sm:$0xff] %v545
                %v547 = vld [vmem:[%s193 + $0xb00] sm:$0xff]
                %548 = vst [vmem:[%s194 + $0x580] sm:$0xff] %v547
                %v549 = vld [vmem:[%s193 + $0xb08] sm:$0xff]
                %550 = vst [vmem:[%s194 + $0x588] sm:$0xff] %v549
                %v551 = vld [vmem:[%s193 + $0xb20] sm:$0xff]
                %552 = vst [vmem:[%s194 + $0x590] sm:$0xff] %v551
                %v553 = vld [vmem:[%s193 + $0xb28] sm:$0xff]
                %554 = vst [vmem:[%s194 + $0x598] sm:$0xff] %v553
                %v555 = vld [vmem:[%s193 + $0xb40] sm:$0xff]
                %556 = vst [vmem:[%s194 + $0x5a0] sm:$0xff] %v555
                %v557 = vld [vmem:[%s193 + $0xb48] sm:$0xff]
                %558 = vst [vmem:[%s194 + $0x5a8] sm:$0xff] %v557
                %v559 = vld [vmem:[%s193 + $0xb60] sm:$0xff]
                %560 = vst [vmem:[%s194 + $0x5b0] sm:$0xff] %v559
                %v561 = vld [vmem:[%s193 + $0xb68] sm:$0xff]
                %562 = vst [vmem:[%s194 + $0x5b8] sm:$0xff] %v561
                %v563 = vld [vmem:[%s193 + $0xb80] sm:$0xff]
                %564 = vst [vmem:[%s194 + $0x5c0] sm:$0xff] %v563
                %v565 = vld [vmem:[%s193 + $0xb88] sm:$0xff]
                %566 = vst [vmem:[%s194 + $0x5c8] sm:$0xff] %v565
                %v567 = vld [vmem:[%s193 + $0xba0] sm:$0xff]
                %568 = vst [vmem:[%s194 + $0x5d0] sm:$0xff] %v567
                %v569 = vld [vmem:[%s193 + $0xba8] sm:$0xff]
                %570 = vst [vmem:[%s194 + $0x5d8] sm:$0xff] %v569
                %v571 = vld [vmem:[%s193 + $0xbc0] sm:$0xff]
                %572 = vst [vmem:[%s194 + $0x5e0] sm:$0xff] %v571
                %v573 = vld [vmem:[%s193 + $0xbc8] sm:$0xff]
                %574 = vst [vmem:[%s194 + $0x5e8] sm:$0xff] %v573
                %v575 = vld [vmem:[%s193 + $0xbe0] sm:$0xff]
                %576 = vst [vmem:[%s194 + $0x5f0] sm:$0xff] %v575
                %v577 = vld [vmem:[%s193 + $0xbe8] sm:$0xff]
                %578 = vst [vmem:[%s194 + $0x5f8] sm:$0xff] %v577
                %v579 = vld [vmem:[%s193 + $0xc00] sm:$0xff]
                %580 = vst [vmem:[%s194 + $0x600] sm:$0xff] %v579
                %v581 = vld [vmem:[%s193 + $0xc08] sm:$0xff]
                %582 = vst [vmem:[%s194 + $0x608] sm:$0xff] %v581
                %v583 = vld [vmem:[%s193 + $0xc20] sm:$0xff]
                %584 = vst [vmem:[%s194 + $0x610] sm:$0xff] %v583
                %v585 = vld [vmem:[%s193 + $0xc28] sm:$0xff]
                %586 = vst [vmem:[%s194 + $0x618] sm:$0xff] %v585
                %v587 = vld [vmem:[%s193 + $0xc40] sm:$0xff]
                %588 = vst [vmem:[%s194 + $0x620] sm:$0xff] %v587
                %v589 = vld [vmem:[%s193 + $0xc48] sm:$0xff]
                %590 = vst [vmem:[%s194 + $0x628] sm:$0xff] %v589
                %v591 = vld [vmem:[%s193 + $0xc60] sm:$0xff]
                %592 = vst [vmem:[%s194 + $0x630] sm:$0xff] %v591
                %v593 = vld [vmem:[%s193 + $0xc68] sm:$0xff]
                %594 = vst [vmem:[%s194 + $0x638] sm:$0xff] %v593
                %v595 = vld [vmem:[%s193 + $0xc80] sm:$0xff]
                %596 = vst [vmem:[%s194 + $0x640] sm:$0xff] %v595
                %v597 = vld [vmem:[%s193 + $0xc88] sm:$0xff]
                %598 = vst [vmem:[%s194 + $0x648] sm:$0xff] %v597
                %v599 = vld [vmem:[%s193 + $0xca0] sm:$0xff]
                %600 = vst [vmem:[%s194 + $0x650] sm:$0xff] %v599
                %v601 = vld [vmem:[%s193 + $0xca8] sm:$0xff]
                %602 = vst [vmem:[%s194 + $0x658] sm:$0xff] %v601
                %v603 = vld [vmem:[%s193 + $0xcc0] sm:$0xff]
                %604 = vst [vmem:[%s194 + $0x660] sm:$0xff] %v603
                %v605 = vld [vmem:[%s193 + $0xcc8] sm:$0xff]
                %606 = vst [vmem:[%s194 + $0x668] sm:$0xff] %v605
                %v607 = vld [vmem:[%s193 + $0xce0] sm:$0xff]
                %608 = vst [vmem:[%s194 + $0x670] sm:$0xff] %v607
                %v609 = vld [vmem:[%s193 + $0xce8] sm:$0xff]
                %610 = vst [vmem:[%s194 + $0x678] sm:$0xff] %v609
                %v611 = vld [vmem:[%s193 + $0xd00] sm:$0xff]
                %612 = vst [vmem:[%s194 + $0x680] sm:$0xff] %v611
                %v613 = vld [vmem:[%s193 + $0xd08] sm:$0xff]
                %614 = vst [vmem:[%s194 + $0x688] sm:$0xff] %v613
                %v615 = vld [vmem:[%s193 + $0xd20] sm:$0xff]
                %616 = vst [vmem:[%s194 + $0x690] sm:$0xff] %v615
                %v617 = vld [vmem:[%s193 + $0xd28] sm:$0xff]
                %618 = vst [vmem:[%s194 + $0x698] sm:$0xff] %v617
                %v619 = vld [vmem:[%s193 + $0xd40] sm:$0xff]
                %620 = vst [vmem:[%s194 + $0x6a0] sm:$0xff] %v619
                %v621 = vld [vmem:[%s193 + $0xd48] sm:$0xff]
                %622 = vst [vmem:[%s194 + $0x6a8] sm:$0xff] %v621
                %v623 = vld [vmem:[%s193 + $0xd60] sm:$0xff]
                %624 = vst [vmem:[%s194 + $0x6b0] sm:$0xff] %v623
                %v625 = vld [vmem:[%s193 + $0xd68] sm:$0xff]
                %626 = vst [vmem:[%s194 + $0x6b8] sm:$0xff] %v625
                %v627 = vld [vmem:[%s193 + $0xd80] sm:$0xff]
                %628 = vst [vmem:[%s194 + $0x6c0] sm:$0xff] %v627
                %v629 = vld [vmem:[%s193 + $0xd88] sm:$0xff]
                %630 = vst [vmem:[%s194 + $0x6c8] sm:$0xff] %v629
                %v631 = vld [vmem:[%s193 + $0xda0] sm:$0xff]
                %632 = vst [vmem:[%s194 + $0x6d0] sm:$0xff] %v631
                %v633 = vld [vmem:[%s193 + $0xda8] sm:$0xff]
                %634 = vst [vmem:[%s194 + $0x6d8] sm:$0xff] %v633
                %v635 = vld [vmem:[%s193 + $0xdc0] sm:$0xff]
                %636 = vst [vmem:[%s194 + $0x6e0] sm:$0xff] %v635
                %v637 = vld [vmem:[%s193 + $0xdc8] sm:$0xff]
                %638 = vst [vmem:[%s194 + $0x6e8] sm:$0xff] %v637
                %v639 = vld [vmem:[%s193 + $0xde0] sm:$0xff]
                %640 = vst [vmem:[%s194 + $0x6f0] sm:$0xff] %v639
                %v641 = vld [vmem:[%s193 + $0xde8] sm:$0xff]
                %642 = vst [vmem:[%s194 + $0x6f8] sm:$0xff] %v641
                %v643 = vld [vmem:[%s193 + $0xe00] sm:$0xff]
                %644 = vst [vmem:[%s194 + $0x700] sm:$0xff] %v643
                %v645 = vld [vmem:[%s193 + $0xe08] sm:$0xff]
                %646 = vst [vmem:[%s194 + $0x708] sm:$0xff] %v645
                %v647 = vld [vmem:[%s193 + $0xe20] sm:$0xff]
                %648 = vst [vmem:[%s194 + $0x710] sm:$0xff] %v647
                %v649 = vld [vmem:[%s193 + $0xe28] sm:$0xff]
                %650 = vst [vmem:[%s194 + $0x718] sm:$0xff] %v649
                %v651 = vld [vmem:[%s193 + $0xe40] sm:$0xff]
                %652 = vst [vmem:[%s194 + $0x720] sm:$0xff] %v651
                %v653 = vld [vmem:[%s193 + $0xe48] sm:$0xff]
                %654 = vst [vmem:[%s194 + $0x728] sm:$0xff] %v653
                %v655 = vld [vmem:[%s193 + $0xe60] sm:$0xff]
                %656 = vst [vmem:[%s194 + $0x730] sm:$0xff] %v655
                %v657 = vld [vmem:[%s193 + $0xe68] sm:$0xff]
                %658 = vst [vmem:[%s194 + $0x738] sm:$0xff] %v657
                %v659 = vld [vmem:[%s193 + $0xe80] sm:$0xff]
                %660 = vst [vmem:[%s194 + $0x740] sm:$0xff] %v659
                %v661 = vld [vmem:[%s193 + $0xe88] sm:$0xff]
                %662 = vst [vmem:[%s194 + $0x748] sm:$0xff] %v661
                %v663 = vld [vmem:[%s193 + $0xea0] sm:$0xff]
                %664 = vst [vmem:[%s194 + $0x750] sm:$0xff] %v663
                %v665 = vld [vmem:[%s193 + $0xea8] sm:$0xff]
                %666 = vst [vmem:[%s194 + $0x758] sm:$0xff] %v665
                %v667 = vld [vmem:[%s193 + $0xec0] sm:$0xff]
                %668 = vst [vmem:[%s194 + $0x760] sm:$0xff] %v667
                %v669 = vld [vmem:[%s193 + $0xec8] sm:$0xff]
                %670 = vst [vmem:[%s194 + $0x768] sm:$0xff] %v669
                %v671 = vld [vmem:[%s193 + $0xee0] sm:$0xff]
                %672 = vst [vmem:[%s194 + $0x770] sm:$0xff] %v671
                %v673 = vld [vmem:[%s193 + $0xee8] sm:$0xff]
                %674 = vst [vmem:[%s194 + $0x778] sm:$0xff] %v673
                %v675 = vld [vmem:[%s193 + $0xf00] sm:$0xff]
                %676 = vst [vmem:[%s194 + $0x780] sm:$0xff] %v675
                %v677 = vld [vmem:[%s193 + $0xf08] sm:$0xff]
                %678 = vst [vmem:[%s194 + $0x788] sm:$0xff] %v677
                %v679 = vld [vmem:[%s193 + $0xf20] sm:$0xff]
                %680 = vst [vmem:[%s194 + $0x790] sm:$0xff] %v679
                %v681 = vld [vmem:[%s193 + $0xf28] sm:$0xff]
                %682 = vst [vmem:[%s194 + $0x798] sm:$0xff] %v681
                %v683 = vld [vmem:[%s193 + $0xf40] sm:$0xff]
                %684 = vst [vmem:[%s194 + $0x7a0] sm:$0xff] %v683
                %v685 = vld [vmem:[%s193 + $0xf48] sm:$0xff]
                %686 = vst [vmem:[%s194 + $0x7a8] sm:$0xff] %v685
                %v687 = vld [vmem:[%s193 + $0xf60] sm:$0xff]
                %688 = vst [vmem:[%s194 + $0x7b0] sm:$0xff] %v687
                %v689 = vld [vmem:[%s193 + $0xf68] sm:$0xff]
                %690 = vst [vmem:[%s194 + $0x7b8] sm:$0xff] %v689
                %v691 = vld [vmem:[%s193 + $0xf80] sm:$0xff]
                %692 = vst [vmem:[%s194 + $0x7c0] sm:$0xff] %v691
                %v693 = vld [vmem:[%s193 + $0xf88] sm:$0xff]
                %694 = vst [vmem:[%s194 + $0x7c8] sm:$0xff] %v693
                %v695 = vld [vmem:[%s193 + $0xfa0] sm:$0xff]
                %696 = vst [vmem:[%s194 + $0x7d0] sm:$0xff] %v695
                %v697 = vld [vmem:[%s193 + $0xfa8] sm:$0xff]
                %698 = vst [vmem:[%s194 + $0x7d8] sm:$0xff] %v697
                %v699 = vld [vmem:[%s193 + $0xfc0] sm:$0xff]
                %700 = vst [vmem:[%s194 + $0x7e0] sm:$0xff] %v699
                %v701 = vld [vmem:[%s193 + $0xfc8] sm:$0xff]
                %702 = vst [vmem:[%s194 + $0x7e8] sm:$0xff] %v701
                %v703 = vld [vmem:[%s193 + $0xfe0] sm:$0xff]
                %704 = vst [vmem:[%s194 + $0x7f0] sm:$0xff] %v703
                %v705 = vld [vmem:[%s193 + $0xfe8] sm:$0xff]
                %706 = vst [vmem:[%s194 + $0x7f8] sm:$0xff] %v705
                %v707 = vld [vmem:[%s193 + $0x1000] sm:$0xff]
                %708 = vst [vmem:[%s194 + $0x800] sm:$0xff] %v707
                %v709 = vld [vmem:[%s193 + $0x1008] sm:$0xff]
                %710 = vst [vmem:[%s194 + $0x808] sm:$0xff] %v709
                %v711 = vld [vmem:[%s193 + $0x1020] sm:$0xff]
                %712 = vst [vmem:[%s194 + $0x810] sm:$0xff] %v711
                %v713 = vld [vmem:[%s193 + $0x1028] sm:$0xff]
                %714 = vst [vmem:[%s194 + $0x818] sm:$0xff] %v713
                %v715 = vld [vmem:[%s193 + $0x1040] sm:$0xff]
                %716 = vst [vmem:[%s194 + $0x820] sm:$0xff] %v715
                %v717 = vld [vmem:[%s193 + $0x1048] sm:$0xff]
                %718 = vst [vmem:[%s194 + $0x828] sm:$0xff] %v717
                %v719 = vld [vmem:[%s193 + $0x1060] sm:$0xff]
                %720 = vst [vmem:[%s194 + $0x830] sm:$0xff] %v719
                %v721 = vld [vmem:[%s193 + $0x1068] sm:$0xff]
                %722 = vst [vmem:[%s194 + $0x838] sm:$0xff] %v721
                %v723 = vld [vmem:[%s193 + $0x1080] sm:$0xff]
                %724 = vst [vmem:[%s194 + $0x840] sm:$0xff] %v723
                %v725 = vld [vmem:[%s193 + $0x1088] sm:$0xff]
                %726 = vst [vmem:[%s194 + $0x848] sm:$0xff] %v725
                %v727 = vld [vmem:[%s193 + $0x10a0] sm:$0xff]
                %728 = vst [vmem:[%s194 + $0x850] sm:$0xff] %v727
                %v729 = vld [vmem:[%s193 + $0x10a8] sm:$0xff]
                %730 = vst [vmem:[%s194 + $0x858] sm:$0xff] %v729
                %v731 = vld [vmem:[%s193 + $0x10c0] sm:$0xff]
                %732 = vst [vmem:[%s194 + $0x860] sm:$0xff] %v731
                %v733 = vld [vmem:[%s193 + $0x10c8] sm:$0xff]
                %734 = vst [vmem:[%s194 + $0x868] sm:$0xff] %v733
                %v735 = vld [vmem:[%s193 + $0x10e0] sm:$0xff]
                %736 = vst [vmem:[%s194 + $0x870] sm:$0xff] %v735
                %v737 = vld [vmem:[%s193 + $0x10e8] sm:$0xff]
                %738 = vst [vmem:[%s194 + $0x878] sm:$0xff] %v737
                %v739 = vld [vmem:[%s193 + $0x1100] sm:$0xff]
                %740 = vst [vmem:[%s194 + $0x880] sm:$0xff] %v739
                %v741 = vld [vmem:[%s193 + $0x1108] sm:$0xff]
                %742 = vst [vmem:[%s194 + $0x888] sm:$0xff] %v741
                %v743 = vld [vmem:[%s193 + $0x1120] sm:$0xff]
                %744 = vst [vmem:[%s194 + $0x890] sm:$0xff] %v743
                %v745 = vld [vmem:[%s193 + $0x1128] sm:$0xff]
                %746 = vst [vmem:[%s194 + $0x898] sm:$0xff] %v745
                %v747 = vld [vmem:[%s193 + $0x1140] sm:$0xff]
                %748 = vst [vmem:[%s194 + $0x8a0] sm:$0xff] %v747
                %v749 = vld [vmem:[%s193 + $0x1148] sm:$0xff]
                %750 = vst [vmem:[%s194 + $0x8a8] sm:$0xff] %v749
                %v751 = vld [vmem:[%s193 + $0x1160] sm:$0xff]
                %752 = vst [vmem:[%s194 + $0x8b0] sm:$0xff] %v751
                %v753 = vld [vmem:[%s193 + $0x1168] sm:$0xff]
                %754 = vst [vmem:[%s194 + $0x8b8] sm:$0xff] %v753
                %v755 = vld [vmem:[%s193 + $0x1180] sm:$0xff]
                %756 = vst [vmem:[%s194 + $0x8c0] sm:$0xff] %v755
                %v757 = vld [vmem:[%s193 + $0x1188] sm:$0xff]
                %758 = vst [vmem:[%s194 + $0x8c8] sm:$0xff] %v757
                %v759 = vld [vmem:[%s193 + $0x11a0] sm:$0xff]
                %760 = vst [vmem:[%s194 + $0x8d0] sm:$0xff] %v759
                %v761 = vld [vmem:[%s193 + $0x11a8] sm:$0xff]
                %762 = vst [vmem:[%s194 + $0x8d8] sm:$0xff] %v761
                %v763 = vld [vmem:[%s193 + $0x11c0] sm:$0xff]
                %764 = vst [vmem:[%s194 + $0x8e0] sm:$0xff] %v763
                %v765 = vld [vmem:[%s193 + $0x11c8] sm:$0xff]
                %766 = vst [vmem:[%s194 + $0x8e8] sm:$0xff] %v765
                %v767 = vld [vmem:[%s193 + $0x11e0] sm:$0xff]
                %768 = vst [vmem:[%s194 + $0x8f0] sm:$0xff] %v767
                %v769 = vld [vmem:[%s193 + $0x11e8] sm:$0xff]
                %770 = vst [vmem:[%s194 + $0x8f8] sm:$0xff] %v769
              $region37: #{custom_fe_forward.7} parent=31 // loop_footer
                %s192 = sadd.s32 1, %s188
              $region38: #{custom_fe_forward.7} parent=31 // loop_footer_branch
                %187 = sbr.rel target = $region34
              $region39: #{custom_fe_forward.7} parent=31 // loop_exit
                _
            $region32: #{custom_fe_forward.7} parent=27 // pred_fallthru
              _
            // Predicated region
            $region40: #{custom_fe_forward.7} parent=27 // pred_check
              _
            $region41: #{custom_fe_forward.7} parent=27 // pred_check_branch
              %772 = sbr.rel target = $region43
            $region42: #{custom_fe_forward.7} parent=27 // pred_region
              _
            $region43: #{custom_fe_forward.7} parent=27 // pred_fallthru
              _
          $region28: #{custom_fe_forward.7} parent=23 // pred_fallthru
            _
          %773 = vnop
        $region24: #{custom_fe_forward.7} parent=15 // pred_fallthru
          _
        // Predicated region
        $region44: #{custom_fe_forward.7} parent=15 // pred_check
          %p774 = pneg %p104
        $region45: #{custom_fe_forward.7} parent=15 // pred_check_branch
          %776 = sbr.rel (%p774) target = $region47
        $region46: #{custom_fe_forward.7} parent=15 // pred_region
          %s777 = smul.u32 2, %s17
          %p778 = scmp.lt.s32.totalorder %s777, 3
          %s779 = scalar_select %p778, %s777, 3
          %s780 = scalar_lea.vmem %s2, %s779
          %s781 = smul.u32 2, %s17
        $region47: #{custom_fe_forward.7} parent=15 // pred_fallthru
          _
      $region16: #{custom_fe_forward.7} parent=5 // pred_fallthru
        _
      %p782 = scmp.le.s32.totalorder 1, %s9
      %p783 = scmp.lt.s32.totalorder %s9, 9
      %p784 = pnand %p782, %p783
      %p785 = pneg %p784
      // Predicated region
      $region48: #{custom_fe_forward.7} parent=5 // pred_check
        _
      $region49: #{custom_fe_forward.7} parent=5 // pred_check_branch
        %787 = sbr.rel (%p784) target = $region51
      $region50: #{custom_fe_forward.7} parent=5 // pred_region
        %s788 = ssub.s32 %s9, 1
        %s789 = sand.u32 %s71, 1
        %s790 = sand.u32 %s71, 1
        %s791 = smul.addr %s790, 2304
        %s792 = scalar_lea.vmem [#allocation3], %s791
        // Predicated region
        $region52: #{custom_fe_forward.7} parent=50 // pred_check
          %p793 = pneg %p84
        $region53: #{custom_fe_forward.7} parent=50 // pred_check_branch
          %795 = sbr.rel (%p793) target = $region55
        $region54: #{custom_fe_forward.7} parent=50 // pred_region
          _
        $region55: #{custom_fe_forward.7} parent=50 // pred_fallthru
          _
        %s796 = smul.u32 9, %s21
        %p797 = scmp.lt.s32.totalorder %s19, 0
        %s798 = scalar_select %p797, %s19, 0
        %p799 = scmp.lt.s32.totalorder %s796, 35
        %s800 = scalar_select %p799, %s796, 35
        %s801 = smul.addr %s798, 36
        %s802 = sadd.s32 %s800, %s801
        %s803 = smul.addr %s802, 8
        %s804 = scalar_lea.vmem %s0, %s803
        %p805 = pneg %p56
        %p806 = pneg %p53
        %s807 = sand.u32 %s71, 1
        %s808 = sand.u32 %s71, 1
        %s809 = smul.addr %s808, 2304
        %s810 = scalar_lea.vmem [#allocation3], %s809
        %p811 = pneg %p84
        %p812 = pneg %p81
        %s813 = smul.u32 2, %s20
        %p814 = scmp.lt.s32.totalorder %s813, 3
        %s815 = scalar_select %p814, %s813, 3
        %s816 = scalar_lea.vmem %s2, %s815
        %p817 = pneg %p110
        %p818 = pneg %p107
        %p819 = pneg %p138
        %p820 = pneg %p135
        %s821 = smul.u32 2, %s20
        %p822 = scmp.lt.s32.totalorder %s19, 0
        %s823 = scalar_select %p822, %s19, 0
        %p824 = scmp.lt.s32.totalorder %s821, 3
        %s825 = scalar_select %p824, %s821, 3
        %s826 = smul.addr %s823, 4
        %s827 = sadd.s32 %s825, %s826
        %s828 = smul.addr %s827, 8
        %s829 = scalar_lea.vmem %s3, %s828
        %s830 = smul.u32 9, %s21
        %p831 = scmp.lt.s32.totalorder %s19, 0
        %s832 = scalar_select %p831, %s19, 0
        %p833 = scmp.lt.s32.totalorder %s830, 35
        %s834 = scalar_select %p833, %s830, 35
        %s835 = smul.addr %s832, 36
        %s836 = sadd.s32 %s834, %s835
        %s837 = smul.addr %s836, 8
        %s838 = scalar_lea.vmem %s0, %s837
        %s839 = smul.u32 9, %s21
        %s840 = smul.u32 144, %s21
        %s841 = smul.u32 2, %s20
        %s842 = smul.u32 2, %s20
        %p843 = scmp.lt.s32.totalorder %s842, 3
        %s844 = scalar_select %p843, %s842, 3
        %s845 = scalar_lea.vmem %s2, %s844
        %s846 = smul.u32 2, %s20
        %s847 = smul.u32 2, %s20
        %p848 = scmp.lt.s32.totalorder %s19, 0
        %s849 = scalar_select %p848, %s19, 0
        %p850 = scmp.lt.s32.totalorder %s847, 3
        %s851 = scalar_select %p850, %s847, 3
        %s852 = smul.addr %s849, 4
        %s853 = sadd.s32 %s851, %s852
        %s854 = smul.addr %s853, 8
        %s855 = scalar_lea.vmem %s3, %s854
        %s856 = smul.u32 2, %s20
        %p857 = scmp.eq.s32.totalorder %s21, 0
        // Predicated region
        $region56: #{custom_fe_forward.7} parent=50 // pred_check
          %p858 = pneg %p857
        $region57: #{custom_fe_forward.7} parent=50 // pred_check_branch
          %860 = sbr.rel (%p858) target = $region59
        $region58: #{custom_fe_forward.7} parent=50 // pred_region
          %861 = vst [vmem:[#allocation2] sm:$0xff] 0.0
          %862 = vst [vmem:[#allocation2 + $0x8] sm:$0xff] 0.0
        $region59: #{custom_fe_forward.7} parent=50 // pred_fallthru
          _
        %v863 = vld [vmem:[#allocation2] sm:$0xff]
        %v864 = vld [vmem:[#allocation2 + $0x8] sm:$0xff]
        %v865 = vld [vmem:[%s838] sm:$0xff]
        %v866 = vld [vmem:[%s838 + $0x8] sm:$0xff]
        %v867 = vld [vmem:[%s838 + $0x10] sm:$0xff]
        %v868 = vld [vmem:[%s838 + $0x18] sm:$0xff]
        %v869 = vld [vmem:[%s838 + $0x20] sm:$0xff]
        %v870 = vld [vmem:[%s838 + $0x28] sm:$0xff]
        %v871 = vld [vmem:[%s838 + $0x30] sm:$0xff]
        %v872 = vld [vmem:[%s838 + $0x38] sm:$0xff]
        %v873 = vld [vmem:[%s838 + $0x40] sm:$0xff]
        %v874 = vld [vmem:[%s792] sm:$0xff]
        %v875 = vld [vmem:[%s792 + $0x8] sm:$0xff]
        %v876 = vld [vmem:[%s792 + $0x10] sm:$0xff]
        %v877 = vld [vmem:[%s792 + $0x18] sm:$0xff]
        %v878 = vld [vmem:[%s792 + $0x20] sm:$0xff]
        %v879 = vld [vmem:[%s792 + $0x28] sm:$0xff]
        %v880 = vld [vmem:[%s792 + $0x30] sm:$0xff]
        %v881 = vld [vmem:[%s792 + $0x38] sm:$0xff]
        %v882 = vld [vmem:[%s792 + $0x40] sm:$0xff]
        %v883 = vld [vmem:[%s792 + $0x48] sm:$0xff]
        %v884 = vld [vmem:[%s792 + $0x50] sm:$0xff]
        %v885 = vld [vmem:[%s792 + $0x58] sm:$0xff]
        %v886 = vld [vmem:[%s792 + $0x60] sm:$0xff]
        %v887 = vld [vmem:[%s792 + $0x68] sm:$0xff]
        %v888 = vld [vmem:[%s792 + $0x70] sm:$0xff]
        %v889 = vld [vmem:[%s792 + $0x78] sm:$0xff]
        %v890 = vld [vmem:[%s792 + $0x80] sm:$0xff]
        %v891 = vld [vmem:[%s792 + $0x88] sm:$0xff]
        %v892 = vld [vmem:[%s792 + $0x90] sm:$0xff]
        %v893 = vld [vmem:[%s792 + $0x98] sm:$0xff]
        %v894 = vld [vmem:[%s792 + $0xa0] sm:$0xff]
        %v895 = vld [vmem:[%s792 + $0xa8] sm:$0xff]
        %v896 = vld [vmem:[%s792 + $0xb0] sm:$0xff]
        %v897 = vld [vmem:[%s792 + $0xb8] sm:$0xff]
        %v898 = vld [vmem:[%s792 + $0xc0] sm:$0xff]
        %v899 = vld [vmem:[%s792 + $0xc8] sm:$0xff]
        %v900 = vld [vmem:[%s792 + $0xd0] sm:$0xff]
        %v901 = vld [vmem:[%s792 + $0xd8] sm:$0xff]
        %v902 = vld [vmem:[%s792 + $0xe0] sm:$0xff]
        %v903 = vld [vmem:[%s792 + $0xe8] sm:$0xff]
        %v904 = vld [vmem:[%s792 + $0xf0] sm:$0xff]
        %v905 = vld [vmem:[%s792 + $0xf8] sm:$0xff]
        %v906 = vld [vmem:[%s792 + $0x100] sm:$0xff]
        %v907 = vld [vmem:[%s792 + $0x108] sm:$0xff]
        %v908 = vld [vmem:[%s792 + $0x110] sm:$0xff]
        %v909 = vld [vmem:[%s792 + $0x118] sm:$0xff]
        %v910 = vld [vmem:[%s792 + $0x120] sm:$0xff]
        %v911 = vld [vmem:[%s792 + $0x128] sm:$0xff]
        %v912 = vld [vmem:[%s792 + $0x130] sm:$0xff]
        %v913 = vld [vmem:[%s792 + $0x138] sm:$0xff]
        %v914 = vld [vmem:[%s792 + $0x140] sm:$0xff]
        %v915 = vld [vmem:[%s792 + $0x148] sm:$0xff]
        %v916 = vld [vmem:[%s792 + $0x150] sm:$0xff]
        %v917 = vld [vmem:[%s792 + $0x158] sm:$0xff]
        %v918 = vld [vmem:[%s792 + $0x160] sm:$0xff]
        %v919 = vld [vmem:[%s792 + $0x168] sm:$0xff]
        %v920 = vld [vmem:[%s792 + $0x170] sm:$0xff]
        %v921 = vld [vmem:[%s792 + $0x178] sm:$0xff]
        %v922 = vld [vmem:[%s792 + $0x180] sm:$0xff]
        %v923 = vld [vmem:[%s792 + $0x188] sm:$0xff]
        %v924 = vld [vmem:[%s792 + $0x190] sm:$0xff]
        %v925 = vld [vmem:[%s792 + $0x198] sm:$0xff]
        %v926 = vld [vmem:[%s792 + $0x1a0] sm:$0xff]
        %v927 = vld [vmem:[%s792 + $0x1a8] sm:$0xff]
        %v928 = vld [vmem:[%s792 + $0x1b0] sm:$0xff]
        %v929 = vld [vmem:[%s792 + $0x1b8] sm:$0xff]
        %v930 = vld [vmem:[%s792 + $0x1c0] sm:$0xff]
        %v931 = vld [vmem:[%s792 + $0x1c8] sm:$0xff]
        %v932 = vld [vmem:[%s792 + $0x1d0] sm:$0xff]
        %v933 = vld [vmem:[%s792 + $0x1d8] sm:$0xff]
        %v934 = vld [vmem:[%s792 + $0x1e0] sm:$0xff]
        %v935 = vld [vmem:[%s792 + $0x1e8] sm:$0xff]
        %v936 = vld [vmem:[%s792 + $0x1f0] sm:$0xff]
        %v937 = vld [vmem:[%s792 + $0x1f8] sm:$0xff]
        %v938 = vld [vmem:[%s792 + $0x200] sm:$0xff]
        %v939 = vld [vmem:[%s792 + $0x208] sm:$0xff]
        %v940 = vld [vmem:[%s792 + $0x210] sm:$0xff]
        %v941 = vld [vmem:[%s792 + $0x218] sm:$0xff]
        %v942 = vld [vmem:[%s792 + $0x220] sm:$0xff]
        %v943 = vld [vmem:[%s792 + $0x228] sm:$0xff]
        %v944 = vld [vmem:[%s792 + $0x230] sm:$0xff]
        %v945 = vld [vmem:[%s792 + $0x238] sm:$0xff]
        %v946 = vld [vmem:[%s792 + $0x240] sm:$0xff]
        %v947 = vld [vmem:[%s792 + $0x248] sm:$0xff]
        %v948 = vld [vmem:[%s792 + $0x250] sm:$0xff]
        %v949 = vld [vmem:[%s792 + $0x258] sm:$0xff]
        %v950 = vld [vmem:[%s792 + $0x260] sm:$0xff]
        %v951 = vld [vmem:[%s792 + $0x268] sm:$0xff]
        %v952 = vld [vmem:[%s792 + $0x270] sm:$0xff]
        %v953 = vld [vmem:[%s792 + $0x278] sm:$0xff]
        %v954 = vld [vmem:[%s792 + $0x280] sm:$0xff]
        %v955 = vld [vmem:[%s792 + $0x288] sm:$0xff]
        %v956 = vld [vmem:[%s792 + $0x290] sm:$0xff]
        %v957 = vld [vmem:[%s792 + $0x298] sm:$0xff]
        %v958 = vld [vmem:[%s792 + $0x2a0] sm:$0xff]
        %v959 = vld [vmem:[%s792 + $0x2a8] sm:$0xff]
        %v960 = vld [vmem:[%s792 + $0x2b0] sm:$0xff]
        %v961 = vld [vmem:[%s792 + $0x2b8] sm:$0xff]
        %v962 = vld [vmem:[%s792 + $0x2c0] sm:$0xff]
        %v963 = vld [vmem:[%s792 + $0x2c8] sm:$0xff]
        %v964 = vld [vmem:[%s792 + $0x2d0] sm:$0xff]
        %v965 = vld [vmem:[%s792 + $0x2d8] sm:$0xff]
        %v966 = vld [vmem:[%s792 + $0x2e0] sm:$0xff]
        %v967 = vld [vmem:[%s792 + $0x2e8] sm:$0xff]
        %v968 = vld [vmem:[%s792 + $0x2f0] sm:$0xff]
        %v969 = vld [vmem:[%s792 + $0x2f8] sm:$0xff]
        %v970 = vld [vmem:[%s792 + $0x300] sm:$0xff]
        %v971 = vld [vmem:[%s792 + $0x308] sm:$0xff]
        %v972 = vld [vmem:[%s792 + $0x310] sm:$0xff]
        %v973 = vld [vmem:[%s792 + $0x318] sm:$0xff]
        %v974 = vld [vmem:[%s792 + $0x320] sm:$0xff]
        %v975 = vld [vmem:[%s792 + $0x328] sm:$0xff]
        %v976 = vld [vmem:[%s792 + $0x330] sm:$0xff]
        %v977 = vld [vmem:[%s792 + $0x338] sm:$0xff]
        %v978 = vld [vmem:[%s792 + $0x340] sm:$0xff]
        %v979 = vld [vmem:[%s792 + $0x348] sm:$0xff]
        %v980 = vld [vmem:[%s792 + $0x350] sm:$0xff]
        %v981 = vld [vmem:[%s792 + $0x358] sm:$0xff]
        %v982 = vld [vmem:[%s792 + $0x360] sm:$0xff]
        %v983 = vld [vmem:[%s792 + $0x368] sm:$0xff]
        %v984 = vld [vmem:[%s792 + $0x370] sm:$0xff]
        %v985 = vld [vmem:[%s792 + $0x378] sm:$0xff]
        %v986 = vld [vmem:[%s792 + $0x380] sm:$0xff]
        %v987 = vld [vmem:[%s792 + $0x388] sm:$0xff]
        %v988 = vld [vmem:[%s792 + $0x390] sm:$0xff]
        %v989 = vld [vmem:[%s792 + $0x398] sm:$0xff]
        %v990 = vld [vmem:[%s792 + $0x3a0] sm:$0xff]
        %v991 = vld [vmem:[%s792 + $0x3a8] sm:$0xff]
        %v992 = vld [vmem:[%s792 + $0x3b0] sm:$0xff]
        %v993 = vld [vmem:[%s792 + $0x3b8] sm:$0xff]
        %v994 = vld [vmem:[%s792 + $0x3c0] sm:$0xff]
        %v995 = vld [vmem:[%s792 + $0x3c8] sm:$0xff]
        %v996 = vld [vmem:[%s792 + $0x3d0] sm:$0xff]
        %v997 = vld [vmem:[%s792 + $0x3d8] sm:$0xff]
        %v998 = vld [vmem:[%s792 + $0x3e0] sm:$0xff]
        %v999 = vld [vmem:[%s792 + $0x3e8] sm:$0xff]
        %v1000 = vld [vmem:[%s792 + $0x3f0] sm:$0xff]
        %v1001 = vld [vmem:[%s792 + $0x3f8] sm:$0xff]
        %v1002 = vld [vmem:[%s792 + $0x400] sm:$0xff]
        %v1003 = vld [vmem:[%s792 + $0x408] sm:$0xff]
        %v1004 = vld [vmem:[%s792 + $0x410] sm:$0xff]
        %v1005 = vld [vmem:[%s792 + $0x418] sm:$0xff]
        %v1006 = vld [vmem:[%s792 + $0x420] sm:$0xff]
        %v1007 = vld [vmem:[%s792 + $0x428] sm:$0xff]
        %v1008 = vld [vmem:[%s792 + $0x430] sm:$0xff]
        %v1009 = vld [vmem:[%s792 + $0x438] sm:$0xff]
        %v1010 = vld [vmem:[%s792 + $0x440] sm:$0xff]
        %v1011 = vld [vmem:[%s792 + $0x448] sm:$0xff]
        %v1012 = vld [vmem:[%s792 + $0x450] sm:$0xff]
        %v1013 = vld [vmem:[%s792 + $0x458] sm:$0xff]
        %v1014 = vld [vmem:[%s792 + $0x460] sm:$0xff]
        %v1015 = vld [vmem:[%s792 + $0x468] sm:$0xff]
        %v1016 = vld [vmem:[%s792 + $0x470] sm:$0xff]
        %v1017 = vld [vmem:[%s792 + $0x478] sm:$0xff]
        %v1018 = vld [vmem:[%s792 + $0x480] sm:$0xff]
        %v1019 = vld [vmem:[%s792 + $0x488] sm:$0xff]
        %v1020 = vld [vmem:[%s792 + $0x490] sm:$0xff]
        %v1021 = vld [vmem:[%s792 + $0x498] sm:$0xff]
        %v1022 = vld [vmem:[%s792 + $0x4a0] sm:$0xff]
        %v1023 = vld [vmem:[%s792 + $0x4a8] sm:$0xff]
        %v1024 = vld [vmem:[%s792 + $0x4b0] sm:$0xff]
        %v1025 = vld [vmem:[%s792 + $0x4b8] sm:$0xff]
        %v1026 = vld [vmem:[%s792 + $0x4c0] sm:$0xff]
        %v1027 = vld [vmem:[%s792 + $0x4c8] sm:$0xff]
        %v1028 = vld [vmem:[%s792 + $0x4d0] sm:$0xff]
        %v1029 = vld [vmem:[%s792 + $0x4d8] sm:$0xff]
        %v1030 = vld [vmem:[%s792 + $0x4e0] sm:$0xff]
        %v1031 = vld [vmem:[%s792 + $0x4e8] sm:$0xff]
        %v1032 = vld [vmem:[%s792 + $0x4f0] sm:$0xff]
        %v1033 = vld [vmem:[%s792 + $0x4f8] sm:$0xff]
        %v1034 = vld [vmem:[%s792 + $0x500] sm:$0xff]
        %v1035 = vld [vmem:[%s792 + $0x508] sm:$0xff]
        %v1036 = vld [vmem:[%s792 + $0x510] sm:$0xff]
        %v1037 = vld [vmem:[%s792 + $0x518] sm:$0xff]
        %v1038 = vld [vmem:[%s792 + $0x520] sm:$0xff]
        %v1039 = vld [vmem:[%s792 + $0x528] sm:$0xff]
        %v1040 = vld [vmem:[%s792 + $0x530] sm:$0xff]
        %v1041 = vld [vmem:[%s792 + $0x538] sm:$0xff]
        %v1042 = vld [vmem:[%s792 + $0x540] sm:$0xff]
        %v1043 = vld [vmem:[%s792 + $0x548] sm:$0xff]
        %v1044 = vld [vmem:[%s792 + $0x550] sm:$0xff]
        %v1045 = vld [vmem:[%s792 + $0x558] sm:$0xff]
        %v1046 = vld [vmem:[%s792 + $0x560] sm:$0xff]
        %v1047 = vld [vmem:[%s792 + $0x568] sm:$0xff]
        %v1048 = vld [vmem:[%s792 + $0x570] sm:$0xff]
        %v1049 = vld [vmem:[%s792 + $0x578] sm:$0xff]
        %v1050 = vld [vmem:[%s792 + $0x580] sm:$0xff]
        %v1051 = vld [vmem:[%s792 + $0x588] sm:$0xff]
        %v1052 = vld [vmem:[%s792 + $0x590] sm:$0xff]
        %v1053 = vld [vmem:[%s792 + $0x598] sm:$0xff]
        %v1054 = vld [vmem:[%s792 + $0x5a0] sm:$0xff]
        %v1055 = vld [vmem:[%s792 + $0x5a8] sm:$0xff]
        %v1056 = vld [vmem:[%s792 + $0x5b0] sm:$0xff]
        %v1057 = vld [vmem:[%s792 + $0x5b8] sm:$0xff]
        %v1058 = vld [vmem:[%s792 + $0x5c0] sm:$0xff]
        %v1059 = vld [vmem:[%s792 + $0x5c8] sm:$0xff]
        %v1060 = vld [vmem:[%s792 + $0x5d0] sm:$0xff]
        %v1061 = vld [vmem:[%s792 + $0x5d8] sm:$0xff]
        %v1062 = vld [vmem:[%s792 + $0x5e0] sm:$0xff]
        %v1063 = vld [vmem:[%s792 + $0x5e8] sm:$0xff]
        %v1064 = vld [vmem:[%s792 + $0x5f0] sm:$0xff]
        %v1065 = vld [vmem:[%s792 + $0x5f8] sm:$0xff]
        %v1066 = vld [vmem:[%s792 + $0x600] sm:$0xff]
        %v1067 = vld [vmem:[%s792 + $0x608] sm:$0xff]
        %v1068 = vld [vmem:[%s792 + $0x610] sm:$0xff]
        %v1069 = vld [vmem:[%s792 + $0x618] sm:$0xff]
        %v1070 = vld [vmem:[%s792 + $0x620] sm:$0xff]
        %v1071 = vld [vmem:[%s792 + $0x628] sm:$0xff]
        %v1072 = vld [vmem:[%s792 + $0x630] sm:$0xff]
        %v1073 = vld [vmem:[%s792 + $0x638] sm:$0xff]
        %v1074 = vld [vmem:[%s792 + $0x640] sm:$0xff]
        %v1075 = vld [vmem:[%s792 + $0x648] sm:$0xff]
        %v1076 = vld [vmem:[%s792 + $0x650] sm:$0xff]
        %v1077 = vld [vmem:[%s792 + $0x658] sm:$0xff]
        %v1078 = vld [vmem:[%s792 + $0x660] sm:$0xff]
        %v1079 = vld [vmem:[%s792 + $0x668] sm:$0xff]
        %v1080 = vld [vmem:[%s792 + $0x670] sm:$0xff]
        %v1081 = vld [vmem:[%s792 + $0x678] sm:$0xff]
        %v1082 = vld [vmem:[%s792 + $0x680] sm:$0xff]
        %v1083 = vld [vmem:[%s792 + $0x688] sm:$0xff]
        %v1084 = vld [vmem:[%s792 + $0x690] sm:$0xff]
        %v1085 = vld [vmem:[%s792 + $0x698] sm:$0xff]
        %v1086 = vld [vmem:[%s792 + $0x6a0] sm:$0xff]
        %v1087 = vld [vmem:[%s792 + $0x6a8] sm:$0xff]
        %v1088 = vld [vmem:[%s792 + $0x6b0] sm:$0xff]
        %v1089 = vld [vmem:[%s792 + $0x6b8] sm:$0xff]
        %v1090 = vld [vmem:[%s792 + $0x6c0] sm:$0xff]
        %v1091 = vld [vmem:[%s792 + $0x6c8] sm:$0xff]
        %v1092 = vld [vmem:[%s792 + $0x6d0] sm:$0xff]
        %v1093 = vld [vmem:[%s792 + $0x6d8] sm:$0xff]
        %v1094 = vld [vmem:[%s792 + $0x6e0] sm:$0xff]
        %v1095 = vld [vmem:[%s792 + $0x6e8] sm:$0xff]
        %v1096 = vld [vmem:[%s792 + $0x6f0] sm:$0xff]
        %v1097 = vld [vmem:[%s792 + $0x6f8] sm:$0xff]
        %v1098 = vld [vmem:[%s792 + $0x700] sm:$0xff]
        %v1099 = vld [vmem:[%s792 + $0x708] sm:$0xff]
        %v1100 = vld [vmem:[%s792 + $0x710] sm:$0xff]
        %v1101 = vld [vmem:[%s792 + $0x718] sm:$0xff]
        %v1102 = vld [vmem:[%s792 + $0x720] sm:$0xff]
        %v1103 = vld [vmem:[%s792 + $0x728] sm:$0xff]
        %v1104 = vld [vmem:[%s792 + $0x730] sm:$0xff]
        %v1105 = vld [vmem:[%s792 + $0x738] sm:$0xff]
        %v1106 = vld [vmem:[%s792 + $0x740] sm:$0xff]
        %v1107 = vld [vmem:[%s792 + $0x748] sm:$0xff]
        %v1108 = vld [vmem:[%s792 + $0x750] sm:$0xff]
        %v1109 = vld [vmem:[%s792 + $0x758] sm:$0xff]
        %v1110 = vld [vmem:[%s792 + $0x760] sm:$0xff]
        %v1111 = vld [vmem:[%s792 + $0x768] sm:$0xff]
        %v1112 = vld [vmem:[%s792 + $0x770] sm:$0xff]
        %v1113 = vld [vmem:[%s792 + $0x778] sm:$0xff]
        %v1114 = vld [vmem:[%s792 + $0x780] sm:$0xff]
        %v1115 = vld [vmem:[%s792 + $0x788] sm:$0xff]
        %v1116 = vld [vmem:[%s792 + $0x790] sm:$0xff]
        %v1117 = vld [vmem:[%s792 + $0x798] sm:$0xff]
        %v1118 = vld [vmem:[%s792 + $0x7a0] sm:$0xff]
        %v1119 = vld [vmem:[%s792 + $0x7a8] sm:$0xff]
        %v1120 = vld [vmem:[%s792 + $0x7b0] sm:$0xff]
        %v1121 = vld [vmem:[%s792 + $0x7b8] sm:$0xff]
        %v1122 = vld [vmem:[%s792 + $0x7c0] sm:$0xff]
        %v1123 = vld [vmem:[%s792 + $0x7c8] sm:$0xff]
        %v1124 = vld [vmem:[%s792 + $0x7d0] sm:$0xff]
        %v1125 = vld [vmem:[%s792 + $0x7d8] sm:$0xff]
        %v1126 = vld [vmem:[%s792 + $0x7e0] sm:$0xff]
        %v1127 = vld [vmem:[%s792 + $0x7e8] sm:$0xff]
        %v1128 = vld [vmem:[%s792 + $0x7f0] sm:$0xff]
        %v1129 = vld [vmem:[%s792 + $0x7f8] sm:$0xff]
        %v1130 = vld [vmem:[%s792 + $0x800] sm:$0xff]
        %v1131 = vld [vmem:[%s792 + $0x808] sm:$0xff]
        %v1132 = vld [vmem:[%s792 + $0x810] sm:$0xff]
        %v1133 = vld [vmem:[%s792 + $0x818] sm:$0xff]
        %v1134 = vld [vmem:[%s792 + $0x820] sm:$0xff]
        %v1135 = vld [vmem:[%s792 + $0x828] sm:$0xff]
        %v1136 = vld [vmem:[%s792 + $0x830] sm:$0xff]
        %v1137 = vld [vmem:[%s792 + $0x838] sm:$0xff]
        %v1138 = vld [vmem:[%s792 + $0x840] sm:$0xff]
        %v1139 = vld [vmem:[%s792 + $0x848] sm:$0xff]
        %v1140 = vld [vmem:[%s792 + $0x850] sm:$0xff]
        %v1141 = vld [vmem:[%s792 + $0x858] sm:$0xff]
        %v1142 = vld [vmem:[%s792 + $0x860] sm:$0xff]
        %v1143 = vld [vmem:[%s792 + $0x868] sm:$0xff]
        %v1144 = vld [vmem:[%s792 + $0x870] sm:$0xff]
        %v1145 = vld [vmem:[%s792 + $0x878] sm:$0xff]
        %v1146 = vld [vmem:[%s792 + $0x880] sm:$0xff]
        %v1147 = vld [vmem:[%s792 + $0x888] sm:$0xff]
        %v1148 = vld [vmem:[%s792 + $0x890] sm:$0xff]
        %v1149 = vld [vmem:[%s792 + $0x898] sm:$0xff]
        %v1150 = vld [vmem:[%s792 + $0x8a0] sm:$0xff]
        %v1151 = vld [vmem:[%s792 + $0x8a8] sm:$0xff]
        %v1152 = vld [vmem:[%s792 + $0x8b0] sm:$0xff]
        %v1153 = vld [vmem:[%s792 + $0x8b8] sm:$0xff]
        %v1154 = vld [vmem:[%s792 + $0x8c0] sm:$0xff]
        %v1155 = vld [vmem:[%s792 + $0x8c8] sm:$0xff]
        %v1156 = vld [vmem:[%s792 + $0x8d0] sm:$0xff]
        %v1157 = vld [vmem:[%s792 + $0x8d8] sm:$0xff]
        %v1158 = vld [vmem:[%s792 + $0x8e0] sm:$0xff]
        %v1159 = vld [vmem:[%s792 + $0x8e8] sm:$0xff]
        %v1160 = vld [vmem:[%s792 + $0x8f0] sm:$0xff]
        %v1161 = vld [vmem:[%s792 + $0x8f8] sm:$0xff]
        %1162 = vmatprep.subr.mxu0 %v875
        %1163 = vmatpush1.msra.mxu0 %v874
        %1164 = vmatprep.subr.mxu0 %v877
        %1165 = vmatpush1.msra.mxu0 %v876
        %1166 = vmatprep.subr.mxu0 %v879
        %1167 = vmatpush1.msra.mxu0 %v878
        %1168 = vmatprep.subr.mxu0 %v881
        %1169 = vmatpush1.msra.mxu0 %v880
        %1170 = vmatprep.subr.mxu0 %v883
        %1171 = vmatpush1.msra.mxu0 %v882
        %1172 = vmatprep.subr.mxu0 %v885
        %1173 = vmatpush1.msra.mxu0 %v884
        %1174 = vmatprep.subr.mxu0 %v887
        %1175 = vmatpush1.msra.mxu0 %v886
        %1176 = vmatprep.subr.mxu0 %v889
        %1177 = vmatpush1.msra.mxu0 %v888
        %1178 = vmatprep.subr.mxu0 %v891
        %1179 = vmatpush1.msra.mxu0 %v890
        %1180 = vmatprep.subr.mxu0 %v893
        %1181 = vmatpush1.msra.mxu0 %v892
        %1182 = vmatprep.subr.mxu0 %v895
        %1183 = vmatpush1.msra.mxu0 %v894
        %1184 = vmatprep.subr.mxu0 %v897
        %1185 = vmatpush1.msra.mxu0 %v896
        %1186 = vmatprep.subr.mxu0 %v899
        %1187 = vmatpush1.msra.mxu0 %v898
        %1188 = vmatprep.subr.mxu0 %v901
        %1189 = vmatpush1.msra.mxu0 %v900
        %1190 = vmatprep.subr.mxu0 %v903
        %1191 = vmatpush1.msra.mxu0 %v902
        %1192 = vmatprep.subr.mxu0 %v905
        %1193 = vmatpush1.msra.mxu0 %v904
        %1194 = vmatprep.subr.mxu0 %v907
        %1195 = vmatpush1.msra.mxu0 %v906
        %1196 = vmatprep.subr.mxu0 %v909
        %1197 = vmatpush1.msra.mxu0 %v908
        %1198 = vmatprep.subr.mxu0 %v911
        %1199 = vmatpush1.msra.mxu0 %v910
        %1200 = vmatprep.subr.mxu0 %v913
        %1201 = vmatpush1.msra.mxu0 %v912
        %1202 = vmatprep.subr.mxu0 %v915
        %1203 = vmatpush1.msra.mxu0 %v914
        %1204 = vmatprep.subr.mxu0 %v917
        %1205 = vmatpush1.msra.mxu0 %v916
        %1206 = vmatprep.subr.mxu0 %v919
        %1207 = vmatpush1.msra.mxu0 %v918
        %1208 = vmatprep.subr.mxu0 %v921
        %1209 = vmatpush1.msra.mxu0 %v920
        %1210 = vmatprep.subr.mxu0 %v923
        %1211 = vmatpush1.msra.mxu0 %v922
        %1212 = vmatprep.subr.mxu0 %v925
        %1213 = vmatpush1.msra.mxu0 %v924
        %1214 = vmatprep.subr.mxu0 %v927
        %1215 = vmatpush1.msra.mxu0 %v926
        %1216 = vmatprep.subr.mxu0 %v929
        %1217 = vmatpush1.msra.mxu0 %v928
        %1218 = vmatprep.subr.mxu0 %v931
        %1219 = vmatpush1.msra.mxu0 %v930
        %1220 = vmatprep.subr.mxu0 %v933
        %1221 = vmatpush1.msra.mxu0 %v932
        %1222 = vmatprep.subr.mxu0 %v935
        %1223 = vmatpush1.msra.mxu0 %v934
        %1224 = vmatprep.subr.mxu0 %v937
        %1225 = vmatpush1.msra.mxu0 %v936
        %1226 = vmatprep.mubr.f32.mxu0 %v866
        %1227 = vmatmul.mubr.f32.gmra.mrb[0].mxu0 %v865
        %v1228 = vpop.f32.mrb[0].mxu0
        %v1229 = vadd.f32 0.0, %v1228
        %v1230 = vpop.f32.mrb[0].mxu0
        %v1231 = vadd.f32 0.0, %v1230
        %1232 = vdwg.mxu0
        %1233 = vmatprep.subr.mxu0 %v939
        %1234 = vmatpush1.msra.mxu0 %v938
        %1235 = vmatprep.subr.mxu0 %v941
        %1236 = vmatpush1.msra.mxu0 %v940
        %1237 = vmatprep.subr.mxu0 %v943
        %1238 = vmatpush1.msra.mxu0 %v942
        %1239 = vmatprep.subr.mxu0 %v945
        %1240 = vmatpush1.msra.mxu0 %v944
        %1241 = vmatprep.subr.mxu0 %v947
        %1242 = vmatpush1.msra.mxu0 %v946
        %1243 = vmatprep.subr.mxu0 %v949
        %1244 = vmatpush1.msra.mxu0 %v948
        %1245 = vmatprep.subr.mxu0 %v951
        %1246 = vmatpush1.msra.mxu0 %v950
        %1247 = vmatprep.subr.mxu0 %v953
        %1248 = vmatpush1.msra.mxu0 %v952
        %1249 = vmatprep.subr.mxu0 %v955
        %1250 = vmatpush1.msra.mxu0 %v954
        %1251 = vmatprep.subr.mxu0 %v957
        %1252 = vmatpush1.msra.mxu0 %v956
        %1253 = vmatprep.subr.mxu0 %v959
        %1254 = vmatpush1.msra.mxu0 %v958
        %1255 = vmatprep.subr.mxu0 %v961
        %1256 = vmatpush1.msra.mxu0 %v960
        %1257 = vmatprep.subr.mxu0 %v963
        %1258 = vmatpush1.msra.mxu0 %v962
        %1259 = vmatprep.subr.mxu0 %v965
        %1260 = vmatpush1.msra.mxu0 %v964
        %1261 = vmatprep.subr.mxu0 %v967
        %1262 = vmatpush1.msra.mxu0 %v966
        %1263 = vmatprep.subr.mxu0 %v969
        %1264 = vmatpush1.msra.mxu0 %v968
        %1265 = vmatprep.subr.mxu0 %v971
        %1266 = vmatpush1.msra.mxu0 %v970
        %1267 = vmatprep.subr.mxu0 %v973
        %1268 = vmatpush1.msra.mxu0 %v972
        %1269 = vmatprep.subr.mxu0 %v975
        %1270 = vmatpush1.msra.mxu0 %v974
        %1271 = vmatprep.subr.mxu0 %v977
        %1272 = vmatpush1.msra.mxu0 %v976
        %1273 = vmatprep.subr.mxu0 %v979
        %1274 = vmatpush1.msra.mxu0 %v978
        %1275 = vmatprep.subr.mxu0 %v981
        %1276 = vmatpush1.msra.mxu0 %v980
        %1277 = vmatprep.subr.mxu0 %v983
        %1278 = vmatpush1.msra.mxu0 %v982
        %1279 = vmatprep.subr.mxu0 %v985
        %1280 = vmatpush1.msra.mxu0 %v984
        %1281 = vmatprep.subr.mxu0 %v987
        %1282 = vmatpush1.msra.mxu0 %v986
        %1283 = vmatprep.subr.mxu0 %v989
        %1284 = vmatpush1.msra.mxu0 %v988
        %1285 = vmatprep.subr.mxu0 %v991
        %1286 = vmatpush1.msra.mxu0 %v990
        %1287 = vmatprep.subr.mxu0 %v993
        %1288 = vmatpush1.msra.mxu0 %v992
        %1289 = vmatprep.subr.mxu0 %v995
        %1290 = vmatpush1.msra.mxu0 %v994
        %1291 = vmatprep.subr.mxu0 %v997
        %1292 = vmatpush1.msra.mxu0 %v996
        %1293 = vmatprep.subr.mxu0 %v999
        %1294 = vmatpush1.msra.mxu0 %v998
        %1295 = vmatprep.subr.mxu0 %v1001
        %1296 = vmatpush1.msra.mxu0 %v1000
        %1297 = vmatprep.mubr.f32.mxu0 %v868
        %1298 = vmatmul.mubr.f32.gmra.mrb[0].mxu0 %v867
        %v1299 = vpop.f32.mrb[0].mxu0
        %v1300 = vadd.f32 %v1229, %v1299
        %v1301 = vpop.f32.mrb[0].mxu0
        %v1302 = vadd.f32 %v1231, %v1301
        %1303 = vdwg.mxu0
        %1304 = vmatprep.subr.mxu0 %v1003
        %1305 = vmatpush1.msra.mxu0 %v1002
        %1306 = vmatprep.subr.mxu0 %v1005
        %1307 = vmatpush1.msra.mxu0 %v1004
        %1308 = vmatprep.subr.mxu0 %v1007
        %1309 = vmatpush1.msra.mxu0 %v1006
        %1310 = vmatprep.subr.mxu0 %v1009
        %1311 = vmatpush1.msra.mxu0 %v1008
        %1312 = vmatprep.subr.mxu0 %v1011
        %1313 = vmatpush1.msra.mxu0 %v1010
        %1314 = vmatprep.subr.mxu0 %v1013
        %1315 = vmatpush1.msra.mxu0 %v1012
        %1316 = vmatprep.subr.mxu0 %v1015
        %1317 = vmatpush1.msra.mxu0 %v1014
        %1318 = vmatprep.subr.mxu0 %v1017
        %1319 = vmatpush1.msra.mxu0 %v1016
        %1320 = vmatprep.subr.mxu0 %v1019
        %1321 = vmatpush1.msra.mxu0 %v1018
        %1322 = vmatprep.subr.mxu0 %v1021
        %1323 = vmatpush1.msra.mxu0 %v1020
        %1324 = vmatprep.subr.mxu0 %v1023
        %1325 = vmatpush1.msra.mxu0 %v1022
        %1326 = vmatprep.subr.mxu0 %v1025
        %1327 = vmatpush1.msra.mxu0 %v1024
        %1328 = vmatprep.subr.mxu0 %v1027
        %1329 = vmatpush1.msra.mxu0 %v1026
        %1330 = vmatprep.subr.mxu0 %v1029
        %1331 = vmatpush1.msra.mxu0 %v1028
        %1332 = vmatprep.subr.mxu0 %v1031
        %1333 = vmatpush1.msra.mxu0 %v1030
        %1334 = vmatprep.subr.mxu0 %v1033
        %1335 = vmatpush1.msra.mxu0 %v1032
        %1336 = vmatprep.subr.mxu0 %v1035
        %1337 = vmatpush1.msra.mxu0 %v1034
        %1338 = vmatprep.subr.mxu0 %v1037
        %1339 = vmatpush1.msra.mxu0 %v1036
        %1340 = vmatprep.subr.mxu0 %v1039
        %1341 = vmatpush1.msra.mxu0 %v1038
        %1342 = vmatprep.subr.mxu0 %v1041
        %1343 = vmatpush1.msra.mxu0 %v1040
        %1344 = vmatprep.subr.mxu0 %v1043
        %1345 = vmatpush1.msra.mxu0 %v1042
        %1346 = vmatprep.subr.mxu0 %v1045
        %1347 = vmatpush1.msra.mxu0 %v1044
        %1348 = vmatprep.subr.mxu0 %v1047
        %1349 = vmatpush1.msra.mxu0 %v1046
        %1350 = vmatprep.subr.mxu0 %v1049
        %1351 = vmatpush1.msra.mxu0 %v1048
        %1352 = vmatprep.subr.mxu0 %v1051
        %1353 = vmatpush1.msra.mxu0 %v1050
        %1354 = vmatprep.subr.mxu0 %v1053
        %1355 = vmatpush1.msra.mxu0 %v1052
        %1356 = vmatprep.subr.mxu0 %v1055
        %1357 = vmatpush1.msra.mxu0 %v1054
        %1358 = vmatprep.subr.mxu0 %v1057
        %1359 = vmatpush1.msra.mxu0 %v1056
        %1360 = vmatprep.subr.mxu0 %v1059
        %1361 = vmatpush1.msra.mxu0 %v1058
        %1362 = vmatprep.subr.mxu0 %v1061
        %1363 = vmatpush1.msra.mxu0 %v1060
        %1364 = vmatprep.subr.mxu0 %v1063
        %1365 = vmatpush1.msra.mxu0 %v1062
        %1366 = vmatprep.subr.mxu0 %v1065
        %1367 = vmatpush1.msra.mxu0 %v1064
        %1368 = vmatprep.mubr.f32.mxu0 %v870
        %1369 = vmatmul.mubr.f32.gmra.mrb[0].mxu0 %v869
        %v1370 = vpop.f32.mrb[0].mxu0
        %v1371 = vadd.f32 %v1300, %v1370
        %v1372 = vpop.f32.mrb[0].mxu0
        %v1373 = vadd.f32 %v1302, %v1372
        %1374 = vdwg.mxu0
        %1375 = vmatprep.subr.mxu0 %v1067
        %1376 = vmatpush1.msra.mxu0 %v1066
        %1377 = vmatprep.subr.mxu0 %v1069
        %1378 = vmatpush1.msra.mxu0 %v1068
        %1379 = vmatprep.subr.mxu0 %v1071
        %1380 = vmatpush1.msra.mxu0 %v1070
        %1381 = vmatprep.subr.mxu0 %v1073
        %1382 = vmatpush1.msra.mxu0 %v1072
        %1383 = vmatprep.subr.mxu0 %v1075
        %1384 = vmatpush1.msra.mxu0 %v1074
        %1385 = vmatprep.subr.mxu0 %v1077
        %1386 = vmatpush1.msra.mxu0 %v1076
        %1387 = vmatprep.subr.mxu0 %v1079
        %1388 = vmatpush1.msra.mxu0 %v1078
        %1389 = vmatprep.subr.mxu0 %v1081
        %1390 = vmatpush1.msra.mxu0 %v1080
        %1391 = vmatprep.subr.mxu0 %v1083
        %1392 = vmatpush1.msra.mxu0 %v1082
        %1393 = vmatprep.subr.mxu0 %v1085
        %1394 = vmatpush1.msra.mxu0 %v1084
        %1395 = vmatprep.subr.mxu0 %v1087
        %1396 = vmatpush1.msra.mxu0 %v1086
        %1397 = vmatprep.subr.mxu0 %v1089
        %1398 = vmatpush1.msra.mxu0 %v1088
        %1399 = vmatprep.subr.mxu0 %v1091
        %1400 = vmatpush1.msra.mxu0 %v1090
        %1401 = vmatprep.subr.mxu0 %v1093
        %1402 = vmatpush1.msra.mxu0 %v1092
        %1403 = vmatprep.subr.mxu0 %v1095
        %1404 = vmatpush1.msra.mxu0 %v1094
        %1405 = vmatprep.subr.mxu0 %v1097
        %1406 = vmatpush1.msra.mxu0 %v1096
        %1407 = vmatprep.subr.mxu0 %v1099
        %1408 = vmatpush1.msra.mxu0 %v1098
        %1409 = vmatprep.subr.mxu0 %v1101
        %1410 = vmatpush1.msra.mxu0 %v1100
        %1411 = vmatprep.subr.mxu0 %v1103
        %1412 = vmatpush1.msra.mxu0 %v1102
        %1413 = vmatprep.subr.mxu0 %v1105
        %1414 = vmatpush1.msra.mxu0 %v1104
        %1415 = vmatprep.subr.mxu0 %v1107
        %1416 = vmatpush1.msra.mxu0 %v1106
        %1417 = vmatprep.subr.mxu0 %v1109
        %1418 = vmatpush1.msra.mxu0 %v1108
        %1419 = vmatprep.subr.mxu0 %v1111
        %1420 = vmatpush1.msra.mxu0 %v1110
        %1421 = vmatprep.subr.mxu0 %v1113
        %1422 = vmatpush1.msra.mxu0 %v1112
        %1423 = vmatprep.subr.mxu0 %v1115
        %1424 = vmatpush1.msra.mxu0 %v1114
        %1425 = vmatprep.subr.mxu0 %v1117
        %1426 = vmatpush1.msra.mxu0 %v1116
        %1427 = vmatprep.subr.mxu0 %v1119
        %1428 = vmatpush1.msra.mxu0 %v1118
        %1429 = vmatprep.subr.mxu0 %v1121
        %1430 = vmatpush1.msra.mxu0 %v1120
        %1431 = vmatprep.subr.mxu0 %v1123
        %1432 = vmatpush1.msra.mxu0 %v1122
        %1433 = vmatprep.subr.mxu0 %v1125
        %1434 = vmatpush1.msra.mxu0 %v1124
        %1435 = vmatprep.subr.mxu0 %v1127
        %1436 = vmatpush1.msra.mxu0 %v1126
        %1437 = vmatprep.subr.mxu0 %v1129
        %1438 = vmatpush1.msra.mxu0 %v1128
        %1439 = vmatprep.mubr.f32.mxu0 %v872
        %1440 = vmatmul.mubr.f32.gmra.mrb[0].mxu0 %v871
        %v1441 = vpop.f32.mrb[0].mxu0
        %v1442 = vadd.f32 %v1371, %v1441
        %v1443 = vpop.f32.mrb[0].mxu0
        %v1444 = vadd.f32 %v1373, %v1443
        %1445 = vdwg.mxu0
        %1446 = vmatprep.subr.mxu0 %v1131
        %1447 = vmatpush1.msra.mxu0 %v1130
        %1448 = vmatprep.subr.mxu0 %v1133
        %1449 = vmatpush1.msra.mxu0 %v1132
        %1450 = vmatprep.subr.mxu0 %v1135
        %1451 = vmatpush1.msra.mxu0 %v1134
        %1452 = vmatprep.subr.mxu0 %v1137
        %1453 = vmatpush1.msra.mxu0 %v1136
        %1454 = vmatprep.subr.mxu0 %v1139
        %1455 = vmatpush1.msra.mxu0 %v1138
        %1456 = vmatprep.subr.mxu0 %v1141
        %1457 = vmatpush1.msra.mxu0 %v1140
        %1458 = vmatprep.subr.mxu0 %v1143
        %1459 = vmatpush1.msra.mxu0 %v1142
        %1460 = vmatprep.subr.mxu0 %v1145
        %1461 = vmatpush1.msra.mxu0 %v1144
        %1462 = vmatprep.subr.mxu0 %v1147
        %1463 = vmatpush1.msra.mxu0 %v1146
        %1464 = vmatprep.subr.mxu0 %v1149
        %1465 = vmatpush1.msra.mxu0 %v1148
        %1466 = vmatprep.subr.mxu0 %v1151
        %1467 = vmatpush1.msra.mxu0 %v1150
        %1468 = vmatprep.subr.mxu0 %v1153
        %1469 = vmatpush1.msra.mxu0 %v1152
        %1470 = vmatprep.subr.mxu0 %v1155
        %1471 = vmatpush1.msra.mxu0 %v1154
        %1472 = vmatprep.subr.mxu0 %v1157
        %1473 = vmatpush1.msra.mxu0 %v1156
        %1474 = vmatprep.subr.mxu0 %v1159
        %1475 = vmatpush1.msra.mxu0 %v1158
        %1476 = vmatprep.subr.mxu0 %v1161
        %1477 = vmatpush1.msra.mxu0 %v1160
        %1478 = vmatprep.subr.mxu0 0.0
        %1479 = vmatpush1.msra.mxu0 0.0
        %1480 = vmatprep.subr.mxu0 0.0
        %1481 = vmatpush1.msra.mxu0 0.0
        %1482 = vmatprep.subr.mxu0 0.0
        %1483 = vmatpush1.msra.mxu0 0.0
        %1484 = vmatprep.subr.mxu0 0.0
        %1485 = vmatpush1.msra.mxu0 0.0
        %1486 = vmatprep.subr.mxu0 0.0
        %1487 = vmatpush1.msra.mxu0 0.0
        %1488 = vmatprep.subr.mxu0 0.0
        %1489 = vmatpush1.msra.mxu0 0.0
        %1490 = vmatprep.subr.mxu0 0.0
        %1491 = vmatpush1.msra.mxu0 0.0
        %1492 = vmatprep.subr.mxu0 0.0
        %1493 = vmatpush1.msra.mxu0 0.0
        %1494 = vmatprep.subr.mxu0 0.0
        %1495 = vmatpush1.msra.mxu0 0.0
        %1496 = vmatprep.subr.mxu0 0.0
        %1497 = vmatpush1.msra.mxu0 0.0
        %1498 = vmatprep.subr.mxu0 0.0
        %1499 = vmatpush1.msra.mxu0 0.0
        %1500 = vmatprep.subr.mxu0 0.0
        %1501 = vmatpush1.msra.mxu0 0.0
        %1502 = vmatprep.subr.mxu0 0.0
        %1503 = vmatpush1.msra.mxu0 0.0
        %1504 = vmatprep.subr.mxu0 0.0
        %1505 = vmatpush1.msra.mxu0 0.0
        %1506 = vmatprep.subr.mxu0 0.0
        %1507 = vmatpush1.msra.mxu0 0.0
        %1508 = vmatprep.subr.mxu0 0.0
        %1509 = vmatpush1.msra.mxu0 0.0
        %1510 = vmatprep.mubr.f32.mxu0 0.0
        %1511 = vmatmul.mubr.f32.gmra.mrb[0].mxu0 %v873
        %v1512 = vpop.f32.mrb[0].mxu0
        %v1513 = vadd.f32 %v1442, %v1512
        %v1514 = vpop.f32.mrb[0].mxu0
        %v1515 = vadd.f32 %v1444, %v1514
        %1516 = vdwg.mxu0
        %v1517 = vadd.f32 %v863, %v1513
        %v1518 = vadd.f32 %v864, %v1515
        %1519 = vst [vmem:[#allocation2] sm:$0xff] %v1517
        %1520 = vst [vmem:[#allocation2 + $0x8] sm:$0xff] %v1518
        %p1521 = scmp.eq.s32.totalorder %s21, 3
        // Predicated region
        $region60: #{custom_fe_forward.7} parent=50 // pred_check
          %p1522 = pneg %p1521
        $region61: #{custom_fe_forward.7} parent=50 // pred_check_branch
          %1524 = sbr.rel (%p1522) target = $region63
        $region62: #{custom_fe_forward.7} parent=50 // pred_region
          %v1525 = vld [vmem:[#allocation2] sm:$0xff]
          %v1526 = vld [vmem:[#allocation2 + $0x8] sm:$0xff]
          %v1527 = vld [vmem:[%s845] sm:$0x3]
          %v1529 = vlaneseq
          %v1530 = vshrl.u32 %v1529, 7
          %v1531 = vsub.s32 0, %v1530
          %v1532 = vrot.slane %v1527, %v1531
          %v1533 = vlaneseq
          %v1534 = vshrl.u32 %v1533, 7
          %v1535 = vsub.s32 1, %v1534
          %v1536 = vrot.slane %v1527, %v1535
          %v1539 = vadd.f32 %v1525, %v1532
          %v1540 = vadd.f32 %v1526, %v1536
          %1541 = vst [vmem:[%s855] sm:$0xff] %v1539
          %1542 = vst [vmem:[%s855 + $0x8] sm:$0xff] %v1540
        $region63: #{custom_fe_forward.7} parent=50 // pred_fallthru
          _
        %s1543 = smul.u32 2, %s20
        %p1544 = scmp.lt.s32.totalorder %s19, 0
        %s1545 = scalar_select %p1544, %s19, 0
        %p1546 = scmp.lt.s32.totalorder %s1543, 3
        %s1547 = scalar_select %p1546, %s1543, 3
        %s1548 = smul.addr %s1545, 4
        %s1549 = sadd.s32 %s1547, %s1548
        %s1550 = smul.addr %s1549, 8
        %s1551 = scalar_lea.vmem %s3, %s1550
        // Predicated region
        $region64: #{custom_fe_forward.7} parent=50 // pred_check
          %p1552 = pneg %p135
        $region65: #{custom_fe_forward.7} parent=50 // pred_check_branch
          %1554 = sbr.rel (%p1552) target = $region67
        $region66: #{custom_fe_forward.7} parent=50 // pred_region
          %s1555 = smul.u32 2, %s20
        $region67: #{custom_fe_forward.7} parent=50 // pred_fallthru
          _
      $region51: #{custom_fe_forward.7} parent=5 // pred_fallthru
        _
      %p1556 = scmp.le.s32.totalorder 2, %s9
      // Predicated region
      $region68: #{custom_fe_forward.7} parent=5 // pred_check
        %p1557 = pneg %p1556
      $region69: #{custom_fe_forward.7} parent=5 // pred_check_branch
        %1559 = sbr.rel (%p1557) target = $region71
      $region70: #{custom_fe_forward.7} parent=5 // pred_region
        %s1560 = ssub.s32 %s9, 2
        // Predicated region
        $region72: #{custom_fe_forward.7} parent=70 // pred_check
          %p1561 = pneg %p141
        $region73: #{custom_fe_forward.7} parent=70 // pred_check_branch
          %1563 = sbr.rel (%p1561) target = $region75
        $region74: #{custom_fe_forward.7} parent=70 // pred_region
          %s1564 = smul.u32 2, %s23
          %p1565 = scmp.lt.s32.totalorder %s22, 0
          %s1566 = scalar_select %p1565, %s22, 0
          %p1567 = scmp.lt.s32.totalorder %s1564, 3
          %s1568 = scalar_select %p1567, %s1564, 3
          %s1569 = smul.addr %s1566, 4
          %s1570 = sadd.s32 %s1568, %s1569
          %s1571 = smul.addr %s1570, 8
          %s1572 = scalar_lea.vmem %s3, %s1571
        $region75: #{custom_fe_forward.7} parent=70 // pred_fallthru
          _
      $region71: #{custom_fe_forward.7} parent=5 // pred_fallthru
        _
    $region6: #{custom_fe_forward.7} parent=1 // loop_footer
      %s13 = sadd.s32 1, %s9
    $region7: #{custom_fe_forward.7} parent=1 // loop_footer_branch
      %8 = sbr.rel target = $region3
    $region8: #{custom_fe_forward.7} parent=1 // loop_exit
      _

</llo_original>
